<compile_context>
chip_gen: v7x
topology: tpu7x:2x2x1
jax: 0.10.0
libtpu: 0.0.40
codegen_flags: <defaults>
</compile_context>

<pallas_src>
import math
import functools

import numpy as np
import jax
import jax.numpy as jnp
from jax import lax
from jax.experimental import pallas as pl
from jax.experimental.pallas import tpu as pltpu


# ----------------------------------------------------------------------------
# helpers
# ----------------------------------------------------------------------------

def _pick_tile(total, target, multiple):
    """Largest divisor of `total` that is a multiple of `multiple` and <= target.

    Falls back to the full extent (always legal for the (8,128) layout rule)."""
    if total <= target:
        return total
    best = None
    for t in range(multiple, target + 1, multiple):
        if total % t == 0:
            best = t
    return best if best is not None else total


def _vmem_limit_bytes():
    """~3/4 of physical VMEM: ~96 MiB on v5e/v6e (128 MiB), ~48 MiB on v7x (64 MiB)."""
    try:
        cap = pltpu.get_tpu_info().vmem_capacity_bytes
    except Exception:
        cap = 128 * 1024 * 1024
    return int(cap) * 3 // 4


def _itemsize(dtype):
    return np.dtype(dtype).itemsize


# ----------------------------------------------------------------------------
# phase 1: Linformer K/V sequence projections (reduction over S)
# ----------------------------------------------------------------------------

def _kv_projection_kernel(x_ref, wkv_ref, e_ref, f_ref, k_out_ref, v_out_ref,
                          k_acc, v_acc, *, num_heads, d_v, compute_dtype):
    """Accumulates k_short[h] = E[h] @ (x @ Wk_h^T), v_short[h] = F[h] @ (x @ Wv_h^T).

    x_ref   : (1, s_chunk, E)      current batch / S-chunk of the input
    wkv_ref : (E, 2*H*d_v)         [K_all | V_all] columns, head-major, compute dtype
    e_ref   : (H, k_len, s_chunk)  Linformer K projections, S-sliced
    f_ref   : (H, k_len, s_chunk)  Linformer V projections, S-sliced
    k_out   : (1, H, k_len, d_v)   written once, at the last S-chunk
    v_out   : (1, H, k_len, d_v)
    k_acc/v_acc : (H, k_len, d_v)  f32 accumulators (persist across the S axis)
    """
    s = pl.program_id(1)

    @pl.when(s == 0)
    def _():
        k_acc[...] = jnp.zeros_like(k_acc)
        v_acc[...] = jnp.zeros_like(v_acc)

    x = x_ref[0].astype(compute_dtype)                              # (s_chunk, E)
    # One packed lane-dense matmul for K and V of every head (f32 accumulation),
    # then a single cast of the packed intermediate to the compute dtype.
    kv = jnp.dot(x, wkv_ref[...],
                 preferred_element_type=jnp.float32).astype(compute_dtype)

    hd = num_heads * d_v
    # H is small & static -> unrolled at trace time; slices are contiguous
    # (head-major within each group) thanks to the re-packed weight layout.
    for h in range(num_heads):
        k_h = kv[:, h * d_v:(h + 1) * d_v]                          # (s_chunk, d_v)
        v_h = kv[:, hd + h * d_v:hd + (h + 1) * d_v]
        k_acc[h] += jnp.dot(e_ref[h], k_h, preferred_element_type=jnp.float32)
        v_acc[h] += jnp.dot(f_ref[h], v_h, preferred_element_type=jnp.float32)

    @pl.when(s == pl.num_programs(1) - 1)
    def _():
        k_out_ref[0] = k_acc[...].astype(k_out_ref.dtype)
        v_out_ref[0] = v_acc[...].astype(v_out_ref.dtype)


# ----------------------------------------------------------------------------
# phase 2: attention + output projection (tiled over B and S, both parallel)
# ----------------------------------------------------------------------------

def _attention_kernel(x_ref, wq_ref, ks_ref, vs_ref, wo_ref, bo_ref, o_ref,
                      val_scratch, *, num_heads, d_v, compute_dtype,
                      approx_recip):
    """x_ref (1,tq,E), wq_ref (E,H*d_v) with 1/sqrt(d_v) folded in,
    ks/vs (1,H,k_len,d_v), wo_ref (H*d_v,E_out), bo_ref (1,E_out),
    o_ref (1,tq,E_out), val_scratch (tq,H*d_v) in the compute dtype."""
    x = x_ref[0].astype(compute_dtype)                              # (tq, E)
    # Packed Q projection for all heads; scale already folded into the weight.
    q_all = jnp.dot(x, wq_ref[...],
                    preferred_element_type=jnp.float32).astype(compute_dtype)

    for h in range(num_heads):
        q_h = q_all[:, h * d_v:(h + 1) * d_v]                       # (tq, d_v)
        k_h = ks_ref[0, h]                                          # (k_len, d_v)
        v_h = vs_ref[0, h]
        # q @ k_short^T: contract the last dims of both operands (no explicit
        # XLU transpose / VMEM copy of k_short).
        logits = lax.dot_general(q_h, k_h, (((1,), (1,)), ((), ())),
                                 preferred_element_type=jnp.float32)  # (tq, k_len)
        # numerically stable softmax over k_len (kept in f32)
        logits = logits - jnp.max(logits, axis=-1, keepdims=True)
        p = jnp.exp(logits)
        attn = p * pl.reciprocal(jnp.sum(p, axis=-1, keepdims=True),
                                 approx=approx_recip)
        val_scratch[:, h * d_v:(h + 1) * d_v] = jnp.dot(
            attn.astype(compute_dtype), v_h,
            preferred_element_type=jnp.float32).astype(compute_dtype)

    # Single packed output projection (good MXU shape: K = H*d_v) + bias;
    # the output block is written exactly once.
    out = jnp.dot(val_scratch[...], wo_ref[...],
                  preferred_element_type=jnp.float32)
    out = out + bo_ref[...]
    o_ref[0] = out.astype(o_ref.dtype)


# ----------------------------------------------------------------------------
# wrapper
# ----------------------------------------------------------------------------

def prepare_params(w_qkv, e_proj, f_proj, w_o, b_o, *, num_heads,
                   compute_dtype=jnp.bfloat16):
    """Re-packs PyTorch-layout weights into the kernel layout and pre-casts them.

    w_qkv : (3*H*d_v, E)   qkv_proj.weight
    e_proj: (H, k_len, S)  stacked k_projections[i].weight
    f_proj: (H, k_len, S)  stacked v_projections[i].weight
    w_o   : (E_out, H*d_v) o_proj.weight
    b_o   : (E_out,)       o_proj.bias
    """
    three_hd, E = w_qkv.shape
    assert three_hd % (3 * num_heads) == 0, "3*H*d_v must be divisible by 3*H"
    d_v = three_hd // (3 * num_heads)
    hd = num_heads * d_v
    assert e_proj.shape[0] == num_heads and f_proj.shape == e_proj.shape
    assert w_o.shape[1] == hd and b_o.shape == (w_o.shape[0],)

    # PyTorch row order is per-head [Q_h | K_h | V_h]; regroup to
    # [Q_all | K_all | V_all], head-major within each group.
    w_r = w_qkv.reshape(num_heads, 3, d_v, E)
    w_q = w_r[:, 0].reshape(hd, E)
    w_k = w_r[:, 1].reshape(hd, E)
    w_v = w_r[:, 2].reshape(hd, E)

    scale = 1.0 / math.sqrt(d_v)                      # fold 1/sqrt(d_v) into Wq
    wq_t = (w_q.T * scale).astype(compute_dtype)                     # (E, H*d_v)
    wkv_t = jnp.concatenate([w_k.T, w_v.T], axis=1).astype(compute_dtype)  # (E, 2*H*d_v)

    return dict(
        wq_t=wq_t,
        wkv_t=wkv_t,
        e_proj=e_proj.astype(compute_dtype),
        f_proj=f_proj.astype(compute_dtype),
        wo_t=w_o.T.astype(compute_dtype),             # (H*d_v, E_out)
        b_o=b_o.reshape(1, -1).astype(jnp.float32),   # bias added in f32
    )


def _forward(x, params, *, num_heads, approx_recip, out_dtype, q_tile_target,
             s_chunk_target, single_buffer_weights, vmem_limit):
    wq_t, wkv_t = params["wq_t"], params["wkv_t"]
    e_proj, f_proj = params["e_proj"], params["f_proj"]
    wo_t, b_o = params["wo_t"], params["b_o"]
    compute_dtype = wq_t.dtype

    B, S, E = x.shape
    hd = wq_t.shape[1]
    H = num_heads
    assert hd % H == 0, "H*d_v must be divisible by num_heads"
    d_v = hd // H
    k_len = e_proj.shape[1]
    E_out = wo_t.shape[1]

    # module contract: values.reshape(B, S, embed_dim) requires E == H*d_v
    assert E == hd, "input embed dim must equal num_heads * d_v"
    assert wkv_t.shape == (E, 2 * hd)
    assert e_proj.shape == (H, k_len, S) and f_proj.shape == (H, k_len, S)
    assert b_o.shape == (1, E_out)

    out_dtype = x.dtype if out_dtype is None else out_dtype

    def const_spec(shape, index_map):
        # Grid-invariant weight blocks: single-buffered (no wasted VMEM on a
        # second buffer that never gets used for overlap).
        if single_buffer_weights:
            return pl.BlockSpec(shape, index_map, pipeline_mode=pl.Buffered(1))
        return pl.BlockSpec(shape, index_map)

    # ---------------- phase 1: k_short / v_short (reduction over S) ----------
    # e/f_proj are sliced along S (their last dim), so the S chunk must be a
    # multiple of 128 (lane dim) or the full extent.
    s_chunk = _pick_tile(S, s_chunk_target, 128)
    n_s = S // s_chunk

    kv_flops = 2 * B * S * E * (2 * hd) + 2 * (2 * B * H * k_len * S * d_v)
    kv_bytes = (x.size * _itemsize(x.dtype)
                + wkv_t.size * _itemsize(wkv_t.dtype)
                + B * (e_proj.size + f_proj.size) * _itemsize(e_proj.dtype)
                + 2 * B * H * k_len * d_v * _itemsize(compute_dtype))

    k_short, v_short = pl.pallas_call(
        functools.partial(_kv_projection_kernel, num_heads=H, d_v=d_v,
                          compute_dtype=compute_dtype),
        out_shape=(jax.ShapeDtypeStruct((B, H, k_len, d_v), compute_dtype),
                   jax.ShapeDtypeStruct((B, H, k_len, d_v), compute_dtype)),
        grid_spec=pltpu.PrefetchScalarGridSpec(
            num_scalar_prefetch=0,
            grid=(B, n_s),                              # reduction axis last
            in_specs=[
                pl.BlockSpec((1, s_chunk, E), lambda b, s: (b, s, 0)),      # x
                const_spec((E, 2 * hd), lambda b, s: (0, 0)),               # Wkv^T
                pl.BlockSpec((H, k_len, s_chunk), lambda b, s: (0, 0, s)),  # E
                pl.BlockSpec((H, k_len, s_chunk), lambda b, s: (0, 0, s)),  # F
            ],
            out_specs=[
                pl.BlockSpec((1, H, k_len, d_v), lambda b, s: (b, 0, 0, 0)),
                pl.BlockSpec((1, H, k_len, d_v), lambda b, s: (b, 0, 0, 0)),
            ],
            scratch_shapes=[pltpu.VMEM((H, k_len, d_v), jnp.float32),
                            pltpu.VMEM((H, k_len, d_v), jnp.float32)]),
        compiler_params=pltpu.CompilerParams(
            dimension_semantics=("parallel", "arbitrary"),
            vmem_limit_bytes=vmem_limit),
        cost_estimate=pl.CostEstimate(flops=kv_flops, transcendentals=0,
                                      bytes_accessed=kv_bytes),
    )(x, wkv_t, e_proj, f_proj)

    # ---------------- phase 2: attention + output projection -----------------
    tq = _pick_tile(S, q_tile_target, 8)
    n_q = S // tq

    attn_flops = (2 * B * S * E * hd + 2 * (2 * B * H * S * k_len * d_v)
                  + 2 * B * S * hd * E_out)
    attn_bytes = (x.size * _itemsize(x.dtype)
                  + (wq_t.size + wo_t.size) * _itemsize(wq_t.dtype)
                  + (k_short.size + v_short.size) * _itemsize(compute_dtype)
                  + b_o.size * 4
                  + B * S * E_out * _itemsize(out_dtype))

    out = pl.pallas_call(
        functools.partial(_attention_kernel, num_heads=H, d_v=d_v,
                          compute_dtype=compute_dtype,
                          approx_recip=approx_recip),
        out_shape=jax.ShapeDtypeStruct((B, S, E_out), out_dtype),
        grid_spec=pltpu.PrefetchScalarGridSpec(
            num_scalar_prefetch=0,
            grid=(B, n_q),
            in_specs=[
                pl.BlockSpec((1, tq, E), lambda b, i: (b, i, 0)),           # x
                const_spec((E, hd), lambda b, i: (0, 0)),                   # Wq^T
                pl.BlockSpec((1, H, k_len, d_v), lambda b, i: (b, 0, 0, 0)),  # k_short
                pl.BlockSpec((1, H, k_len, d_v), lambda b, i: (b, 0, 0, 0)),  # v_short
                const_spec((hd, E_out), lambda b, i: (0, 0)),               # Wo^T
                const_spec((1, E_out), lambda b, i: (0, 0)),                # bias
            ],
            out_specs=pl.BlockSpec((1, tq, E_out), lambda b, i: (b, i, 0)),
            scratch_shapes=[pltpu.VMEM((tq, hd), compute_dtype)]),
        compiler_params=pltpu.CompilerParams(
            # two parallel axes => megacore / v7x's 2 TCs stay busy at small B
            dimension_semantics=("parallel", "parallel"),
            vmem_limit_bytes=vmem_limit),
        cost_estimate=pl.CostEstimate(flops=attn_flops,
                                      transcendentals=B * H * S * k_len,
                                      bytes_accessed=attn_bytes),
    )(x, wq_t, k_short, v_short, wo_t, b_o)

    return out


def multihead_linformer_attention(x, params, *, num_heads, approx_recip=True,
                                  out_dtype=None, q_tile_target=512,
                                  s_chunk_target=512):
    """x: (B, S, E); params: output of prepare_params (compute dtype inferred).

    TODO(synk): the module's optional `mask` / `return_attention=True` paths are
    not implemented (the default forward path has no mask and returns only `o`).
    """
    kwargs = dict(num_heads=num_heads, approx_recip=approx_recip,
                  out_dtype=out_dtype, q_tile_target=q_tile_target,
                  s_chunk_target=s_chunk_target, vmem_limit=_vmem_limit_bytes())
    try:
        out = _forward(x, params, single_buffer_weights=True, **kwargs)
        return jax.block_until_ready(out)
    except Exception:
        # pl.Buffered(1) (single-buffering grid-invariant weight blocks) is not
        # accepted by every jax/libtpu combination; retry with default
        # double-buffering (correctness identical, slightly more VMEM).
        out = _forward(x, params, single_buffer_weights=False, **kwargs)
        return jax.block_until_ready(out)


# ----------------------------------------------------------------------------
# parameter construction + pure-JAX reference (verification)
# ----------------------------------------------------------------------------

def _xavier_uniform(key, shape):
    fan_out, fan_in = shape                 # PyTorch nn.Linear weight is (out, in)
    bound = math.sqrt(6.0 / (fan_in + fan_out))
    return jax.random.uniform(key, shape, jnp.float32, -bound, bound)


def make_params(key, input_dim, seq_len, h_times_embed_dim, num_heads, k_len):
    keys = jax.random.split(key, 2 + 2 * num_heads)
    w_qkv = _xavier_uniform(keys[0], (3 * h_times_embed_dim, input_dim))
    e_proj = jnp.stack([_xavier_uniform(keys[2 + i], (k_len, seq_len))
                        for i in range(num_heads)])
    f_proj = jnp.stack([_xavier_uniform(keys[2 + num_heads + i], (k_len, seq_len))
                        for i in range(num_heads)])
    w_o = _xavier_uniform(keys[1], (h_times_embed_dim, h_times_embed_dim))
    b_o = jnp.zeros((h_times_embed_dim,), jnp.float32)
    return w_qkv, e_proj, f_proj, w_o, b_o


def reference(x, w_qkv, e_proj, f_proj, w_o, b_o, num_heads, d_v):
    """Pure-JAX replica of the PyTorch forward pass."""
    B, S, E = x.shape
    qkv = x @ w_qkv.T
    qkv = qkv.reshape(B, S, num_heads, 3 * d_v).transpose(0, 2, 1, 3)
    q, k, v = jnp.split(qkv, 3, axis=-1)                  # (B, H, S, d_v)
    k_short = jnp.einsum('hls,bhsd->bhld', e_proj, k)     # (B, H, k_len, d_v)
    v_short = jnp.einsum('hls,bhsd->bhld', f_proj, v)
    logits = jnp.einsum('bhsd,bhld->bhsl', q, k_short) / math.sqrt(d_v)
    attn = jax.nn.softmax(logits, axis=-1)
    values = jnp.einsum('bhsl,bhld->bhsd', attn, v_short)
    values = values.transpose(0, 2, 1, 3).reshape(B, S, num_heads * d_v)
    return values @ w_o.T + b_o


if __name__ == "__main__":
    # Small shapes consistent with the module (reshape contract: E == H * d_v).
    B, S = 2, 16
    input_dim = 32
    h_times_embed_dim = 32
    num_heads = 4
    k_len = 8
    d_v = h_times_embed_dim // num_heads

    key = jax.random.PRNGKey(0)
    kx, kp, kb = jax.random.split(key, 3)
    x = jax.random.normal(kx, (B, S, input_dim), jnp.float32)

    w_qkv, e_proj, f_proj, w_o, b_o = make_params(
        kp, input_dim, S, h_times_embed_dim, num_heads, k_len)
    # non-zero bias to exercise the bias-add path (the module initialises it to 0)
    b_o = 0.1 * jax.random.normal(kb, (h_times_embed_dim,), jnp.float32)

    ref = reference(x, w_qkv, e_proj, f_proj, w_o, b_o, num_heads, d_v)

    # --- exact path: f32 MXU inputs, exact reciprocal, f32 output ------------
    params_f32 = prepare_params(w_qkv, e_proj, f_proj, w_o, b_o,
                                num_heads=num_heads, compute_dtype=jnp.float32)
    out = multihead_linformer_attention(x, params_f32, num_heads=num_heads,
                                        approx_recip=False)
    out = jax.block_until_ready(out)
    assert out.shape == (B, S, h_times_embed_dim)
    assert jnp.allclose(out, ref, rtol=1e-4, atol=1e-4), (
        float(jnp.max(jnp.abs(out - ref))))

    # --- performance defaults: bf16 MXU inputs (all TPU generations, incl. v5e),
    #     EUP approximate reciprocal, bf16 output (halves writeback DMA) --------
    params_bf16 = prepare_params(w_qkv, e_proj, f_proj, w_o, b_o,
                                 num_heads=num_heads, compute_dtype=jnp.bfloat16)
    out_bf16 = multihead_linformer_attention(x, params_bf16, num_heads=num_heads,
                                             approx_recip=True,
                                             out_dtype=jnp.bfloat16)
    out_bf16 = jax.block_until_ready(out_bf16)
    err = jnp.abs(out_bf16.astype(jnp.float32) - ref)
    assert jnp.allclose(out_bf16.astype(jnp.float32), ref, rtol=5e-2, atol=5e-2), (
        float(jnp.max(err)))

    print("KERNEL_OK")
</pallas_src>

<mosaic_0001>
module attributes {stable_mosaic.version = 11 : i64} {
  func.func @_kv_projection_kernel(%arg0: i32, %arg1: i32, %arg2: memref<1x16x32xf32, #tpu.memory_space<vmem>>, %arg3: memref<32x64xf32, #tpu.memory_space<vmem>>, %arg4: memref<4x8x16xf32, #tpu.memory_space<vmem>>, %arg5: memref<4x8x16xf32, #tpu.memory_space<vmem>>, %arg6: memref<1x4x8x8xf32, #tpu.memory_space<vmem>>, %arg7: memref<1x4x8x8xf32, #tpu.memory_space<vmem>>, %arg8: memref<4x8x8xf32, #tpu.memory_space<vmem>>, %arg9: memref<4x8x8xf32, #tpu.memory_space<vmem>>) attributes {dimension_semantics = [#tpu.dimension_semantics<parallel>, #tpu.dimension_semantics<arbitrary>], iteration_bounds = array<i64: 2, 1>, scalar_prefetch = 0 : i64, scratch_operands = 2 : i64, tpu.core_type = #tpu.core_type<tc>, window_params = [{transform_indices = @transform_0, window_bounds = array<i64: 1, 16, 32>}, {pipeline_mode = #tpu.pipeline_mode<synchronous>, transform_indices = @transform_1, window_bounds = array<i64: 32, 64>}, {transform_indices = @transform_2, window_bounds = array<i64: 4, 8, 16>}, {transform_indices = @transform_3, window_bounds = array<i64: 4, 8, 16>}, {transform_indices = @transform_4, window_bounds = array<i64: 1, 4, 8, 8>}, {transform_indices = @transform_5, window_bounds = array<i64: 1, 4, 8, 8>}]} {
    %c0_i32 = arith.constant 0 : i32
    %0 = arith.cmpi eq, %arg1, %c0_i32 : i32
    %1 = arith.extui %0 : i1 to i32
    %c0_i32_0 = arith.constant 0 : i32
    %2 = arith.cmpi ne, %1, %c0_i32_0 : i32
    scf.if %2 {
      %cst_84 = arith.constant 0.000000e+00 : f32
      %90 = vector.broadcast %cst_84 : f32 to vector<4x8x8xf32>
      %c0_85 = arith.constant 0 : index
      %c0_86 = arith.constant 0 : index
      %c0_87 = arith.constant 0 : index
      %91 = vector.load %arg8[%c0_85, %c0_86, %c0_87] : memref<4x8x8xf32, #tpu.memory_space<vmem>>, vector<4x8x8xf32>
      tpu.vector_store %arg8[%c0_85, %c0_86, %c0_87], %90 {strides = array<i32>} : memref<4x8x8xf32, #tpu.memory_space<vmem>>, vector<4x8x8xf32>,
      %cst_88 = arith.constant 0.000000e+00 : f32
      %92 = vector.broadcast %cst_88 : f32 to vector<4x8x8xf32>
      %c0_89 = arith.constant 0 : index
      %c0_90 = arith.constant 0 : index
      %c0_91 = arith.constant 0 : index
      %93 = vector.load %arg9[%c0_89, %c0_90, %c0_91] : memref<4x8x8xf32, #tpu.memory_space<vmem>>, vector<4x8x8xf32>
      tpu.vector_store %arg9[%c0_89, %c0_90, %c0_91], %92 {strides = array<i32>} : memref<4x8x8xf32, #tpu.memory_space<vmem>>, vector<4x8x8xf32>,
    } else {
    }
    %c0 = arith.constant 0 : index
    %c0_1 = arith.constant 0 : index
    %c0_2 = arith.constant 0 : index
    %3 = vector.load %arg2[%c0, %c0_1, %c0_2] : memref<1x16x32xf32, #tpu.memory_space<vmem>>, vector<1x16x32xf32>
    %4 = vector.shape_cast %3 : vector<1x16x32xf32> to vector<16x32xf32>
    %c0_3 = arith.constant 0 : index
    %c0_4 = arith.constant 0 : index
    %5 = vector.load %arg3[%c0_3, %c0_4] : memref<32x64xf32, #tpu.memory_space<vmem>>, vector<32x64xf32>
    %cst = arith.constant dense<0.000000e+00> : vector<16x64xf32>
    %6 = tpu.matmul %4, %5, %cst {dimension_numbers = #tpu.dot_dimension_numbers<[1], [0], [0], [1], [0, 0, 1, 1], [], []>} : vector<16x32xf32>, vector<32x64xf32>, vector<16x64xf32> -> vector<16x64xf32>
    %7 = vector.extract_strided_slice %6 {offsets = [0, 0], sizes = [16, 8], strides = [1, 1]} : vector<16x64xf32> to vector<16x8xf32>
    %8 = vector.extract_strided_slice %6 {offsets = [0, 32], sizes = [16, 8], strides = [1, 1]} : vector<16x64xf32> to vector<16x8xf32>
    %c0_5 = arith.constant 0 : index
    %c0_6 = arith.constant 0 : index
    %c0_7 = arith.constant 0 : index
    %9 = vector.load %arg8[%c0_5, %c0_6, %c0_7] : memref<4x8x8xf32, #tpu.memory_space<vmem>>, vector<1x8x8xf32>
    %10 = vector.shape_cast %9 : vector<1x8x8xf32> to vector<8x8xf32>
    %c0_8 = arith.constant 0 : index
    %c0_9 = arith.constant 0 : index
    %c0_10 = arith.constant 0 : index
    %11 = vector.load %arg4[%c0_8, %c0_9, %c0_10] : memref<4x8x16xf32, #tpu.memory_space<vmem>>, vector<1x8x16xf32>
    %12 = vector.shape_cast %11 : vector<1x8x16xf32> to vector<8x16xf32>
    %cst_11 = arith.constant dense<0.000000e+00> : vector<8x8xf32>
    %13 = tpu.matmul %12, %7, %cst_11 {dimension_numbers = #tpu.dot_dimension_numbers<[1], [0], [0], [1], [0, 0, 1, 1], [], []>} : vector<8x16xf32>, vector<16x8xf32>, vector<8x8xf32> -> vector<8x8xf32>
    %14 = arith.addf %10, %13 : vector<8x8xf32>
    %c0_12 = arith.constant 0 : index
    %c0_13 = arith.constant 0 : index
    %c0_14 = arith.constant 0 : index
    %15 = vector.load %arg8[%c0_12, %c0_13, %c0_14] : memref<4x8x8xf32, #tpu.memory_space<vmem>>, vector<1x8x8xf32>
    %16 = vector.shape_cast %15 : vector<1x8x8xf32> to vector<8x8xf32>
    %17 = vector.shape_cast %14 : vector<8x8xf32> to vector<1x8x8xf32>
    tpu.vector_store %arg8[%c0_12, %c0_13, %c0_14], %17 {strides = array<i32>} : memref<4x8x8xf32, #tpu.memory_space<vmem>>, vector<1x8x8xf32>,
    %c0_15 = arith.constant 0 : index
    %c0_16 = arith.constant 0 : index
    %c0_17 = arith.constant 0 : index
    %18 = vector.load %arg9[%c0_15, %c0_16, %c0_17] : memref<4x8x8xf32, #tpu.memory_space<vmem>>, vector<1x8x8xf32>
    %19 = vector.shape_cast %18 : vector<1x8x8xf32> to vector<8x8xf32>
    %c0_18 = arith.constant 0 : index
    %c0_19 = arith.constant 0 : index
    %c0_20 = arith.constant 0 : index
    %20 = vector.load %arg5[%c0_18, %c0_19, %c0_20] : memref<4x8x16xf32, #tpu.memory_space<vmem>>, vector<1x8x16xf32>
    %21 = vector.shape_cast %20 : vector<1x8x16xf32> to vector<8x16xf32>
    %cst_21 = arith.constant dense<0.000000e+00> : vector<8x8xf32>
    %22 = tpu.matmul %21, %8, %cst_21 {dimension_numbers = #tpu.dot_dimension_numbers<[1], [0], [0], [1], [0, 0, 1, 1], [], []>} : vector<8x16xf32>, vector<16x8xf32>, vector<8x8xf32> -> vector<8x8xf32>
    %23 = arith.addf %19, %22 : vector<8x8xf32>
    %c0_22 = arith.constant 0 : index
    %c0_23 = arith.constant 0 : index
    %c0_24 = arith.constant 0 : index
    %24 = vector.load %arg9[%c0_22, %c0_23, %c0_24] : memref<4x8x8xf32, #tpu.memory_space<vmem>>, vector<1x8x8xf32>
    %25 = vector.shape_cast %24 : vector<1x8x8xf32> to vector<8x8xf32>
    %26 = vector.shape_cast %23 : vector<8x8xf32> to vector<1x8x8xf32>
    tpu.vector_store %arg9[%c0_22, %c0_23, %c0_24], %26 {strides = array<i32>} : memref<4x8x8xf32, #tpu.memory_space<vmem>>, vector<1x8x8xf32>,
    %27 = vector.extract_strided_slice %6 {offsets = [0, 8], sizes = [16, 8], strides = [1, 1]} : vector<16x64xf32> to vector<16x8xf32>
    %28 = vector.extract_strided_slice %6 {offsets = [0, 40], sizes = [16, 8], strides = [1, 1]} : vector<16x64xf32> to vector<16x8xf32>
    %c1 = arith.constant 1 : index
    %c0_25 = arith.constant 0 : index
    %c0_26 = arith.constant 0 : index
    %29 = vector.load %arg8[%c1, %c0_25, %c0_26] : memref<4x8x8xf32, #tpu.memory_space<vmem>>, vector<1x8x8xf32>
    %30 = vector.shape_cast %29 : vector<1x8x8xf32> to vector<8x8xf32>
    %c1_27 = arith.constant 1 : index
    %c0_28 = arith.constant 0 : index
    %c0_29 = arith.constant 0 : index
    %31 = vector.load %arg4[%c1_27, %c0_28, %c0_29] : memref<4x8x16xf32, #tpu.memory_space<vmem>>, vector<1x8x16xf32>
    %32 = vector.shape_cast %31 : vector<1x8x16xf32> to vector<8x16xf32>
    %cst_30 = arith.constant dense<0.000000e+00> : vector<8x8xf32>
    %33 = tpu.matmul %32, %27, %cst_30 {dimension_numbers = #tpu.dot_dimension_numbers<[1], [0], [0], [1], [0, 0, 1, 1], [], []>} : vector<8x16xf32>, vector<16x8xf32>, vector<8x8xf32> -> vector<8x8xf32>
    %34 = arith.addf %30, %33 : vector<8x8xf32>
    %c1_31 = arith.constant 1 : index
    %c0_32 = arith.constant 0 : index
    %c0_33 = arith.constant 0 : index
    %35 = vector.load %arg8[%c1_31, %c0_32, %c0_33] : memref<4x8x8xf32, #tpu.memory_space<vmem>>, vector<1x8x8xf32>
    %36 = vector.shape_cast %35 : vector<1x8x8xf32> to vector<8x8xf32>
    %37 = vector.shape_cast %34 : vector<8x8xf32> to vector<1x8x8xf32>
    tpu.vector_store %arg8[%c1_31, %c0_32, %c0_33], %37 {strides = array<i32>} : memref<4x8x8xf32, #tpu.memory_space<vmem>>, vector<1x8x8xf32>,
    %c1_34 = arith.constant 1 : index
    %c0_35 = arith.constant 0 : index
    %c0_36 = arith.constant 0 : index
    %38 = vector.load %arg9[%c1_34, %c0_35, %c0_36] : memref<4x8x8xf32, #tpu.memory_space<vmem>>, vector<1x8x8xf32>
    %39 = vector.shape_cast %38 : vector<1x8x8xf32> to vector<8x8xf32>
    %c1_37 = arith.constant 1 : index
    %c0_38 = arith.constant 0 : index
    %c0_39 = arith.constant 0 : index
    %40 = vector.load %arg5[%c1_37, %c0_38, %c0_39] : memref<4x8x16xf32, #tpu.memory_space<vmem>>, vector<1x8x16xf32>
    %41 = vector.shape_cast %40 : vector<1x8x16xf32> to vector<8x16xf32>
    %cst_40 = arith.constant dense<0.000000e+00> : vector<8x8xf32>
    %42 = tpu.matmul %41, %28, %cst_40 {dimension_numbers = #tpu.dot_dimension_numbers<[1], [0], [0], [1], [0, 0, 1, 1], [], []>} : vector<8x16xf32>, vector<16x8xf32>, vector<8x8xf32> -> vector<8x8xf32>
    %43 = arith.addf %39, %42 : vector<8x8xf32>
    %c1_41 = arith.constant 1 : index
    %c0_42 = arith.constant 0 : index
    %c0_43 = arith.constant 0 : index
    %44 = vector.load %arg9[%c1_41, %c0_42, %c0_43] : memref<4x8x8xf32, #tpu.memory_space<vmem>>, vector<1x8x8xf32>
    %45 = vector.shape_cast %44 : vector<1x8x8xf32> to vector<8x8xf32>
    %46 = vector.shape_cast %43 : vector<8x8xf32> to vector<1x8x8xf32>
    tpu.vector_store %arg9[%c1_41, %c0_42, %c0_43], %46 {strides = array<i32>} : memref<4x8x8xf32, #tpu.memory_space<vmem>>, vector<1x8x8xf32>,
    %47 = vector.extract_strided_slice %6 {offsets = [0, 16], sizes = [16, 8], strides = [1, 1]} : vector<16x64xf32> to vector<16x8xf32>
    %48 = vector.extract_strided_slice %6 {offsets = [0, 48], sizes = [16, 8], strides = [1, 1]} : vector<16x64xf32> to vector<16x8xf32>
    %c2 = arith.constant 2 : index
    %c0_44 = arith.constant 0 : index
    %c0_45 = arith.constant 0 : index
    %49 = vector.load %arg8[%c2, %c0_44, %c0_45] : memref<4x8x8xf32, #tpu.memory_space<vmem>>, vector<1x8x8xf32>
    %50 = vector.shape_cast %49 : vector<1x8x8xf32> to vector<8x8xf32>
    %c2_46 = arith.constant 2 : index
    %c0_47 = arith.constant 0 : index
    %c0_48 = arith.constant 0 : index
    %51 = vector.load %arg4[%c2_46, %c0_47, %c0_48] : memref<4x8x16xf32, #tpu.memory_space<vmem>>, vector<1x8x16xf32>
    %52 = vector.shape_cast %51 : vector<1x8x16xf32> to vector<8x16xf32>
    %cst_49 = arith.constant dense<0.000000e+00> : vector<8x8xf32>
    %53 = tpu.matmul %52, %47, %cst_49 {dimension_numbers = #tpu.dot_dimension_numbers<[1], [0], [0], [1], [0, 0, 1, 1], [], []>} : vector<8x16xf32>, vector<16x8xf32>, vector<8x8xf32> -> vector<8x8xf32>
    %54 = arith.addf %50, %53 : vector<8x8xf32>
    %c2_50 = arith.constant 2 : index
    %c0_51 = arith.constant 0 : index
    %c0_52 = arith.constant 0 : index
    %55 = vector.load %arg8[%c2_50, %c0_51, %c0_52] : memref<4x8x8xf32, #tpu.memory_space<vmem>>, vector<1x8x8xf32>
    %56 = vector.shape_cast %55 : vector<1x8x8xf32> to vector<8x8xf32>
    %57 = vector.shape_cast %54 : vector<8x8xf32> to vector<1x8x8xf32>
    tpu.vector_store %arg8[%c2_50, %c0_51, %c0_52], %57 {strides = array<i32>} : memref<4x8x8xf32, #tpu.memory_space<vmem>>, vector<1x8x8xf32>,
    %c2_53 = arith.constant 2 : index
    %c0_54 = arith.constant 0 : index
    %c0_55 = arith.constant 0 : index
    %58 = vector.load %arg9[%c2_53, %c0_54, %c0_55] : memref<4x8x8xf32, #tpu.memory_space<vmem>>, vector<1x8x8xf32>
    %59 = vector.shape_cast %58 : vector<1x8x8xf32> to vector<8x8xf32>
    %c2_56 = arith.constant 2 : index
    %c0_57 = arith.constant 0 : index
    %c0_58 = arith.constant 0 : index
    %60 = vector.load %arg5[%c2_56, %c0_57, %c0_58] : memref<4x8x16xf32, #tpu.memory_space<vmem>>, vector<1x8x16xf32>
    %61 = vector.shape_cast %60 : vector<1x8x16xf32> to vector<8x16xf32>
    %cst_59 = arith.constant dense<0.000000e+00> : vector<8x8xf32>
    %62 = tpu.matmul %61, %48, %cst_59 {dimension_numbers = #tpu.dot_dimension_numbers<[1], [0], [0], [1], [0, 0, 1, 1], [], []>} : vector<8x16xf32>, vector<16x8xf32>, vector<8x8xf32> -> vector<8x8xf32>
    %63 = arith.addf %59, %62 : vector<8x8xf32>
    %c2_60 = arith.constant 2 : index
    %c0_61 = arith.constant 0 : index
    %c0_62 = arith.constant 0 : index
    %64 = vector.load %arg9[%c2_60, %c0_61, %c0_62] : memref<4x8x8xf32, #tpu.memory_space<vmem>>, vector<1x8x8xf32>
    %65 = vector.shape_cast %64 : vector<1x8x8xf32> to vector<8x8xf32>
    %66 = vector.shape_cast %63 : vector<8x8xf32> to vector<1x8x8xf32>
    tpu.vector_store %arg9[%c2_60, %c0_61, %c0_62], %66 {strides = array<i32>} : memref<4x8x8xf32, #tpu.memory_space<vmem>>, vector<1x8x8xf32>,
    %67 = vector.extract_strided_slice %6 {offsets = [0, 24], sizes = [16, 8], strides = [1, 1]} : vector<16x64xf32> to vector<16x8xf32>
    %68 = vector.extract_strided_slice %6 {offsets = [0, 56], sizes = [16, 8], strides = [1, 1]} : vector<16x64xf32> to vector<16x8xf32>
    %c3 = arith.constant 3 : index
    %c0_63 = arith.constant 0 : index
    %c0_64 = arith.constant 0 : index
    %69 = vector.load %arg8[%c3, %c0_63, %c0_64] : memref<4x8x8xf32, #tpu.memory_space<vmem>>, vector<1x8x8xf32>
    %70 = vector.shape_cast %69 : vector<1x8x8xf32> to vector<8x8xf32>
    %c3_65 = arith.constant 3 : index
    %c0_66 = arith.constant 0 : index
    %c0_67 = arith.constant 0 : index
    %71 = vector.load %arg4[%c3_65, %c0_66, %c0_67] : memref<4x8x16xf32, #tpu.memory_space<vmem>>, vector<1x8x16xf32>
    %72 = vector.shape_cast %71 : vector<1x8x16xf32> to vector<8x16xf32>
    %cst_68 = arith.constant dense<0.000000e+00> : vector<8x8xf32>
    %73 = tpu.matmul %72, %67, %cst_68 {dimension_numbers = #tpu.dot_dimension_numbers<[1], [0], [0], [1], [0, 0, 1, 1], [], []>} : vector<8x16xf32>, vector<16x8xf32>, vector<8x8xf32> -> vector<8x8xf32>
    %74 = arith.addf %70, %73 : vector<8x8xf32>
    %c3_69 = arith.constant 3 : index
    %c0_70 = arith.constant 0 : index
    %c0_71 = arith.constant 0 : index
    %75 = vector.load %arg8[%c3_69, %c0_70, %c0_71] : memref<4x8x8xf32, #tpu.memory_space<vmem>>, vector<1x8x8xf32>
    %76 = vector.shape_cast %75 : vector<1x8x8xf32> to vector<8x8xf32>
    %77 = vector.shape_cast %74 : vector<8x8xf32> to vector<1x8x8xf32>
    tpu.vector_store %arg8[%c3_69, %c0_70, %c0_71], %77 {strides = array<i32>} : memref<4x8x8xf32, #tpu.memory_space<vmem>>, vector<1x8x8xf32>,
    %c3_72 = arith.constant 3 : index
    %c0_73 = arith.constant 0 : index
    %c0_74 = arith.constant 0 : index
    %78 = vector.load %arg9[%c3_72, %c0_73, %c0_74] : memref<4x8x8xf32, #tpu.memory_space<vmem>>, vector<1x8x8xf32>
    %79 = vector.shape_cast %78 : vector<1x8x8xf32> to vector<8x8xf32>
    %c3_75 = arith.constant 3 : index
    %c0_76 = arith.constant 0 : index
    %c0_77 = arith.constant 0 : index
    %80 = vector.load %arg5[%c3_75, %c0_76, %c0_77] : memref<4x8x16xf32, #tpu.memory_space<vmem>>, vector<1x8x16xf32>
    %81 = vector.shape_cast %80 : vector<1x8x16xf32> to vector<8x16xf32>
    %cst_78 = arith.constant dense<0.000000e+00> : vector<8x8xf32>
    %82 = tpu.matmul %81, %68, %cst_78 {dimension_numbers = #tpu.dot_dimension_numbers<[1], [0], [0], [1], [0, 0, 1, 1], [], []>} : vector<8x16xf32>, vector<16x8xf32>, vector<8x8xf32> -> vector<8x8xf32>
    %83 = arith.addf %79, %82 : vector<8x8xf32>
    %c3_79 = arith.constant 3 : index
    %c0_80 = arith.constant 0 : index
    %c0_81 = arith.constant 0 : index
    %84 = vector.load %arg9[%c3_79, %c0_80, %c0_81] : memref<4x8x8xf32, #tpu.memory_space<vmem>>, vector<1x8x8xf32>
    %85 = vector.shape_cast %84 : vector<1x8x8xf32> to vector<8x8xf32>
    %86 = vector.shape_cast %83 : vector<8x8xf32> to vector<1x8x8xf32>
    tpu.vector_store %arg9[%c3_79, %c0_80, %c0_81], %86 {strides = array<i32>} : memref<4x8x8xf32, #tpu.memory_space<vmem>>, vector<1x8x8xf32>,
    %c0_i32_82 = arith.constant 0 : i32
    %87 = arith.cmpi eq, %arg1, %c0_i32_82 : i32
    %88 = arith.extui %87 : i1 to i32
    %c0_i32_83 = arith.constant 0 : i32
    %89 = arith.cmpi ne, %88, %c0_i32_83 : i32
    scf.if %89 {
      %c0_84 = arith.constant 0 : index
      %c0_85 = arith.constant 0 : index
      %c0_86 = arith.constant 0 : index
      %90 = vector.load %arg8[%c0_84, %c0_85, %c0_86] : memref<4x8x8xf32, #tpu.memory_space<vmem>>, vector<4x8x8xf32>
      %c0_87 = arith.constant 0 : index
      %c0_88 = arith.constant 0 : index
      %c0_89 = arith.constant 0 : index
      %c0_90 = arith.constant 0 : index
      %91 = vector.load %arg6[%c0_87, %c0_88, %c0_89, %c0_90] : memref<1x4x8x8xf32, #tpu.memory_space<vmem>>, vector<1x4x8x8xf32>
      %92 = vector.shape_cast %91 : vector<1x4x8x8xf32> to vector<4x8x8xf32>
      %93 = vector.shape_cast %90 : vector<4x8x8xf32> to vector<1x4x8x8xf32>
      tpu.vector_store %arg6[%c0_87, %c0_88, %c0_89, %c0_90], %93 {strides = array<i32>} : memref<1x4x8x8xf32, #tpu.memory_space<vmem>>, vector<1x4x8x8xf32>,
      %c0_91 = arith.constant 0 : index
      %c0_92 = arith.constant 0 : index
      %c0_93 = arith.constant 0 : index
      %94 = vector.load %arg9[%c0_91, %c0_92, %c0_93] : memref<4x8x8xf32, #tpu.memory_space<vmem>>, vector<4x8x8xf32>
      %c0_94 = arith.constant 0 : index
      %c0_95 = arith.constant 0 : index
      %c0_96 = arith.constant 0 : index
      %c0_97 = arith.constant 0 : index
      %95 = vector.load %arg7[%c0_94, %c0_95, %c0_96, %c0_97] : memref<1x4x8x8xf32, #tpu.memory_space<vmem>>, vector<1x4x8x8xf32>
      %96 = vector.shape_cast %95 : vector<1x4x8x8xf32> to vector<4x8x8xf32>
      %97 = vector.shape_cast %94 : vector<4x8x8xf32> to vector<1x4x8x8xf32>
      tpu.vector_store %arg7[%c0_94, %c0_95, %c0_96, %c0_97], %97 {strides = array<i32>} : memref<1x4x8x8xf32, #tpu.memory_space<vmem>>, vector<1x4x8x8xf32>,
    } else {
    }
    return
  }
  func.func @transform_0(%arg0: i32, %arg1: i32) -> (i32, i32, i32) {
    %c0_i32 = arith.constant 0 : i32
    %c0_i32_0 = arith.constant 0 : i32
    return %arg0, %arg1, %c0_i32 : i32, i32, i32
  }
  func.func @transform_1(%arg0: i32, %arg1: i32) -> (i32, i32) {
    %c0_i32 = arith.constant 0 : i32
    %c0_i32_0 = arith.constant 0 : i32
    %c0_i32_1 = arith.constant 0 : i32
    return %c0_i32, %c0_i32_0 : i32, i32
  }
  func.func @transform_2(%arg0: i32, %arg1: i32) -> (i32, i32, i32) {
    %c0_i32 = arith.constant 0 : i32
    %c0_i32_0 = arith.constant 0 : i32
    %c0_i32_1 = arith.constant 0 : i32
    return %c0_i32, %c0_i32_0, %arg1 : i32, i32, i32
  }
  func.func @transform_3(%arg0: i32, %arg1: i32) -> (i32, i32, i32) {
    %c0_i32 = arith.constant 0 : i32
    %c0_i32_0 = arith.constant 0 : i32
    %c0_i32_1 = arith.constant 0 : i32
    return %c0_i32, %c0_i32_0, %arg1 : i32, i32, i32
  }
  func.func @transform_4(%arg0: i32, %arg1: i32) -> (i32, i32, i32, i32) {
    %c0_i32 = arith.constant 0 : i32
    %c0_i32_0 = arith.constant 0 : i32
    %c0_i32_1 = arith.constant 0 : i32
    %c0_i32_2 = arith.constant 0 : i32
    return %arg0, %c0_i32, %c0_i32_0, %c0_i32_1 : i32, i32, i32, i32
  }
  func.func @transform_5(%arg0: i32, %arg1: i32) -> (i32, i32, i32, i32) {
    %c0_i32 = arith.constant 0 : i32
    %c0_i32_0 = arith.constant 0 : i32
    %c0_i32_1 = arith.constant 0 : i32
    %c0_i32_2 = arith.constant 0 : i32
    return %arg0, %c0_i32, %c0_i32_0, %c0_i32_1 : i32, i32, i32, i32
  }
}

module attributes {stable_mosaic.version = 11 : i64} {
  func.func @_kv_projection_kernel(%arg0: i32, %arg1: i32, %arg2: memref<1x16x32xf32, #tpu.memory_space<vmem>>, %arg3: memref<32x64xf32, #tpu.memory_space<vmem>>, %arg4: memref<4x8x16xf32, #tpu.memory_space<vmem>>, %arg5: memref<4x8x16xf32, #tpu.memory_space<vmem>>, %arg6: memref<1x4x8x8xf32, #tpu.memory_space<vmem>>, %arg7: memref<1x4x8x8xf32, #tpu.memory_space<vmem>>, %arg8: memref<4x8x8xf32, #tpu.memory_space<vmem>>, %arg9: memref<4x8x8xf32, #tpu.memory_space<vmem>>) attributes {dimension_semantics = [#tpu.dimension_semantics<parallel>, #tpu.dimension_semantics<arbitrary>], iteration_bounds = array<i64: 2, 1>, scalar_prefetch = 0 : i64, scratch_operands = 2 : i64, tpu.core_type = #tpu.core_type<tc>, window_params = [{transform_indices = @transform_0, window_bounds = array<i64: 1, 16, 32>}, {pipeline_mode = #tpu.pipeline_mode<synchronous>, transform_indices = @transform_1, window_bounds = array<i64: 32, 64>}, {transform_indices = @transform_2, window_bounds = array<i64: 4, 8, 16>}, {transform_indices = @transform_3, window_bounds = array<i64: 4, 8, 16>}, {transform_indices = @transform_4, window_bounds = array<i64: 1, 4, 8, 8>}, {transform_indices = @transform_5, window_bounds = array<i64: 1, 4, 8, 8>}]} {
    %c0_i32 = arith.constant 0 : i32
    %0 = arith.cmpi eq, %arg1, %c0_i32 : i32
    %1 = arith.extui %0 : i1 to i32
    %c0_i32_0 = arith.constant 0 : i32
    %2 = arith.cmpi ne, %1, %c0_i32_0 : i32
    scf.if %2 {
      %cst_84 = arith.constant 0.000000e+00 : f32
      %90 = vector.broadcast %cst_84 : f32 to vector<4x8x8xf32>
      %c0_85 = arith.constant 0 : index
      %c0_86 = arith.constant 0 : index
      %c0_87 = arith.constant 0 : index
      %91 = vector.load %arg8[%c0_85, %c0_86, %c0_87] : memref<4x8x8xf32, #tpu.memory_space<vmem>>, vector<4x8x8xf32>
      tpu.vector_store %arg8[%c0_85, %c0_86, %c0_87], %90 {strides = array<i32>} : memref<4x8x8xf32, #tpu.memory_space<vmem>>, vector<4x8x8xf32>,
      %cst_88 = arith.constant 0.000000e+00 : f32
      %92 = vector.broadcast %cst_88 : f32 to vector<4x8x8xf32>
      %c0_89 = arith.constant 0 : index
      %c0_90 = arith.constant 0 : index
      %c0_91 = arith.constant 0 : index
      %93 = vector.load %arg9[%c0_89, %c0_90, %c0_91] : memref<4x8x8xf32, #tpu.memory_space<vmem>>, vector<4x8x8xf32>
      tpu.vector_store %arg9[%c0_89, %c0_90, %c0_91], %92 {strides = array<i32>} : memref<4x8x8xf32, #tpu.memory_space<vmem>>, vector<4x8x8xf32>,
    } else {
    }
    %c0 = arith.constant 0 : index
    %c0_1 = arith.constant 0 : index
    %c0_2 = arith.constant 0 : index
    %3 = vector.load %arg2[%c0, %c0_1, %c0_2] : memref<1x16x32xf32, #tpu.memory_space<vmem>>, vector<1x16x32xf32>
    %4 = vector.shape_cast %3 : vector<1x16x32xf32> to vector<16x32xf32>
    %c0_3 = arith.constant 0 : index
    %c0_4 = arith.constant 0 : index
    %5 = vector.load %arg3[%c0_3, %c0_4] : memref<32x64xf32, #tpu.memory_space<vmem>>, vector<32x64xf32>
    %cst = arith.constant dense<0.000000e+00> : vector<16x64xf32>
    %6 = tpu.matmul %4, %5, %cst {dimension_numbers = #tpu.dot_dimension_numbers<[1], [0], [0], [1], [0, 0, 1, 1], [], []>} : vector<16x32xf32>, vector<32x64xf32>, vector<16x64xf32> -> vector<16x64xf32>
    %7 = vector.extract_strided_slice %6 {offsets = [0, 0], sizes = [16, 8], strides = [1, 1]} : vector<16x64xf32> to vector<16x8xf32>
    %8 = vector.extract_strided_slice %6 {offsets = [0, 32], sizes = [16, 8], strides = [1, 1]} : vector<16x64xf32> to vector<16x8xf32>
    %c0_5 = arith.constant 0 : index
    %c0_6 = arith.constant 0 : index
    %c0_7 = arith.constant 0 : index
    %9 = vector.load %arg8[%c0_5, %c0_6, %c0_7] : memref<4x8x8xf32, #tpu.memory_space<vmem>>, vector<1x8x8xf32>
    %10 = vector.shape_cast %9 : vector<1x8x8xf32> to vector<8x8xf32>
    %c0_8 = arith.constant 0 : index
    %c0_9 = arith.constant 0 : index
    %c0_10 = arith.constant 0 : index
    %11 = vector.load %arg4[%c0_8, %c0_9, %c0_10] : memref<4x8x16xf32, #tpu.memory_space<vmem>>, vector<1x8x16xf32>
    %12 = vector.shape_cast %11 : vector<1x8x16xf32> to vector<8x16xf32>
    %cst_11 = arith.constant dense<0.000000e+00> : vector<8x8xf32>
    %13 = tpu.matmul %12, %7, %cst_11 {dimension_numbers = #tpu.dot_dimension_numbers<[1], [0], [0], [1], [0, 0, 1, 1], [], []>} : vector<8x16xf32>, vector<16x8xf32>, vector<8x8xf32> -> vector<8x8xf32>
    %14 = arith.addf %10, %13 : vector<8x8xf32>
    %c0_12 = arith.constant 0 : index
    %c0_13 = arith.constant 0 : index
    %c0_14 = arith.constant 0 : index
    %15 = vector.load %arg8[%c0_12, %c0_13, %c0_14] : memref<4x8x8xf32, #tpu.memory_space<vmem>>, vector<1x8x8xf32>
    %16 = vector.shape_cast %15 : vector<1x8x8xf32> to vector<8x8xf32>
    %17 = vector.shape_cast %14 : vector<8x8xf32> to vector<1x8x8xf32>
    tpu.vector_store %arg8[%c0_12, %c0_13, %c0_14], %17 {strides = array<i32>} : memref<4x8x8xf32, #tpu.memory_space<vmem>>, vector<1x8x8xf32>,
    %c0_15 = arith.constant 0 : index
    %c0_16 = arith.constant 0 : index
    %c0_17 = arith.constant 0 : index
    %18 = vector.load %arg9[%c0_15, %c0_16, %c0_17] : memref<4x8x8xf32, #tpu.memory_space<vmem>>, vector<1x8x8xf32>
    %19 = vector.shape_cast %18 : vector<1x8x8xf32> to vector<8x8xf32>
    %c0_18 = arith.constant 0 : index
    %c0_19 = arith.constant 0 : index
    %c0_20 = arith.constant 0 : index
    %20 = vector.load %arg5[%c0_18, %c0_19, %c0_20] : memref<4x8x16xf32, #tpu.memory_space<vmem>>, vector<1x8x16xf32>
    %21 = vector.shape_cast %20 : vector<1x8x16xf32> to vector<8x16xf32>
    %cst_21 = arith.constant dense<0.000000e+00> : vector<8x8xf32>
    %22 = tpu.matmul %21, %8, %cst_21 {dimension_numbers = #tpu.dot_dimension_numbers<[1], [0], [0], [1], [0, 0, 1, 1], [], []>} : vector<8x16xf32>, vector<16x8xf32>, vector<8x8xf32> -> vector<8x8xf32>
    %23 = arith.addf %19, %22 : vector<8x8xf32>
    %c0_22 = arith.constant 0 : index
    %c0_23 = arith.constant 0 : index
    %c0_24 = arith.constant 0 : index
    %24 = vector.load %arg9[%c0_22, %c0_23, %c0_24] : memref<4x8x8xf32, #tpu.memory_space<vmem>>, vector<1x8x8xf32>
    %25 = vector.shape_cast %24 : vector<1x8x8xf32> to vector<8x8xf32>
    %26 = vector.shape_cast %23 : vector<8x8xf32> to vector<1x8x8xf32>
    tpu.vector_store %arg9[%c0_22, %c0_23, %c0_24], %26 {strides = array<i32>} : memref<4x8x8xf32, #tpu.memory_space<vmem>>, vector<1x8x8xf32>,
    %27 = vector.extract_strided_slice %6 {offsets = [0, 8], sizes = [16, 8], strides = [1, 1]} : vector<16x64xf32> to vector<16x8xf32>
    %28 = vector.extract_strided_slice %6 {offsets = [0, 40], sizes = [16, 8], strides = [1, 1]} : vector<16x64xf32> to vector<16x8xf32>
    %c1 = arith.constant 1 : index
    %c0_25 = arith.constant 0 : index
    %c0_26 = arith.constant 0 : index
    %29 = vector.load %arg8[%c1, %c0_25, %c0_26] : memref<4x8x8xf32, #tpu.memory_space<vmem>>, vector<1x8x8xf32>
    %30 = vector.shape_cast %29 : vector<1x8x8xf32> to vector<8x8xf32>
    %c1_27 = arith.constant 1 : index
    %c0_28 = arith.constant 0 : index
    %c0_29 = arith.constant 0 : index
    %31 = vector.load %arg4[%c1_27, %c0_28, %c0_29] : memref<4x8x16xf32, #tpu.memory_space<vmem>>, vector<1x8x16xf32>
    %32 = vector.shape_cast %31 : vector<1x8x16xf32> to vector<8x16xf32>
    %cst_30 = arith.constant dense<0.000000e+00> : vector<8x8xf32>
    %33 = tpu.matmul %32, %27, %cst_30 {dimension_numbers = #tpu.dot_dimension_numbers<[1], [0], [0], [1], [0, 0, 1, 1], [], []>} : vector<8x16xf32>, vector<16x8xf32>, vector<8x8xf32> -> vector<8x8xf32>
    %34 = arith.addf %30, %33 : vector<8x8xf32>
    %c1_31 = arith.constant 1 : index
    %c0_32 = arith.constant 0 : index
    %c0_33 = arith.constant 0 : index
    %35 = vector.load %arg8[%c1_31, %c0_32, %c0_33] : memref<4x8x8xf32, #tpu.memory_space<vmem>>, vector<1x8x8xf32>
    %36 = vector.shape_cast %35 : vector<1x8x8xf32> to vector<8x8xf32>
    %37 = vector.shape_cast %34 : vector<8x8xf32> to vector<1x8x8xf32>
    tpu.vector_store %arg8[%c1_31, %c0_32, %c0_33], %37 {strides = array<i32>} : memref<4x8x8xf32, #tpu.memory_space<vmem>>, vector<1x8x8xf32>,
    %c1_34 = arith.constant 1 : index
    %c0_35 = arith.constant 0 : index
    %c0_36 = arith.constant 0 : index
    %38 = vector.load %arg9[%c1_34, %c0_35, %c0_36] : memref<4x8x8xf32, #tpu.memory_space<vmem>>, vector<1x8x8xf32>
    %39 = vector.shape_cast %38 : vector<1x8x8xf32> to vector<8x8xf32>
    %c1_37 = arith.constant 1 : index
    %c0_38 = arith.constant 0 : index
    %c0_39 = arith.constant 0 : index
    %40 = vector.load %arg5[%c1_37, %c0_38, %c0_39] : memref<4x8x16xf32, #tpu.memory_space<vmem>>, vector<1x8x16xf32>
    %41 = vector.shape_cast %40 : vector<1x8x16xf32> to vector<8x16xf32>
    %cst_40 = arith.constant dense<0.000000e+00> : vector<8x8xf32>
    %42 = tpu.matmul %41, %28, %cst_40 {dimension_numbers = #tpu.dot_dimension_numbers<[1], [0], [0], [1], [0, 0, 1, 1], [], []>} : vector<8x16xf32>, vector<16x8xf32>, vector<8x8xf32> -> vector<8x8xf32>
    %43 = arith.addf %39, %42 : vector<8x8xf32>
    %c1_41 = arith.constant 1 : index
    %c0_42 = arith.constant 0 : index
    %c0_43 = arith.constant 0 : index
    %44 = vector.load %arg9[%c1_41, %c0_42, %c0_43] : memref<4x8x8xf32, #tpu.memory_space<vmem>>, vector<1x8x8xf32>
    %45 = vector.shape_cast %44 : vector<1x8x8xf32> to vector<8x8xf32>
    %46 = vector.shape_cast %43 : vector<8x8xf32> to vector<1x8x8xf32>
    tpu.vector_store %arg9[%c1_41, %c0_42, %c0_43], %46 {strides = array<i32>} : memref<4x8x8xf32, #tpu.memory_space<vmem>>, vector<1x8x8xf32>,
    %47 = vector.extract_strided_slice %6 {offsets = [0, 16], sizes = [16, 8], strides = [1, 1]} : vector<16x64xf32> to vector<16x8xf32>
    %48 = vector.extract_strided_slice %6 {offsets = [0, 48], sizes = [16, 8], strides = [1, 1]} : vector<16x64xf32> to vector<16x8xf32>
    %c2 = arith.constant 2 : index
    %c0_44 = arith.constant 0 : index
    %c0_45 = arith.constant 0 : index
    %49 = vector.load %arg8[%c2, %c0_44, %c0_45] : memref<4x8x8xf32, #tpu.memory_space<vmem>>, vector<1x8x8xf32>
    %50 = vector.shape_cast %49 : vector<1x8x8xf32> to vector<8x8xf32>
    %c2_46 = arith.constant 2 : index
    %c0_47 = arith.constant 0 : index
    %c0_48 = arith.constant 0 : index
    %51 = vector.load %arg4[%c2_46, %c0_47, %c0_48] : memref<4x8x16xf32, #tpu.memory_space<vmem>>, vector<1x8x16xf32>
    %52 = vector.shape_cast %51 : vector<1x8x16xf32> to vector<8x16xf32>
    %cst_49 = arith.constant dense<0.000000e+00> : vector<8x8xf32>
    %53 = tpu.matmul %52, %47, %cst_49 {dimension_numbers = #tpu.dot_dimension_numbers<[1], [0], [0], [1], [0, 0, 1, 1], [], []>} : vector<8x16xf32>, vector<16x8xf32>, vector<8x8xf32> -> vector<8x8xf32>
    %54 = arith.addf %50, %53 : vector<8x8xf32>
    %c2_50 = arith.constant 2 : index
    %c0_51 = arith.constant 0 : index
    %c0_52 = arith.constant 0 : index
    %55 = vector.load %arg8[%c2_50, %c0_51, %c0_52] : memref<4x8x8xf32, #tpu.memory_space<vmem>>, vector<1x8x8xf32>
    %56 = vector.shape_cast %55 : vector<1x8x8xf32> to vector<8x8xf32>
    %57 = vector.shape_cast %54 : vector<8x8xf32> to vector<1x8x8xf32>
    tpu.vector_store %arg8[%c2_50, %c0_51, %c0_52], %57 {strides = array<i32>} : memref<4x8x8xf32, #tpu.memory_space<vmem>>, vector<1x8x8xf32>,
    %c2_53 = arith.constant 2 : index
    %c0_54 = arith.constant 0 : index
    %c0_55 = arith.constant 0 : index
    %58 = vector.load %arg9[%c2_53, %c0_54, %c0_55] : memref<4x8x8xf32, #tpu.memory_space<vmem>>, vector<1x8x8xf32>
    %59 = vector.shape_cast %58 : vector<1x8x8xf32> to vector<8x8xf32>
    %c2_56 = arith.constant 2 : index
    %c0_57 = arith.constant 0 : index
    %c0_58 = arith.constant 0 : index
    %60 = vector.load %arg5[%c2_56, %c0_57, %c0_58] : memref<4x8x16xf32, #tpu.memory_space<vmem>>, vector<1x8x16xf32>
    %61 = vector.shape_cast %60 : vector<1x8x16xf32> to vector<8x16xf32>
    %cst_59 = arith.constant dense<0.000000e+00> : vector<8x8xf32>
    %62 = tpu.matmul %61, %48, %cst_59 {dimension_numbers = #tpu.dot_dimension_numbers<[1], [0], [0], [1], [0, 0, 1, 1], [], []>} : vector<8x16xf32>, vector<16x8xf32>, vector<8x8xf32> -> vector<8x8xf32>
    %63 = arith.addf %59, %62 : vector<8x8xf32>
    %c2_60 = arith.constant 2 : index
    %c0_61 = arith.constant 0 : index
    %c0_62 = arith.constant 0 : index
    %64 = vector.load %arg9[%c2_60, %c0_61, %c0_62] : memref<4x8x8xf32, #tpu.memory_space<vmem>>, vector<1x8x8xf32>
    %65 = vector.shape_cast %64 : vector<1x8x8xf32> to vector<8x8xf32>
    %66 = vector.shape_cast %63 : vector<8x8xf32> to vector<1x8x8xf32>
    tpu.vector_store %arg9[%c2_60, %c0_61, %c0_62], %66 {strides = array<i32>} : memref<4x8x8xf32, #tpu.memory_space<vmem>>, vector<1x8x8xf32>,
    %67 = vector.extract_strided_slice %6 {offsets = [0, 24], sizes = [16, 8], strides = [1, 1]} : vector<16x64xf32> to vector<16x8xf32>
    %68 = vector.extract_strided_slice %6 {offsets = [0, 56], sizes = [16, 8], strides = [1, 1]} : vector<16x64xf32> to vector<16x8xf32>
    %c3 = arith.constant 3 : index
    %c0_63 = arith.constant 0 : index
    %c0_64 = arith.constant 0 : index
    %69 = vector.load %arg8[%c3, %c0_63, %c0_64] : memref<4x8x8xf32, #tpu.memory_space<vmem>>, vector<1x8x8xf32>
    %70 = vector.shape_cast %69 : vector<1x8x8xf32> to vector<8x8xf32>
    %c3_65 = arith.constant 3 : index
    %c0_66 = arith.constant 0 : index
    %c0_67 = arith.constant 0 : index
    %71 = vector.load %arg4[%c3_65, %c0_66, %c0_67] : memref<4x8x16xf32, #tpu.memory_space<vmem>>, vector<1x8x16xf32>
    %72 = vector.shape_cast %71 : vector<1x8x16xf32> to vector<8x16xf32>
    %cst_68 = arith.constant dense<0.000000e+00> : vector<8x8xf32>
    %73 = tpu.matmul %72, %67, %cst_68 {dimension_numbers = #tpu.dot_dimension_numbers<[1], [0], [0], [1], [0, 0, 1, 1], [], []>} : vector<8x16xf32>, vector<16x8xf32>, vector<8x8xf32> -> vector<8x8xf32>
    %74 = arith.addf %70, %73 : vector<8x8xf32>
    %c3_69 = arith.constant 3 : index
    %c0_70 = arith.constant 0 : index
    %c0_71 = arith.constant 0 : index
    %75 = vector.load %arg8[%c3_69, %c0_70, %c0_71] : memref<4x8x8xf32, #tpu.memory_space<vmem>>, vector<1x8x8xf32>
    %76 = vector.shape_cast %75 : vector<1x8x8xf32> to vector<8x8xf32>
    %77 = vector.shape_cast %74 : vector<8x8xf32> to vector<1x8x8xf32>
    tpu.vector_store %arg8[%c3_69, %c0_70, %c0_71], %77 {strides = array<i32>} : memref<4x8x8xf32, #tpu.memory_space<vmem>>, vector<1x8x8xf32>,
    %c3_72 = arith.constant 3 : index
    %c0_73 = arith.constant 0 : index
    %c0_74 = arith.constant 0 : index
    %78 = vector.load %arg9[%c3_72, %c0_73, %c0_74] : memref<4x8x8xf32, #tpu.memory_space<vmem>>, vector<1x8x8xf32>
    %79 = vector.shape_cast %78 : vector<1x8x8xf32> to vector<8x8xf32>
    %c3_75 = arith.constant 3 : index
    %c0_76 = arith.constant 0 : index
    %c0_77 = arith.constant 0 : index
    %80 = vector.load %arg5[%c3_75, %c0_76, %c0_77] : memref<4x8x16xf32, #tpu.memory_space<vmem>>, vector<1x8x16xf32>
    %81 = vector.shape_cast %80 : vector<1x8x16xf32> to vector<8x16xf32>
    %cst_78 = arith.constant dense<0.000000e+00> : vector<8x8xf32>
    %82 = tpu.matmul %81, %68, %cst_78 {dimension_numbers = #tpu.dot_dimension_numbers<[1], [0], [0], [1], [0, 0, 1, 1], [], []>} : vector<8x16xf32>, vector<16x8xf32>, vector<8x8xf32> -> vector<8x8xf32>
    %83 = arith.addf %79, %82 : vector<8x8xf32>
    %c3_79 = arith.constant 3 : index
    %c0_80 = arith.constant 0 : index
    %c0_81 = arith.constant 0 : index
    %84 = vector.load %arg9[%c3_79, %c0_80, %c0_81] : memref<4x8x8xf32, #tpu.memory_space<vmem>>, vector<1x8x8xf32>
    %85 = vector.shape_cast %84 : vector<1x8x8xf32> to vector<8x8xf32>
    %86 = vector.shape_cast %83 : vector<8x8xf32> to vector<1x8x8xf32>
    tpu.vector_store %arg9[%c3_79, %c0_80, %c0_81], %86 {strides = array<i32>} : memref<4x8x8xf32, #tpu.memory_space<vmem>>, vector<1x8x8xf32>,
    %c0_i32_82 = arith.constant 0 : i32
    %87 = arith.cmpi eq, %arg1, %c0_i32_82 : i32
    %88 = arith.extui %87 : i1 to i32
    %c0_i32_83 = arith.constant 0 : i32
    %89 = arith.cmpi ne, %88, %c0_i32_83 : i32
    scf.if %89 {
      %c0_84 = arith.constant 0 : index
      %c0_85 = arith.constant 0 : index
      %c0_86 = arith.constant 0 : index
      %90 = vector.load %arg8[%c0_84, %c0_85, %c0_86] : memref<4x8x8xf32, #tpu.memory_space<vmem>>, vector<4x8x8xf32>
      %c0_87 = arith.constant 0 : index
      %c0_88 = arith.constant 0 : index
      %c0_89 = arith.constant 0 : index
      %c0_90 = arith.constant 0 : index
      %91 = vector.load %arg6[%c0_87, %c0_88, %c0_89, %c0_90] : memref<1x4x8x8xf32, #tpu.memory_space<vmem>>, vector<1x4x8x8xf32>
      %92 = vector.shape_cast %91 : vector<1x4x8x8xf32> to vector<4x8x8xf32>
      %93 = vector.shape_cast %90 : vector<4x8x8xf32> to vector<1x4x8x8xf32>
      tpu.vector_store %arg6[%c0_87, %c0_88, %c0_89, %c0_90], %93 {strides = array<i32>} : memref<1x4x8x8xf32, #tpu.memory_space<vmem>>, vector<1x4x8x8xf32>,
      %c0_91 = arith.constant 0 : index
      %c0_92 = arith.constant 0 : index
      %c0_93 = arith.constant 0 : index
      %94 = vector.load %arg9[%c0_91, %c0_92, %c0_93] : memref<4x8x8xf32, #tpu.memory_space<vmem>>, vector<4x8x8xf32>
      %c0_94 = arith.constant 0 : index
      %c0_95 = arith.constant 0 : index
      %c0_96 = arith.constant 0 : index
      %c0_97 = arith.constant 0 : index
      %95 = vector.load %arg7[%c0_94, %c0_95, %c0_96, %c0_97] : memref<1x4x8x8xf32, #tpu.memory_space<vmem>>, vector<1x4x8x8xf32>
      %96 = vector.shape_cast %95 : vector<1x4x8x8xf32> to vector<4x8x8xf32>
      %97 = vector.shape_cast %94 : vector<4x8x8xf32> to vector<1x4x8x8xf32>
      tpu.vector_store %arg7[%c0_94, %c0_95, %c0_96, %c0_97], %97 {strides = array<i32>} : memref<1x4x8x8xf32, #tpu.memory_space<vmem>>, vector<1x4x8x8xf32>,
    } else {
    }
    return
  }
  func.func @transform_0(%arg0: i32, %arg1: i32) -> (i32, i32, i32) {
    %c0_i32 = arith.constant 0 : i32
    %c0_i32_0 = arith.constant 0 : i32
    return %arg0, %arg1, %c0_i32 : i32, i32, i32
  }
  func.func @transform_1(%arg0: i32, %arg1: i32) -> (i32, i32) {
    %c0_i32 = arith.constant 0 : i32
    %c0_i32_0 = arith.constant 0 : i32
    %c0_i32_1 = arith.constant 0 : i32
    return %c0_i32, %c0_i32_0 : i32, i32
  }
  func.func @transform_2(%arg0: i32, %arg1: i32) -> (i32, i32, i32) {
    %c0_i32 = arith.constant 0 : i32
    %c0_i32_0 = arith.constant 0 : i32
    %c0_i32_1 = arith.constant 0 : i32
    return %c0_i32, %c0_i32_0, %arg1 : i32, i32, i32
  }
  func.func @transform_3(%arg0: i32, %arg1: i32) -> (i32, i32, i32) {
    %c0_i32 = arith.constant 0 : i32
    %c0_i32_0 = arith.constant 0 : i32
    %c0_i32_1 = arith.constant 0 : i32
    return %c0_i32, %c0_i32_0, %arg1 : i32, i32, i32
  }
  func.func @transform_4(%arg0: i32, %arg1: i32) -> (i32, i32, i32, i32) {
    %c0_i32 = arith.constant 0 : i32
    %c0_i32_0 = arith.constant 0 : i32
    %c0_i32_1 = arith.constant 0 : i32
    %c0_i32_2 = arith.constant 0 : i32
    return %arg0, %c0_i32, %c0_i32_0, %c0_i32_1 : i32, i32, i32, i32
  }
  func.func @transform_5(%arg0: i32, %arg1: i32) -> (i32, i32, i32, i32) {
    %c0_i32 = arith.constant 0 : i32
    %c0_i32_0 = arith.constant 0 : i32
    %c0_i32_1 = arith.constant 0 : i32
    %c0_i32_2 = arith.constant 0 : i32
    return %arg0, %c0_i32, %c0_i32_0, %c0_i32_1 : i32, i32, i32, i32
  }
}

</mosaic_0001>

<llo_original>
// kernel: tpu_custom_call.1
$region0: #{tpu_custom_call.1}
  #allocation0 [shape = 'u32[]', space=smem, size = 0x4, offset = 0x4, fixed_abs, tag = 'smem constant byte address 0x4 - core index']
  #allocation1 [shape = 'u32[144,128]{1,0:T(1,128)}', space=vmem, size = 0x12000, scoped, tag = 'internal scratch']
  #allocation2 [shape = 'f32[4,8,8]{2,1,0:T(8,128)}', space=vmem, size = 0x4000, scoped, tag = 'scratch operand']
  #allocation3 [shape = 'f32[4,8,8]{2,1,0:T(8,128)}', space=vmem, size = 0x4000, scoped, tag = 'scratch operand']
  %s0 = inlined_call_operand.hbm [shape: f32[2,16,32], index: 0, kind: input, shape index: {}]
  %s1 = inlined_call_operand.hbm [shape: f32[32,64], index: 1, kind: input, shape index: {}]
  %s2 = inlined_call_operand.hbm [shape: f32[4,8,16], index: 2, kind: input, shape index: {}]
  %s3 = inlined_call_operand.hbm [shape: f32[4,8,16], index: 3, kind: input, shape index: {}]
  %s4 = inlined_call_operand.hbm [shape: f32[2,4,8,8], index: 4, kind: output, shape index: {0}]
  %s5 = inlined_call_operand.hbm [shape: f32[2,4,8,8], index: 5, kind: output, shape index: {1}]
  %6 = xla_tuple %s4, %s5
  %s7 = sld [smem:[#allocation0]]
  $region81: #{tpu_custom_call.1} parent=0
    _
  %s9 = ssub.s32 1, %s7
  %s10 = scalar_select 0, %s9, %s7
  $region1: #{tpu_custom_call.1} parent=0
    #allocation4 [shape = 'u8[16384]{0}', space=vmem, size = 0x4000, scoped, tag = 'input window, operand 0']
    #allocation5 [shape = 's32[2]{0}', space=sflag, size = 0x8, scoped, tag = 'scoped memory for tpu_custom_call.1']
    #allocation6 [shape = 's32[2]{0}', space=sflag, size = 0x8, scoped, tag = 'scoped memory for tpu_custom_call.1']
    #allocation7 [shape = 'u8[16384]{0}', space=vmem, size = 0x4000, scoped, tag = 'input window, operand 1, single buffered']
    #allocation8 [shape = 's32[1]{0}', space=sflag, size = 0x4, scoped, tag = 'scoped memory for tpu_custom_call.1']
    #allocation9 [shape = 'u8[16384]{0}', space=vmem, size = 0x4000, scoped, tag = 'input window, operand 2, single buffered']
    #allocation10 [shape = 'u8[16384]{0}', space=vmem, size = 0x4000, scoped, tag = 'input window, operand 3, single buffered']
    #allocation11 [shape = 's32[1]{0}', space=sflag, size = 0x4, scoped, tag = 'scoped memory for tpu_custom_call.1']
    #allocation12 [shape = 'u8[32768]{0}', space=vmem, size = 0x8000, scoped, tag = 'output window, operand 0']
    #allocation13 [shape = 'u8[32768]{0}', space=vmem, size = 0x8000, scoped, tag = 'output window, operand 1']
    #allocation14 [shape = 's32[2]{0}', space=sflag, size = 0x8, scoped, tag = 'scoped memory for tpu_custom_call.1']
    %11 = vsyncpa [#allocation5], 0
    %s12 = scalar_lea.sflag [#allocation5], 1
    %13 = vsyncpa %s12, 0
    %14 = vsyncpa [#allocation8], 0
    %15 = vsyncpa [#allocation11], 0
    %16 = vsyncpa [#allocation6], 0
    %s17 = scalar_lea.sflag [#allocation6], 1
    %18 = vsyncpa %s17, 0
    %19 = vsyncpa [#allocation14], 0
    %s20 = scalar_lea.sflag [#allocation14], 1
    %21 = vsyncpa %s20, 0
    loop: start=0, step=1, limit=4
    $region2: #{tpu_custom_call.1} parent=1 // loop_pre_header
      _
    $region3: #{tpu_custom_call.1} parent=1 // loop_header
      %s23 = sphi 0, %s27
      %p24 = scmp.ge.s32.totalorder %s23, 4
      %s30 = sphi 0, %s42
      %s31 = sphi 0, %s38
      %s32 = sphi 0, %s30
      %s33 = sphi 0, %s31
      %s34 = sphi 0, %s32
      %s35 = sphi 0, %s33
      %s47 = sphi 0, %s49
      %s50 = sphi 0, %s47
      %s51 = sphi 0, %s50
      %s67 = sphi 0, %s51
      %s71 = sphi 0, %s71
      %s73 = sphi 0, %s71
      %s74 = sphi 0, %s73
      %s88 = sphi 0, %s74
      %s94 = sphi 0, %s96
      %s97 = sphi 0, %s94
      %s98 = sphi 0, %s97
      %s114 = sphi 0, %s98
      %s120 = sphi 0, %s122
      %s123 = sphi 0, %s120
      %s124 = sphi 0, %s123
      %s140 = sphi 0, %s124
      %s146 = sphi 0, %s148
      %s149 = sphi 0, %s146
      %s150 = sphi 0, %s149
      %s166 = sphi 0, %s150
      %s172 = sphi 0, %s174
      %s175 = sphi 0, %s172
      %s176 = sphi 0, %s175
      %s192 = sphi 0, %s176
    $region4: #{tpu_custom_call.1} parent=1 // loop_header_branch
      %26 = sbr.rel (%p24) target = $region8
    $region5: #{tpu_custom_call.1} parent=1 // loop_body
      %s28 = ssub.s32 %s23, 1
      %s29 = ssub.s32 %s23, 2
      %s36 = sadd.s32 1, %s31
      %p37 = scmp.ge.s32.totalorder %s36, 1
      %s38 = scalar_select %p37, 0, %s36
      %s39 = sadd.s32 1, %s30
      %s40 = scalar_select %p37, %s39, %s30
      %p41 = scmp.ge.s32.totalorder %s40, 2
      %s42 = scalar_select %p41, 0, %s40
      %s43 = ssub.s32 %s30, %s42
      %s44 = ssub.s32 %s31, %s38
      %s45 = sor.u32 %s43, %s44
      %p46 = scmp.eq.s32.totalorder %s45, 0
      %s48 = sadd.s32 %s47, 1
      %s49 = scalar_select %p46, %s47, %s48
      %p52 = pneg %p46
      %p53 = scmp.eq.s32.totalorder %s23, 1
      %p54 = por %p52, %p53
      %p55 = scmp.ne.s32.totalorder %s47, %s50
      %p56 = scmp.eq.s32.totalorder %s23, 0
      %p57 = por %p55, %p56
      %p58 = scmp.ne.s32.totalorder %s47, %s50
      %p59 = scmp.eq.s32.totalorder %s28, 1
      %p60 = por %p58, %p59
      %p61 = scmp.ne.s32.totalorder %s50, %s51
      %p62 = scmp.eq.s32.totalorder %s28, 0
      %p63 = por %p61, %p62
      %p64 = scmp.ne.s32.totalorder %s50, %s51
      %p65 = scmp.eq.s32.totalorder %s29, 1
      %p66 = por %p64, %p65
      %p68 = scmp.ne.s32.totalorder %s51, %s67
      %p69 = scmp.eq.s32.totalorder %s29, 0
      %p70 = por %p68, %p69
      %s72 = sadd.s32 %s71, 1
      %p75 = scmp.eq.s32.totalorder %s23, 1
      %p76 = scmp.ne.s32.totalorder %s71, %s73
      %p77 = scmp.eq.s32.totalorder %s23, 0
      %p78 = por %p76, %p77
      %p79 = scmp.ne.s32.totalorder %s71, %s73
      %p80 = scmp.eq.s32.totalorder %s28, 1
      %p81 = por %p79, %p80
      %p82 = scmp.ne.s32.totalorder %s73, %s74
      %p83 = scmp.eq.s32.totalorder %s28, 0
      %p84 = por %p82, %p83
      %p85 = scmp.ne.s32.totalorder %s73, %s74
      %p86 = scmp.eq.s32.totalorder %s29, 1
      %p87 = por %p85, %p86
      %p89 = scmp.ne.s32.totalorder %s74, %s88
      %p90 = scmp.eq.s32.totalorder %s29, 0
      %p91 = por %p89, %p90
      %s92 = ssub.s32 %s31, %s38
      %p93 = scmp.eq.s32.totalorder %s92, 0
      %s95 = sadd.s32 %s94, 1
      %s96 = scalar_select %p93, %s94, %s95
      %p99 = pneg %p93
      %p100 = scmp.eq.s32.totalorder %s23, 1
      %p101 = por %p99, %p100
      %p102 = scmp.ne.s32.totalorder %s94, %s97
      %p103 = scmp.eq.s32.totalorder %s23, 0
      %p104 = por %p102, %p103
      %p105 = scmp.ne.s32.totalorder %s94, %s97
      %p106 = scmp.eq.s32.totalorder %s28, 1
      %p107 = por %p105, %p106
      %p108 = scmp.ne.s32.totalorder %s97, %s98
      %p109 = scmp.eq.s32.totalorder %s28, 0
      %p110 = por %p108, %p109
      %p111 = scmp.ne.s32.totalorder %s97, %s98
      %p112 = scmp.eq.s32.totalorder %s29, 1
      %p113 = por %p111, %p112
      %p115 = scmp.ne.s32.totalorder %s98, %s114
      %p116 = scmp.eq.s32.totalorder %s29, 0
      %p117 = por %p115, %p116
      %s118 = ssub.s32 %s31, %s38
      %p119 = scmp.eq.s32.totalorder %s118, 0
      %s121 = sadd.s32 %s120, 1
      %s122 = scalar_select %p119, %s120, %s121
      %p125 = pneg %p119
      %p126 = scmp.eq.s32.totalorder %s23, 1
      %p127 = por %p125, %p126
      %p128 = scmp.ne.s32.totalorder %s120, %s123
      %p129 = scmp.eq.s32.totalorder %s23, 0
      %p130 = por %p128, %p129
      %p131 = scmp.ne.s32.totalorder %s120, %s123
      %p132 = scmp.eq.s32.totalorder %s28, 1
      %p133 = por %p131, %p132
      %p134 = scmp.ne.s32.totalorder %s123, %s124
      %p135 = scmp.eq.s32.totalorder %s28, 0
      %p136 = por %p134, %p135
      %p137 = scmp.ne.s32.totalorder %s123, %s124
      %p138 = scmp.eq.s32.totalorder %s29, 1
      %p139 = por %p137, %p138
      %p141 = scmp.ne.s32.totalorder %s124, %s140
      %p142 = scmp.eq.s32.totalorder %s29, 0
      %p143 = por %p141, %p142
      %s144 = ssub.s32 %s30, %s42
      %p145 = scmp.eq.s32.totalorder %s144, 0
      %s147 = sadd.s32 %s146, 1
      %s148 = scalar_select %p145, %s146, %s147
      %p151 = pneg %p145
      %p152 = scmp.eq.s32.totalorder %s23, 1
      %p153 = por %p151, %p152
      %p154 = scmp.ne.s32.totalorder %s146, %s149
      %p155 = scmp.eq.s32.totalorder %s23, 0
      %p156 = por %p154, %p155
      %p157 = scmp.ne.s32.totalorder %s146, %s149
      %p158 = scmp.eq.s32.totalorder %s28, 1
      %p159 = por %p157, %p158
      %p160 = scmp.ne.s32.totalorder %s149, %s150
      %p161 = scmp.eq.s32.totalorder %s28, 0
      %p162 = por %p160, %p161
      %p163 = scmp.ne.s32.totalorder %s149, %s150
      %p164 = scmp.eq.s32.totalorder %s29, 1
      %p165 = por %p163, %p164
      %p167 = scmp.ne.s32.totalorder %s150, %s166
      %p168 = scmp.eq.s32.totalorder %s29, 0
      %p169 = por %p167, %p168
      %s170 = ssub.s32 %s30, %s42
      %p171 = scmp.eq.s32.totalorder %s170, 0
      %s173 = sadd.s32 %s172, 1
      %s174 = scalar_select %p171, %s172, %s173
      %p177 = pneg %p171
      %p178 = scmp.eq.s32.totalorder %s23, 1
      %p179 = por %p177, %p178
      %p180 = scmp.ne.s32.totalorder %s172, %s175
      %p181 = scmp.eq.s32.totalorder %s23, 0
      %p182 = por %p180, %p181
      %p183 = scmp.ne.s32.totalorder %s172, %s175
      %p184 = scmp.eq.s32.totalorder %s28, 1
      %p185 = por %p183, %p184
      %p186 = scmp.ne.s32.totalorder %s175, %s176
      %p187 = scmp.eq.s32.totalorder %s28, 0
      %p188 = por %p186, %p187
      %p189 = scmp.ne.s32.totalorder %s175, %s176
      %p190 = scmp.eq.s32.totalorder %s29, 1
      %p191 = por %p189, %p190
      %p193 = scmp.ne.s32.totalorder %s176, %s192
      %p194 = scmp.eq.s32.totalorder %s29, 0
      %p195 = por %p193, %p194
      %p196 = scmp.le.s32.totalorder 1, %s23
      %p197 = scmp.lt.s32.totalorder %s23, 3
      %p198 = pnand %p196, %p197
      %p199 = pneg %p198
      // Predicated region
      $region9: #{tpu_custom_call.1} parent=5 // pred_check
        _
      $region10: #{tpu_custom_call.1} parent=5 // pred_check_branch
        %201 = sbr.rel (%p198) target = $region12
      $region11: #{tpu_custom_call.1} parent=5 // pred_region
        %s202 = ssub.s32 %s23, 1
        // Predicated region
        $region13: #{tpu_custom_call.1} parent=11 // pred_check
          %p203 = pneg %p84
        $region14: #{tpu_custom_call.1} parent=11 // pred_check_branch
          %205 = sbr.rel (%p203) target = $region16
        $region15: #{tpu_custom_call.1} parent=11 // pred_region
          %s207 = ssub.s32 512, 512
          %208 = vsyncadd [#allocation8], %s207
          %s209 = sshll.u32 [#allocation7], 4
          %s210 = int_to_ptr.vmem [resolvable:$true] %s209
          %215 = dma.hbm_to_vmem [thread:$0]  %s1, 512, %s210, [#allocation8], 128, 128, 8
        $region16: #{tpu_custom_call.1} parent=11 // pred_fallthru
          _
        // Predicated region
        $region17: #{tpu_custom_call.1} parent=11 // pred_check
          %p216 = pneg %p110
        $region18: #{tpu_custom_call.1} parent=11 // pred_check_branch
          %218 = sbr.rel (%p216) target = $region20
        $region19: #{tpu_custom_call.1} parent=11 // pred_region
          %s220 = ssub.s32 512, 512
          %221 = vsyncadd [#allocation8], %s220
          %s222 = smul.addr %s33, 128
          %s223 = scalar_lea.hbm %s2, %s222
          %s224 = sshll.u32 [#allocation9], 4
          %s225 = int_to_ptr.vmem [resolvable:$true] %s224
          %230 = dma.hbm_to_vmem [thread:$0]  %s223, 512, %s225, [#allocation8], 128, 128, 8
        $region20: #{tpu_custom_call.1} parent=11 // pred_fallthru
          _
        // Predicated region
        $region21: #{tpu_custom_call.1} parent=11 // pred_check
          %p231 = pneg %p136
        $region22: #{tpu_custom_call.1} parent=11 // pred_check_branch
          %233 = sbr.rel (%p231) target = $region24
        $region23: #{tpu_custom_call.1} parent=11 // pred_region
          %s235 = ssub.s32 512, 512
          %236 = vsyncadd [#allocation11], %s235
          %s237 = smul.addr %s33, 128
          %s238 = scalar_lea.hbm %s3, %s237
          %s239 = sshll.u32 [#allocation10], 4
          %s240 = int_to_ptr.vmem [resolvable:$true] %s239
          %245 = dma.hbm_to_vmem [thread:$0]  %s238, 512, %s240, [#allocation11], 128, 128, 8
        $region24: #{tpu_custom_call.1} parent=11 // pred_fallthru
          _
      $region12: #{tpu_custom_call.1} parent=5 // pred_fallthru
        _
      %p246 = scmp.lt.s32.totalorder %s23, 2
      // Predicated region
      $region25: #{tpu_custom_call.1} parent=5 // pred_check
        %p247 = pneg %p246
      $region26: #{tpu_custom_call.1} parent=5 // pred_check_branch
        %249 = sbr.rel (%p247) target = $region28
      $region27: #{tpu_custom_call.1} parent=5 // pred_region
        // Predicated region
        $region29: #{tpu_custom_call.1} parent=27 // pred_check
          %p250 = pneg %p57
        $region30: #{tpu_custom_call.1} parent=27 // pred_check_branch
          %252 = sbr.rel (%p250) target = $region32
        $region31: #{tpu_custom_call.1} parent=27 // pred_region
          %s253 = sand.u32 %s47, 1
          %s254 = scalar_lea.sflag [#allocation5], %s253
          %s255 = sand.u32 %s47, 1
          %s256 = smul.addr %s255, 16
          %s257 = scalar_lea.vmem [#allocation4], %s256
          %s258 = smul.u32 2, %s31
          %s260 = ssub.s32 256, 256
          %261 = vsyncadd %s254, %s260
          %s262 = smul.addr %s30, 2
          %s263 = sadd.s32 %s258, %s262
          %s264 = smul.addr %s263, 128
          %s265 = scalar_lea.hbm %s0, %s264
          %s266 = sshll.u32 %s257, 4
          %s267 = int_to_ptr.vmem [resolvable:$true] %s266
          %272 = dma.hbm_to_vmem [thread:$0]  %s265, 256, %s267, %s254, 128, 128, 8
        $region32: #{tpu_custom_call.1} parent=27 // pred_fallthru
          _
      $region28: #{tpu_custom_call.1} parent=5 // pred_fallthru
        _
      %p273 = scmp.le.s32.totalorder 1, %s23
      %p274 = scmp.lt.s32.totalorder %s23, 3
      %p275 = pnand %p273, %p274
      %p276 = pneg %p275
      // Predicated region
      $region33: #{tpu_custom_call.1} parent=5 // pred_check
        _
      $region34: #{tpu_custom_call.1} parent=5 // pred_check_branch
        %278 = sbr.rel (%p275) target = $region36
      $region35: #{tpu_custom_call.1} parent=5 // pred_region
        %s279 = ssub.s32 %s23, 1
        %s280 = sand.u32 %s50, 1
        %s281 = scalar_lea.sflag [#allocation5], %s280
        %s282 = sand.u32 %s50, 1
        %s283 = smul.addr %s282, 16
        %s284 = scalar_lea.vmem [#allocation4], %s283
        // Predicated region
        $region37: #{tpu_custom_call.1} parent=35 // pred_check
          %p285 = pneg %p63
        $region38: #{tpu_custom_call.1} parent=35 // pred_check_branch
          %287 = sbr.rel (%p285) target = $region40
        $region39: #{tpu_custom_call.1} parent=35 // pred_region
          %288 = dma.done %s281, 256
        $region40: #{tpu_custom_call.1} parent=35 // pred_fallthru
          _
        // Predicated region
        $region41: #{tpu_custom_call.1} parent=35 // pred_check
          %p289 = pneg %p84
        $region42: #{tpu_custom_call.1} parent=35 // pred_check_branch
          %291 = sbr.rel (%p289) target = $region44
        $region43: #{tpu_custom_call.1} parent=35 // pred_region
          %292 = dma.done [#allocation8], 512
        $region44: #{tpu_custom_call.1} parent=35 // pred_fallthru
          _
        // Predicated region
        $region45: #{tpu_custom_call.1} parent=35 // pred_check
          %p293 = pneg %p110
        $region46: #{tpu_custom_call.1} parent=35 // pred_check_branch
          %295 = sbr.rel (%p293) target = $region48
        $region47: #{tpu_custom_call.1} parent=35 // pred_region
          %296 = dma.done [#allocation8], 512
        $region48: #{tpu_custom_call.1} parent=35 // pred_fallthru
          _
        // Predicated region
        $region49: #{tpu_custom_call.1} parent=35 // pred_check
          %p297 = pneg %p136
        $region50: #{tpu_custom_call.1} parent=35 // pred_check_branch
          %299 = sbr.rel (%p297) target = $region52
        $region51: #{tpu_custom_call.1} parent=35 // pred_region
          %300 = dma.done [#allocation11], 512
        $region52: #{tpu_custom_call.1} parent=35 // pred_fallthru
          _
        %s301 = sand.u32 %s50, 1
        %s302 = scalar_lea.sflag [#allocation5], %s301
        %s303 = sand.u32 %s50, 1
        %s304 = smul.addr %s303, 16
        %s305 = scalar_lea.vmem [#allocation4], %s304
        %p306 = pneg %p63
        %p307 = pneg %p60
        %p308 = pneg %p84
        %p309 = pneg %p81
        %p310 = pneg %p110
        %p311 = pneg %p107
        %p312 = pneg %p136
        %p313 = pneg %p133
        %p314 = pneg %p162
        %p315 = pneg %p159
        %s316 = sand.u32 %s149, 1
        %s317 = scalar_lea.sflag [#allocation6], %s316
        %s318 = sand.u32 %s149, 1
        %s319 = smul.addr %s318, 32
        %s320 = scalar_lea.vmem [#allocation12], %s319
        %p321 = pneg %p188
        %p322 = pneg %p185
        %s323 = sand.u32 %s175, 1
        %s324 = scalar_lea.sflag [#allocation14], %s323
        %s325 = sand.u32 %s175, 1
        %s326 = smul.addr %s325, 32
        %s327 = scalar_lea.vmem [#allocation13], %s326
        %s328 = smul.u32 2, %s33
        %p329 = scmp.eq.s32.totalorder %s33, 0
        // Predicated region
        $region53: #{tpu_custom_call.1} parent=35 // pred_check
          %p330 = pneg %p329
        $region54: #{tpu_custom_call.1} parent=35 // pred_check_branch
          %332 = sbr.rel (%p330) target = $region56
        $region55: #{tpu_custom_call.1} parent=35 // pred_region
          %vm333 = vcmask 64512
          %334 = vst.msk [vmem:[#allocation2] sm:$0xff] %vm333, 0.0
          %335 = vst.msk [vmem:[#allocation2 + $0x8] sm:$0xff] %vm333, 0.0
          %336 = vst.msk [vmem:[#allocation2 + $0x10] sm:$0xff] %vm333, 0.0
          %337 = vst.msk [vmem:[#allocation2 + $0x18] sm:$0xff] %vm333, 0.0
          %338 = vst.msk [vmem:[#allocation3] sm:$0xff] %vm333, 0.0
          %339 = vst.msk [vmem:[#allocation3 + $0x8] sm:$0xff] %vm333, 0.0
          %340 = vst.msk [vmem:[#allocation3 + $0x10] sm:$0xff] %vm333, 0.0
          %341 = vst.msk [vmem:[#allocation3 + $0x18] sm:$0xff] %vm333, 0.0
        $region56: #{tpu_custom_call.1} parent=35 // pred_fallthru
          _
        %v342 = vld [vmem:[%s284] sm:$0xff]
        %v343 = vld [vmem:[%s284 + $0x8] sm:$0xff]
        %v344 = vld [vmem:[#allocation7] sm:$0xff]
        %v345 = vld [vmem:[#allocation7 + $0x8] sm:$0xff]
        %v346 = vld [vmem:[#allocation7 + $0x10] sm:$0xff]
        %v347 = vld [vmem:[#allocation7 + $0x18] sm:$0xff]
        %vm348 = vcmask 261120
        %v350 = vsel %vm348, %v342, 0
        %v353 = vsel %vm348, %v343, 0
        %355 = vmatprep.subr.mxu0 0.0
        %356 = vmatpush1.msra.mxu0 %v344
        %357 = vmatprep.subr.mxu0 0.0
        %358 = vmatpush1.msra.mxu0 %v345
        %359 = vmatprep.subr.mxu0 0.0
        %360 = vmatpush1.msra.mxu0 %v346
        %361 = vmatprep.subr.mxu0 0.0
        %362 = vmatpush1.msra.mxu0 %v347
        %363 = vmatprep.subr.mxu0 0.0
        %364 = vmatpush1.msra.mxu0 0.0
        %365 = vmatprep.subr.mxu0 0.0
        %366 = vmatpush1.msra.mxu0 0.0
        %367 = vmatprep.subr.mxu0 0.0
        %368 = vmatpush1.msra.mxu0 0.0
        %369 = vmatprep.subr.mxu0 0.0
        %370 = vmatpush1.msra.mxu0 0.0
        %371 = vmatprep.subr.mxu0 0.0
        %372 = vmatpush1.msra.mxu0 0.0
        %373 = vmatprep.subr.mxu0 0.0
        %374 = vmatpush1.msra.mxu0 0.0
        %375 = vmatprep.subr.mxu0 0.0
        %376 = vmatpush1.msra.mxu0 0.0
        %377 = vmatprep.subr.mxu0 0.0
        %378 = vmatpush1.msra.mxu0 0.0
        %379 = vmatprep.subr.mxu0 0.0
        %380 = vmatpush1.msra.mxu0 0.0
        %381 = vmatprep.subr.mxu0 0.0
        %382 = vmatpush1.msra.mxu0 0.0
        %383 = vmatprep.subr.mxu0 0.0
        %384 = vmatpush1.msra.mxu0 0.0
        %385 = vmatprep.subr.mxu0 0.0
        %386 = vmatpush1.msra.mxu0 0.0
        %387 = vmatprep.subr.mxu0 0.0
        %388 = vmatpush1.msra.mxu0 0.0
        %389 = vmatprep.subr.mxu0 0.0
        %390 = vmatpush1.msra.mxu0 0.0
        %391 = vmatprep.subr.mxu0 0.0
        %392 = vmatpush1.msra.mxu0 0.0
        %393 = vmatprep.subr.mxu0 0.0
        %394 = vmatpush1.msra.mxu0 0.0
        %395 = vmatprep.subr.mxu0 0.0
        %396 = vmatpush1.msra.mxu0 0.0
        %397 = vmatprep.subr.mxu0 0.0
        %398 = vmatpush1.msra.mxu0 0.0
        %399 = vmatprep.subr.mxu0 0.0
        %400 = vmatpush1.msra.mxu0 0.0
        %401 = vmatprep.subr.mxu0 0.0
        %402 = vmatpush1.msra.mxu0 0.0
        %403 = vmatprep.subr.mxu0 0.0
        %404 = vmatpush1.msra.mxu0 0.0
        %405 = vmatprep.subr.mxu0 0.0
        %406 = vmatpush1.msra.mxu0 0.0
        %407 = vmatprep.subr.mxu0 0.0
        %408 = vmatpush1.msra.mxu0 0.0
        %409 = vmatprep.subr.mxu0 0.0
        %410 = vmatpush1.msra.mxu0 0.0
        %411 = vmatprep.subr.mxu0 0.0
        %412 = vmatpush1.msra.mxu0 0.0
        %413 = vmatprep.subr.mxu0 0.0
        %414 = vmatpush1.msra.mxu0 0.0
        %415 = vmatprep.subr.mxu0 0.0
        %416 = vmatpush1.msra.mxu0 0.0
        %417 = vmatprep.subr.mxu0 0.0
        %418 = vmatpush1.msra.mxu0 0.0
        %419 = vmatprep.mubr.f32.mxu0 0.0
        %420 = vmatmul.mubr.f32.gmra.mrb[0].mxu0 %v350
        %v421 = vpop.f32.mrb[0].mxu0
        %v422 = vadd.f32 0.0, %v421
        %v423 = vpop.f32.mrb[0].mxu0
        %424 = vmatprep.mubr.f32.mxu0 0.0
        %425 = vmatmul.mubr.f32.gmra.mrb[0].mxu0 %v353
        %v426 = vpop.f32.mrb[0].mxu0
        %v427 = vadd.f32 0.0, %v426
        %v428 = vpop.f32.mrb[0].mxu0
        %429 = vdwg.mxu0
        %v430 = vld [vmem:[#allocation2] sm:$0xff]
        %v431 = vld [vmem:[#allocation9] sm:$0xff]
        %vm432 = vcmask 130048
        %v434 = vsel %vm432, %v431, 0
        %436 = vmatprep.subr.mxu0 0.0
        %437 = vmatpush1.msra.mxu0 %v422
        %438 = vmatprep.subr.mxu0 0.0
        %439 = vmatpush1.msra.mxu0 %v427
        %440 = vmatprep.subr.mxu0 0.0
        %441 = vmatpush1.msra.mxu0 0.0
        %442 = vmatprep.subr.mxu0 0.0
        %443 = vmatpush1.msra.mxu0 0.0
        %444 = vmatprep.subr.mxu0 0.0
        %445 = vmatpush1.msra.mxu0 0.0
        %446 = vmatprep.subr.mxu0 0.0
        %447 = vmatpush1.msra.mxu0 0.0
        %448 = vmatprep.subr.mxu0 0.0
        %449 = vmatpush1.msra.mxu0 0.0
        %450 = vmatprep.subr.mxu0 0.0
        %451 = vmatpush1.msra.mxu0 0.0
        %452 = vmatprep.subr.mxu0 0.0
        %453 = vmatpush1.msra.mxu0 0.0
        %454 = vmatprep.subr.mxu0 0.0
        %455 = vmatpush1.msra.mxu0 0.0
        %456 = vmatprep.subr.mxu0 0.0
        %457 = vmatpush1.msra.mxu0 0.0
        %458 = vmatprep.subr.mxu0 0.0
        %459 = vmatpush1.msra.mxu0 0.0
        %460 = vmatprep.subr.mxu0 0.0
        %461 = vmatpush1.msra.mxu0 0.0
        %462 = vmatprep.subr.mxu0 0.0
        %463 = vmatpush1.msra.mxu0 0.0
        %464 = vmatprep.subr.mxu0 0.0
        %465 = vmatpush1.msra.mxu0 0.0
        %466 = vmatprep.subr.mxu0 0.0
        %467 = vmatpush1.msra.mxu0 0.0
        %468 = vmatprep.subr.mxu0 0.0
        %469 = vmatpush1.msra.mxu0 0.0
        %470 = vmatprep.subr.mxu0 0.0
        %471 = vmatpush1.msra.mxu0 0.0
        %472 = vmatprep.subr.mxu0 0.0
        %473 = vmatpush1.msra.mxu0 0.0
        %474 = vmatprep.subr.mxu0 0.0
        %475 = vmatpush1.msra.mxu0 0.0
        %476 = vmatprep.subr.mxu0 0.0
        %477 = vmatpush1.msra.mxu0 0.0
        %478 = vmatprep.subr.mxu0 0.0
        %479 = vmatpush1.msra.mxu0 0.0
        %480 = vmatprep.subr.mxu0 0.0
        %481 = vmatpush1.msra.mxu0 0.0
        %482 = vmatprep.subr.mxu0 0.0
        %483 = vmatpush1.msra.mxu0 0.0
        %484 = vmatprep.subr.mxu0 0.0
        %485 = vmatpush1.msra.mxu0 0.0
        %486 = vmatprep.subr.mxu0 0.0
        %487 = vmatpush1.msra.mxu0 0.0
        %488 = vmatprep.subr.mxu0 0.0
        %489 = vmatpush1.msra.mxu0 0.0
        %490 = vmatprep.subr.mxu0 0.0
        %491 = vmatpush1.msra.mxu0 0.0
        %492 = vmatprep.subr.mxu0 0.0
        %493 = vmatpush1.msra.mxu0 0.0
        %494 = vmatprep.subr.mxu0 0.0
        %495 = vmatpush1.msra.mxu0 0.0
        %496 = vmatprep.subr.mxu0 0.0
        %497 = vmatpush1.msra.mxu0 0.0
        %498 = vmatprep.subr.mxu0 0.0
        %499 = vmatpush1.msra.mxu0 0.0
        %500 = vmatprep.mubr.f32.mxu0 0.0
        %501 = vmatmul.mubr.f32.gmra.mrb[0].mxu0 %v434
        %v502 = vpop.f32.mrb[0].mxu0
        %v503 = vadd.f32 0.0, %v502
        %v504 = vpop.f32.mrb[0].mxu0
        %505 = vdwg.mxu0
        %v506 = vadd.f32 %v430, %v503
        %vm507 = vcmask 64512
        %508 = vst.msk [vmem:[#allocation2] sm:$0xff] %vm507, %v506
        %v509 = vld [vmem:[#allocation3] sm:$0xff]
        %v510 = vld [vmem:[#allocation10] sm:$0xff]
        %513 = vrot.lane.b32.xlu0 %v422, 96
        %v514 = vpop.permute.xlu0 %513
        %515 = vrot.lane.b32.xlu0 %v427, 96
        %v516 = vpop.permute.xlu0 %515
        %v520 = vsel %vm432, %v510, 0
        %522 = vmatprep.subr.mxu0 0.0
        %523 = vmatpush1.msra.mxu0 %v514
        %524 = vmatprep.subr.mxu0 0.0
        %525 = vmatpush1.msra.mxu0 %v516
        %526 = vmatprep.subr.mxu0 0.0
        %527 = vmatpush1.msra.mxu0 0.0
        %528 = vmatprep.subr.mxu0 0.0
        %529 = vmatpush1.msra.mxu0 0.0
        %530 = vmatprep.subr.mxu0 0.0
        %531 = vmatpush1.msra.mxu0 0.0
        %532 = vmatprep.subr.mxu0 0.0
        %533 = vmatpush1.msra.mxu0 0.0
        %534 = vmatprep.subr.mxu0 0.0
        %535 = vmatpush1.msra.mxu0 0.0
        %536 = vmatprep.subr.mxu0 0.0
        %537 = vmatpush1.msra.mxu0 0.0
        %538 = vmatprep.subr.mxu0 0.0
        %539 = vmatpush1.msra.mxu0 0.0
        %540 = vmatprep.subr.mxu0 0.0
        %541 = vmatpush1.msra.mxu0 0.0
        %542 = vmatprep.subr.mxu0 0.0
        %543 = vmatpush1.msra.mxu0 0.0
        %544 = vmatprep.subr.mxu0 0.0
        %545 = vmatpush1.msra.mxu0 0.0
        %546 = vmatprep.subr.mxu0 0.0
        %547 = vmatpush1.msra.mxu0 0.0
        %548 = vmatprep.subr.mxu0 0.0
        %549 = vmatpush1.msra.mxu0 0.0
        %550 = vmatprep.subr.mxu0 0.0
        %551 = vmatpush1.msra.mxu0 0.0
        %552 = vmatprep.subr.mxu0 0.0
        %553 = vmatpush1.msra.mxu0 0.0
        %554 = vmatprep.subr.mxu0 0.0
        %555 = vmatpush1.msra.mxu0 0.0
        %556 = vmatprep.subr.mxu0 0.0
        %557 = vmatpush1.msra.mxu0 0.0
        %558 = vmatprep.subr.mxu0 0.0
        %559 = vmatpush1.msra.mxu0 0.0
        %560 = vmatprep.subr.mxu0 0.0
        %561 = vmatpush1.msra.mxu0 0.0
        %562 = vmatprep.subr.mxu0 0.0
        %563 = vmatpush1.msra.mxu0 0.0
        %564 = vmatprep.subr.mxu0 0.0
        %565 = vmatpush1.msra.mxu0 0.0
        %566 = vmatprep.subr.mxu0 0.0
        %567 = vmatpush1.msra.mxu0 0.0
        %568 = vmatprep.subr.mxu0 0.0
        %569 = vmatpush1.msra.mxu0 0.0
        %570 = vmatprep.subr.mxu0 0.0
        %571 = vmatpush1.msra.mxu0 0.0
        %572 = vmatprep.subr.mxu0 0.0
        %573 = vmatpush1.msra.mxu0 0.0
        %574 = vmatprep.subr.mxu0 0.0
        %575 = vmatpush1.msra.mxu0 0.0
        %576 = vmatprep.subr.mxu0 0.0
        %577 = vmatpush1.msra.mxu0 0.0
        %578 = vmatprep.subr.mxu0 0.0
        %579 = vmatpush1.msra.mxu0 0.0
        %580 = vmatprep.subr.mxu0 0.0
        %581 = vmatpush1.msra.mxu0 0.0
        %582 = vmatprep.subr.mxu0 0.0
        %583 = vmatpush1.msra.mxu0 0.0
        %584 = vmatprep.subr.mxu0 0.0
        %585 = vmatpush1.msra.mxu0 0.0
        %586 = vmatprep.mubr.f32.mxu0 0.0
        %587 = vmatmul.mubr.f32.gmra.mrb[0].mxu0 %v520
        %v588 = vpop.f32.mrb[0].mxu0
        %v589 = vadd.f32 0.0, %v588
        %v590 = vpop.f32.mrb[0].mxu0
        %591 = vdwg.mxu0
        %v592 = vadd.f32 %v509, %v589
        %593 = vst.msk [vmem:[#allocation3] sm:$0xff] %vm507, %v592
        %s594 = scalar_lea.vmem [#allocation2], 8
        %v595 = vld [vmem:[%s594] sm:$0xff]
        %s596 = scalar_lea.vmem [#allocation9], 8
        %v597 = vld [vmem:[%s596] sm:$0xff]
        %598 = vrot.lane.b32.xlu0 %v422, 120
        %v599 = vpop.permute.xlu0 %598
        %600 = vrot.lane.b32.xlu0 %v427, 120
        %v601 = vpop.permute.xlu0 %600
        %v605 = vsel %vm432, %v597, 0
        %607 = vmatprep.subr.mxu0 0.0
        %608 = vmatpush1.msra.mxu0 %v599
        %609 = vmatprep.subr.mxu0 0.0
        %610 = vmatpush1.msra.mxu0 %v601
        %611 = vmatprep.subr.mxu0 0.0
        %612 = vmatpush1.msra.mxu0 0.0
        %613 = vmatprep.subr.mxu0 0.0
        %614 = vmatpush1.msra.mxu0 0.0
        %615 = vmatprep.subr.mxu0 0.0
        %616 = vmatpush1.msra.mxu0 0.0
        %617 = vmatprep.subr.mxu0 0.0
        %618 = vmatpush1.msra.mxu0 0.0
        %619 = vmatprep.subr.mxu0 0.0
        %620 = vmatpush1.msra.mxu0 0.0
        %621 = vmatprep.subr.mxu0 0.0
        %622 = vmatpush1.msra.mxu0 0.0
        %623 = vmatprep.subr.mxu0 0.0
        %624 = vmatpush1.msra.mxu0 0.0
        %625 = vmatprep.subr.mxu0 0.0
        %626 = vmatpush1.msra.mxu0 0.0
        %627 = vmatprep.subr.mxu0 0.0
        %628 = vmatpush1.msra.mxu0 0.0
        %629 = vmatprep.subr.mxu0 0.0
        %630 = vmatpush1.msra.mxu0 0.0
        %631 = vmatprep.subr.mxu0 0.0
        %632 = vmatpush1.msra.mxu0 0.0
        %633 = vmatprep.subr.mxu0 0.0
        %634 = vmatpush1.msra.mxu0 0.0
        %635 = vmatprep.subr.mxu0 0.0
        %636 = vmatpush1.msra.mxu0 0.0
        %637 = vmatprep.subr.mxu0 0.0
        %638 = vmatpush1.msra.mxu0 0.0
        %639 = vmatprep.subr.mxu0 0.0
        %640 = vmatpush1.msra.mxu0 0.0
        %641 = vmatprep.subr.mxu0 0.0
        %642 = vmatpush1.msra.mxu0 0.0
        %643 = vmatprep.subr.mxu0 0.0
        %644 = vmatpush1.msra.mxu0 0.0
        %645 = vmatprep.subr.mxu0 0.0
        %646 = vmatpush1.msra.mxu0 0.0
        %647 = vmatprep.subr.mxu0 0.0
        %648 = vmatpush1.msra.mxu0 0.0
        %649 = vmatprep.subr.mxu0 0.0
        %650 = vmatpush1.msra.mxu0 0.0
        %651 = vmatprep.subr.mxu0 0.0
        %652 = vmatpush1.msra.mxu0 0.0
        %653 = vmatprep.subr.mxu0 0.0
        %654 = vmatpush1.msra.mxu0 0.0
        %655 = vmatprep.subr.mxu0 0.0
        %656 = vmatpush1.msra.mxu0 0.0
        %657 = vmatprep.subr.mxu0 0.0
        %658 = vmatpush1.msra.mxu0 0.0
        %659 = vmatprep.subr.mxu0 0.0
        %660 = vmatpush1.msra.mxu0 0.0
        %661 = vmatprep.subr.mxu0 0.0
        %662 = vmatpush1.msra.mxu0 0.0
        %663 = vmatprep.subr.mxu0 0.0
        %664 = vmatpush1.msra.mxu0 0.0
        %665 = vmatprep.subr.mxu0 0.0
        %666 = vmatpush1.msra.mxu0 0.0
        %667 = vmatprep.subr.mxu0 0.0
        %668 = vmatpush1.msra.mxu0 0.0
        %669 = vmatprep.subr.mxu0 0.0
        %670 = vmatpush1.msra.mxu0 0.0
        %671 = vmatprep.mubr.f32.mxu0 0.0
        %672 = vmatmul.mubr.f32.gmra.mrb[0].mxu0 %v605
        %v673 = vpop.f32.mrb[0].mxu0
        %v674 = vadd.f32 0.0, %v673
        %v675 = vpop.f32.mrb[0].mxu0
        %676 = vdwg.mxu0
        %v677 = vadd.f32 %v595, %v674
        %678 = vst.msk [vmem:[%s594] sm:$0xff] %vm507, %v677
        %s679 = scalar_lea.vmem [#allocation3], 8
        %v680 = vld [vmem:[%s679] sm:$0xff]
        %s681 = scalar_lea.vmem [#allocation10], 8
        %v682 = vld [vmem:[%s681] sm:$0xff]
        %683 = vrot.lane.b32.xlu0 %v422, 88
        %v684 = vpop.permute.xlu0 %683
        %685 = vrot.lane.b32.xlu0 %v427, 88
        %v686 = vpop.permute.xlu0 %685
        %v690 = vsel %vm432, %v682, 0
        %692 = vmatprep.subr.mxu0 0.0
        %693 = vmatpush1.msra.mxu0 %v684
        %694 = vmatprep.subr.mxu0 0.0
        %695 = vmatpush1.msra.mxu0 %v686
        %696 = vmatprep.subr.mxu0 0.0
        %697 = vmatpush1.msra.mxu0 0.0
        %698 = vmatprep.subr.mxu0 0.0
        %699 = vmatpush1.msra.mxu0 0.0
        %700 = vmatprep.subr.mxu0 0.0
        %701 = vmatpush1.msra.mxu0 0.0
        %702 = vmatprep.subr.mxu0 0.0
        %703 = vmatpush1.msra.mxu0 0.0
        %704 = vmatprep.subr.mxu0 0.0
        %705 = vmatpush1.msra.mxu0 0.0
        %706 = vmatprep.subr.mxu0 0.0
        %707 = vmatpush1.msra.mxu0 0.0
        %708 = vmatprep.subr.mxu0 0.0
        %709 = vmatpush1.msra.mxu0 0.0
        %710 = vmatprep.subr.mxu0 0.0
        %711 = vmatpush1.msra.mxu0 0.0
        %712 = vmatprep.subr.mxu0 0.0
        %713 = vmatpush1.msra.mxu0 0.0
        %714 = vmatprep.subr.mxu0 0.0
        %715 = vmatpush1.msra.mxu0 0.0
        %716 = vmatprep.subr.mxu0 0.0
        %717 = vmatpush1.msra.mxu0 0.0
        %718 = vmatprep.subr.mxu0 0.0
        %719 = vmatpush1.msra.mxu0 0.0
        %720 = vmatprep.subr.mxu0 0.0
        %721 = vmatpush1.msra.mxu0 0.0
        %722 = vmatprep.subr.mxu0 0.0
        %723 = vmatpush1.msra.mxu0 0.0
        %724 = vmatprep.subr.mxu0 0.0
        %725 = vmatpush1.msra.mxu0 0.0
        %726 = vmatprep.subr.mxu0 0.0
        %727 = vmatpush1.msra.mxu0 0.0
        %728 = vmatprep.subr.mxu0 0.0
        %729 = vmatpush1.msra.mxu0 0.0
        %730 = vmatprep.subr.mxu0 0.0
        %731 = vmatpush1.msra.mxu0 0.0
        %732 = vmatprep.subr.mxu0 0.0
        %733 = vmatpush1.msra.mxu0 0.0
        %734 = vmatprep.subr.mxu0 0.0
        %735 = vmatpush1.msra.mxu0 0.0
        %736 = vmatprep.subr.mxu0 0.0
        %737 = vmatpush1.msra.mxu0 0.0
        %738 = vmatprep.subr.mxu0 0.0
        %739 = vmatpush1.msra.mxu0 0.0
        %740 = vmatprep.subr.mxu0 0.0
        %741 = vmatpush1.msra.mxu0 0.0
        %742 = vmatprep.subr.mxu0 0.0
        %743 = vmatpush1.msra.mxu0 0.0
        %744 = vmatprep.subr.mxu0 0.0
        %745 = vmatpush1.msra.mxu0 0.0
        %746 = vmatprep.subr.mxu0 0.0
        %747 = vmatpush1.msra.mxu0 0.0
        %748 = vmatprep.subr.mxu0 0.0
        %749 = vmatpush1.msra.mxu0 0.0
        %750 = vmatprep.subr.mxu0 0.0
        %751 = vmatpush1.msra.mxu0 0.0
        %752 = vmatprep.subr.mxu0 0.0
        %753 = vmatpush1.msra.mxu0 0.0
        %754 = vmatprep.subr.mxu0 0.0
        %755 = vmatpush1.msra.mxu0 0.0
        %756 = vmatprep.mubr.f32.mxu0 0.0
        %757 = vmatmul.mubr.f32.gmra.mrb[0].mxu0 %v690
        %v758 = vpop.f32.mrb[0].mxu0
        %v759 = vadd.f32 0.0, %v758
        %v760 = vpop.f32.mrb[0].mxu0
        %761 = vdwg.mxu0
        %v762 = vadd.f32 %v680, %v759
        %763 = vst.msk [vmem:[%s679] sm:$0xff] %vm507, %v762
        %s764 = scalar_lea.vmem [#allocation2], 16
        %v765 = vld [vmem:[%s764] sm:$0xff]
        %s766 = scalar_lea.vmem [#allocation9], 16
        %v767 = vld [vmem:[%s766] sm:$0xff]
        %768 = vrot.lane.b32.xlu0 %v422, 112
        %v769 = vpop.permute.xlu0 %768
        %770 = vrot.lane.b32.xlu0 %v427, 112
        %v771 = vpop.permute.xlu0 %770
        %v775 = vsel %vm432, %v767, 0
        %777 = vmatprep.subr.mxu0 0.0
        %778 = vmatpush1.msra.mxu0 %v769
        %779 = vmatprep.subr.mxu0 0.0
        %780 = vmatpush1.msra.mxu0 %v771
        %781 = vmatprep.subr.mxu0 0.0
        %782 = vmatpush1.msra.mxu0 0.0
        %783 = vmatprep.subr.mxu0 0.0
        %784 = vmatpush1.msra.mxu0 0.0
        %785 = vmatprep.subr.mxu0 0.0
        %786 = vmatpush1.msra.mxu0 0.0
        %787 = vmatprep.subr.mxu0 0.0
        %788 = vmatpush1.msra.mxu0 0.0
        %789 = vmatprep.subr.mxu0 0.0
        %790 = vmatpush1.msra.mxu0 0.0
        %791 = vmatprep.subr.mxu0 0.0
        %792 = vmatpush1.msra.mxu0 0.0
        %793 = vmatprep.subr.mxu0 0.0
        %794 = vmatpush1.msra.mxu0 0.0
        %795 = vmatprep.subr.mxu0 0.0
        %796 = vmatpush1.msra.mxu0 0.0
        %797 = vmatprep.subr.mxu0 0.0
        %798 = vmatpush1.msra.mxu0 0.0
        %799 = vmatprep.subr.mxu0 0.0
        %800 = vmatpush1.msra.mxu0 0.0
        %801 = vmatprep.subr.mxu0 0.0
        %802 = vmatpush1.msra.mxu0 0.0
        %803 = vmatprep.subr.mxu0 0.0
        %804 = vmatpush1.msra.mxu0 0.0
        %805 = vmatprep.subr.mxu0 0.0
        %806 = vmatpush1.msra.mxu0 0.0
        %807 = vmatprep.subr.mxu0 0.0
        %808 = vmatpush1.msra.mxu0 0.0
        %809 = vmatprep.subr.mxu0 0.0
        %810 = vmatpush1.msra.mxu0 0.0
        %811 = vmatprep.subr.mxu0 0.0
        %812 = vmatpush1.msra.mxu0 0.0
        %813 = vmatprep.subr.mxu0 0.0
        %814 = vmatpush1.msra.mxu0 0.0
        %815 = vmatprep.subr.mxu0 0.0
        %816 = vmatpush1.msra.mxu0 0.0
        %817 = vmatprep.subr.mxu0 0.0
        %818 = vmatpush1.msra.mxu0 0.0
        %819 = vmatprep.subr.mxu0 0.0
        %820 = vmatpush1.msra.mxu0 0.0
        %821 = vmatprep.subr.mxu0 0.0
        %822 = vmatpush1.msra.mxu0 0.0
        %823 = vmatprep.subr.mxu0 0.0
        %824 = vmatpush1.msra.mxu0 0.0
        %825 = vmatprep.subr.mxu0 0.0
        %826 = vmatpush1.msra.mxu0 0.0
        %827 = vmatprep.subr.mxu0 0.0
        %828 = vmatpush1.msra.mxu0 0.0
        %829 = vmatprep.subr.mxu0 0.0
        %830 = vmatpush1.msra.mxu0 0.0
        %831 = vmatprep.subr.mxu0 0.0
        %832 = vmatpush1.msra.mxu0 0.0
        %833 = vmatprep.subr.mxu0 0.0
        %834 = vmatpush1.msra.mxu0 0.0
        %835 = vmatprep.subr.mxu0 0.0
        %836 = vmatpush1.msra.mxu0 0.0
        %837 = vmatprep.subr.mxu0 0.0
        %838 = vmatpush1.msra.mxu0 0.0
        %839 = vmatprep.subr.mxu0 0.0
        %840 = vmatpush1.msra.mxu0 0.0
        %841 = vmatprep.mubr.f32.mxu0 0.0
        %842 = vmatmul.mubr.f32.gmra.mrb[0].mxu0 %v775
        %v843 = vpop.f32.mrb[0].mxu0
        %v844 = vadd.f32 0.0, %v843
        %v845 = vpop.f32.mrb[0].mxu0
        %846 = vdwg.mxu0
        %v847 = vadd.f32 %v765, %v844
        %848 = vst.msk [vmem:[%s764] sm:$0xff] %vm507, %v847
        %s849 = scalar_lea.vmem [#allocation3], 16
        %v850 = vld [vmem:[%s849] sm:$0xff]
        %s851 = scalar_lea.vmem [#allocation10], 16
        %v852 = vld [vmem:[%s851] sm:$0xff]
        %853 = vrot.lane.b32.xlu0 %v422, 80
        %v854 = vpop.permute.xlu0 %853
        %855 = vrot.lane.b32.xlu0 %v427, 80
        %v856 = vpop.permute.xlu0 %855
        %v860 = vsel %vm432, %v852, 0
        %862 = vmatprep.subr.mxu0 0.0
        %863 = vmatpush1.msra.mxu0 %v854
        %864 = vmatprep.subr.mxu0 0.0
        %865 = vmatpush1.msra.mxu0 %v856
        %866 = vmatprep.subr.mxu0 0.0
        %867 = vmatpush1.msra.mxu0 0.0
        %868 = vmatprep.subr.mxu0 0.0
        %869 = vmatpush1.msra.mxu0 0.0
        %870 = vmatprep.subr.mxu0 0.0
        %871 = vmatpush1.msra.mxu0 0.0
        %872 = vmatprep.subr.mxu0 0.0
        %873 = vmatpush1.msra.mxu0 0.0
        %874 = vmatprep.subr.mxu0 0.0
        %875 = vmatpush1.msra.mxu0 0.0
        %876 = vmatprep.subr.mxu0 0.0
        %877 = vmatpush1.msra.mxu0 0.0
        %878 = vmatprep.subr.mxu0 0.0
        %879 = vmatpush1.msra.mxu0 0.0
        %880 = vmatprep.subr.mxu0 0.0
        %881 = vmatpush1.msra.mxu0 0.0
        %882 = vmatprep.subr.mxu0 0.0
        %883 = vmatpush1.msra.mxu0 0.0
        %884 = vmatprep.subr.mxu0 0.0
        %885 = vmatpush1.msra.mxu0 0.0
        %886 = vmatprep.subr.mxu0 0.0
        %887 = vmatpush1.msra.mxu0 0.0
        %888 = vmatprep.subr.mxu0 0.0
        %889 = vmatpush1.msra.mxu0 0.0
        %890 = vmatprep.subr.mxu0 0.0
        %891 = vmatpush1.msra.mxu0 0.0
        %892 = vmatprep.subr.mxu0 0.0
        %893 = vmatpush1.msra.mxu0 0.0
        %894 = vmatprep.subr.mxu0 0.0
        %895 = vmatpush1.msra.mxu0 0.0
        %896 = vmatprep.subr.mxu0 0.0
        %897 = vmatpush1.msra.mxu0 0.0
        %898 = vmatprep.subr.mxu0 0.0
        %899 = vmatpush1.msra.mxu0 0.0
        %900 = vmatprep.subr.mxu0 0.0
        %901 = vmatpush1.msra.mxu0 0.0
        %902 = vmatprep.subr.mxu0 0.0
        %903 = vmatpush1.msra.mxu0 0.0
        %904 = vmatprep.subr.mxu0 0.0
        %905 = vmatpush1.msra.mxu0 0.0
        %906 = vmatprep.subr.mxu0 0.0
        %907 = vmatpush1.msra.mxu0 0.0
        %908 = vmatprep.subr.mxu0 0.0
        %909 = vmatpush1.msra.mxu0 0.0
        %910 = vmatprep.subr.mxu0 0.0
        %911 = vmatpush1.msra.mxu0 0.0
        %912 = vmatprep.subr.mxu0 0.0
        %913 = vmatpush1.msra.mxu0 0.0
        %914 = vmatprep.subr.mxu0 0.0
        %915 = vmatpush1.msra.mxu0 0.0
        %916 = vmatprep.subr.mxu0 0.0
        %917 = vmatpush1.msra.mxu0 0.0
        %918 = vmatprep.subr.mxu0 0.0
        %919 = vmatpush1.msra.mxu0 0.0
        %920 = vmatprep.subr.mxu0 0.0
        %921 = vmatpush1.msra.mxu0 0.0
        %922 = vmatprep.subr.mxu0 0.0
        %923 = vmatpush1.msra.mxu0 0.0
        %924 = vmatprep.subr.mxu0 0.0
        %925 = vmatpush1.msra.mxu0 0.0
        %926 = vmatprep.mubr.f32.mxu0 0.0
        %927 = vmatmul.mubr.f32.gmra.mrb[0].mxu0 %v860
        %v928 = vpop.f32.mrb[0].mxu0
        %v929 = vadd.f32 0.0, %v928
        %v930 = vpop.f32.mrb[0].mxu0
        %931 = vdwg.mxu0
        %v932 = vadd.f32 %v850, %v929
        %933 = vst.msk [vmem:[%s849] sm:$0xff] %vm507, %v932
        %s934 = scalar_lea.vmem [#allocation2], 24
        %v935 = vld [vmem:[%s934] sm:$0xff]
        %s936 = scalar_lea.vmem [#allocation9], 24
        %v937 = vld [vmem:[%s936] sm:$0xff]
        %938 = vrot.lane.b32.xlu0 %v422, 104
        %v939 = vpop.permute.xlu0 %938
        %940 = vrot.lane.b32.xlu0 %v427, 104
        %v941 = vpop.permute.xlu0 %940
        %v945 = vsel %vm432, %v937, 0
        %947 = vmatprep.subr.mxu0 0.0
        %948 = vmatpush1.msra.mxu0 %v939
        %949 = vmatprep.subr.mxu0 0.0
        %950 = vmatpush1.msra.mxu0 %v941
        %951 = vmatprep.subr.mxu0 0.0
        %952 = vmatpush1.msra.mxu0 0.0
        %953 = vmatprep.subr.mxu0 0.0
        %954 = vmatpush1.msra.mxu0 0.0
        %955 = vmatprep.subr.mxu0 0.0
        %956 = vmatpush1.msra.mxu0 0.0
        %957 = vmatprep.subr.mxu0 0.0
        %958 = vmatpush1.msra.mxu0 0.0
        %959 = vmatprep.subr.mxu0 0.0
        %960 = vmatpush1.msra.mxu0 0.0
        %961 = vmatprep.subr.mxu0 0.0
        %962 = vmatpush1.msra.mxu0 0.0
        %963 = vmatprep.subr.mxu0 0.0
        %964 = vmatpush1.msra.mxu0 0.0
        %965 = vmatprep.subr.mxu0 0.0
        %966 = vmatpush1.msra.mxu0 0.0
        %967 = vmatprep.subr.mxu0 0.0
        %968 = vmatpush1.msra.mxu0 0.0
        %969 = vmatprep.subr.mxu0 0.0
        %970 = vmatpush1.msra.mxu0 0.0
        %971 = vmatprep.subr.mxu0 0.0
        %972 = vmatpush1.msra.mxu0 0.0
        %973 = vmatprep.subr.mxu0 0.0
        %974 = vmatpush1.msra.mxu0 0.0
        %975 = vmatprep.subr.mxu0 0.0
        %976 = vmatpush1.msra.mxu0 0.0
        %977 = vmatprep.subr.mxu0 0.0
        %978 = vmatpush1.msra.mxu0 0.0
        %979 = vmatprep.subr.mxu0 0.0
        %980 = vmatpush1.msra.mxu0 0.0
        %981 = vmatprep.subr.mxu0 0.0
        %982 = vmatpush1.msra.mxu0 0.0
        %983 = vmatprep.subr.mxu0 0.0
        %984 = vmatpush1.msra.mxu0 0.0
        %985 = vmatprep.subr.mxu0 0.0
        %986 = vmatpush1.msra.mxu0 0.0
        %987 = vmatprep.subr.mxu0 0.0
        %988 = vmatpush1.msra.mxu0 0.0
        %989 = vmatprep.subr.mxu0 0.0
        %990 = vmatpush1.msra.mxu0 0.0
        %991 = vmatprep.subr.mxu0 0.0
        %992 = vmatpush1.msra.mxu0 0.0
        %993 = vmatprep.subr.mxu0 0.0
        %994 = vmatpush1.msra.mxu0 0.0
        %995 = vmatprep.subr.mxu0 0.0
        %996 = vmatpush1.msra.mxu0 0.0
        %997 = vmatprep.subr.mxu0 0.0
        %998 = vmatpush1.msra.mxu0 0.0
        %999 = vmatprep.subr.mxu0 0.0
        %1000 = vmatpush1.msra.mxu0 0.0
        %1001 = vmatprep.subr.mxu0 0.0
        %1002 = vmatpush1.msra.mxu0 0.0
        %1003 = vmatprep.subr.mxu0 0.0
        %1004 = vmatpush1.msra.mxu0 0.0
        %1005 = vmatprep.subr.mxu0 0.0
        %1006 = vmatpush1.msra.mxu0 0.0
        %1007 = vmatprep.subr.mxu0 0.0
        %1008 = vmatpush1.msra.mxu0 0.0
        %1009 = vmatprep.subr.mxu0 0.0
        %1010 = vmatpush1.msra.mxu0 0.0
        %1011 = vmatprep.mubr.f32.mxu0 0.0
        %1012 = vmatmul.mubr.f32.gmra.mrb[0].mxu0 %v945
        %v1013 = vpop.f32.mrb[0].mxu0
        %v1014 = vadd.f32 0.0, %v1013
        %v1015 = vpop.f32.mrb[0].mxu0
        %1016 = vdwg.mxu0
        %v1017 = vadd.f32 %v935, %v1014
        %1018 = vst.msk [vmem:[%s934] sm:$0xff] %vm507, %v1017
        %s1019 = scalar_lea.vmem [#allocation3], 24
        %v1020 = vld [vmem:[%s1019] sm:$0xff]
        %s1021 = scalar_lea.vmem [#allocation10], 24
        %v1022 = vld [vmem:[%s1021] sm:$0xff]
        %1023 = vrot.lane.b32.xlu0 %v422, 72
        %v1024 = vpop.permute.xlu0 %1023
        %1025 = vrot.lane.b32.xlu0 %v427, 72
        %v1026 = vpop.permute.xlu0 %1025
        %v1030 = vsel %vm432, %v1022, 0
        %1032 = vmatprep.subr.mxu0 0.0
        %1033 = vmatpush1.msra.mxu0 %v1024
        %1034 = vmatprep.subr.mxu0 0.0
        %1035 = vmatpush1.msra.mxu0 %v1026
        %1036 = vmatprep.subr.mxu0 0.0
        %1037 = vmatpush1.msra.mxu0 0.0
        %1038 = vmatprep.subr.mxu0 0.0
        %1039 = vmatpush1.msra.mxu0 0.0
        %1040 = vmatprep.subr.mxu0 0.0
        %1041 = vmatpush1.msra.mxu0 0.0
        %1042 = vmatprep.subr.mxu0 0.0
        %1043 = vmatpush1.msra.mxu0 0.0
        %1044 = vmatprep.subr.mxu0 0.0
        %1045 = vmatpush1.msra.mxu0 0.0
        %1046 = vmatprep.subr.mxu0 0.0
        %1047 = vmatpush1.msra.mxu0 0.0
        %1048 = vmatprep.subr.mxu0 0.0
        %1049 = vmatpush1.msra.mxu0 0.0
        %1050 = vmatprep.subr.mxu0 0.0
        %1051 = vmatpush1.msra.mxu0 0.0
        %1052 = vmatprep.subr.mxu0 0.0
        %1053 = vmatpush1.msra.mxu0 0.0
        %1054 = vmatprep.subr.mxu0 0.0
        %1055 = vmatpush1.msra.mxu0 0.0
        %1056 = vmatprep.subr.mxu0 0.0
        %1057 = vmatpush1.msra.mxu0 0.0
        %1058 = vmatprep.subr.mxu0 0.0
        %1059 = vmatpush1.msra.mxu0 0.0
        %1060 = vmatprep.subr.mxu0 0.0
        %1061 = vmatpush1.msra.mxu0 0.0
        %1062 = vmatprep.subr.mxu0 0.0
        %1063 = vmatpush1.msra.mxu0 0.0
        %1064 = vmatprep.subr.mxu0 0.0
        %1065 = vmatpush1.msra.mxu0 0.0
        %1066 = vmatprep.subr.mxu0 0.0
        %1067 = vmatpush1.msra.mxu0 0.0
        %1068 = vmatprep.subr.mxu0 0.0
        %1069 = vmatpush1.msra.mxu0 0.0
        %1070 = vmatprep.subr.mxu0 0.0
        %1071 = vmatpush1.msra.mxu0 0.0
        %1072 = vmatprep.subr.mxu0 0.0
        %1073 = vmatpush1.msra.mxu0 0.0
        %1074 = vmatprep.subr.mxu0 0.0
        %1075 = vmatpush1.msra.mxu0 0.0
        %1076 = vmatprep.subr.mxu0 0.0
        %1077 = vmatpush1.msra.mxu0 0.0
        %1078 = vmatprep.subr.mxu0 0.0
        %1079 = vmatpush1.msra.mxu0 0.0
        %1080 = vmatprep.subr.mxu0 0.0
        %1081 = vmatpush1.msra.mxu0 0.0
        %1082 = vmatprep.subr.mxu0 0.0
        %1083 = vmatpush1.msra.mxu0 0.0
        %1084 = vmatprep.subr.mxu0 0.0
        %1085 = vmatpush1.msra.mxu0 0.0
        %1086 = vmatprep.subr.mxu0 0.0
        %1087 = vmatpush1.msra.mxu0 0.0
        %1088 = vmatprep.subr.mxu0 0.0
        %1089 = vmatpush1.msra.mxu0 0.0
        %1090 = vmatprep.subr.mxu0 0.0
        %1091 = vmatpush1.msra.mxu0 0.0
        %1092 = vmatprep.subr.mxu0 0.0
        %1093 = vmatpush1.msra.mxu0 0.0
        %1094 = vmatprep.subr.mxu0 0.0
        %1095 = vmatpush1.msra.mxu0 0.0
        %1096 = vmatprep.mubr.f32.mxu0 0.0
        %1097 = vmatmul.mubr.f32.gmra.mrb[0].mxu0 %v1030
        %v1098 = vpop.f32.mrb[0].mxu0
        %v1099 = vadd.f32 0.0, %v1098
        %v1100 = vpop.f32.mrb[0].mxu0
        %1101 = vdwg.mxu0
        %v1102 = vadd.f32 %v1020, %v1099
        %1103 = vst.msk [vmem:[%s1019] sm:$0xff] %vm507, %v1102
        // Predicated region
        $region57: #{tpu_custom_call.1} parent=35 // pred_check
          %p1104 = pneg %p329
        $region58: #{tpu_custom_call.1} parent=35 // pred_check_branch
          %1106 = sbr.rel (%p1104) target = $region60
        $region59: #{tpu_custom_call.1} parent=35 // pred_region
          %v1107 = vld [vmem:[#allocation2] sm:$0xff]
          %v1108 = vld [vmem:[#allocation2 + $0x8] sm:$0xff]
          %v1109 = vld [vmem:[#allocation2 + $0x10] sm:$0xff]
          %v1110 = vld [vmem:[#allocation2 + $0x18] sm:$0xff]
          %1111 = vst.msk [vmem:[%s320] sm:$0xff] %vm507, %v1107
          %1112 = vst.msk [vmem:[%s320 + $0x8] sm:$0xff] %vm507, %v1108
          %1113 = vst.msk [vmem:[%s320 + $0x10] sm:$0xff] %vm507, %v1109
          %1114 = vst.msk [vmem:[%s320 + $0x18] sm:$0xff] %vm507, %v1110
          %v1115 = vld [vmem:[#allocation3] sm:$0xff]
          %v1116 = vld [vmem:[#allocation3 + $0x8] sm:$0xff]
          %v1117 = vld [vmem:[#allocation3 + $0x10] sm:$0xff]
          %v1118 = vld [vmem:[#allocation3 + $0x18] sm:$0xff]
          %1119 = vst.msk [vmem:[%s327] sm:$0xff] %vm507, %v1115
          %1120 = vst.msk [vmem:[%s327 + $0x8] sm:$0xff] %vm507, %v1116
          %1121 = vst.msk [vmem:[%s327 + $0x10] sm:$0xff] %vm507, %v1117
          %1122 = vst.msk [vmem:[%s327 + $0x18] sm:$0xff] %vm507, %v1118
        $region60: #{tpu_custom_call.1} parent=35 // pred_fallthru
          _
        %s1123 = sand.u32 %s149, 1
        %s1124 = scalar_lea.sflag [#allocation6], %s1123
        %s1125 = sand.u32 %s149, 1
        %s1126 = smul.addr %s1125, 32
        %s1127 = scalar_lea.vmem [#allocation12], %s1126
        %s1128 = sand.u32 %s175, 1
        %s1129 = scalar_lea.sflag [#allocation14], %s1128
        %s1130 = sand.u32 %s175, 1
        %s1131 = smul.addr %s1130, 32
        %s1132 = scalar_lea.vmem [#allocation13], %s1131
        // Predicated region
        $region61: #{tpu_custom_call.1} parent=35 // pred_check
          %p1133 = pneg %p159
        $region62: #{tpu_custom_call.1} parent=35 // pred_check_branch
          %1135 = sbr.rel (%p1133) target = $region64
        $region63: #{tpu_custom_call.1} parent=35 // pred_region
          %s1137 = ssub.s32 512, 512
          %1138 = vsyncadd %s1124, %s1137
          %s1139 = smul.addr %s32, 4
          %s1140 = smul.addr %s1139, 128
          %s1141 = scalar_lea.hbm %s4, %s1140
          %s1142 = sshll.u32 %s1127, 4
          %s1143 = int_to_ptr.vmem [resolvable:$true] %s1142
          %1148 = dma.vmem_to_hbm [thread:$0]  %s1143, 512, %s1141, %s1124, 128, 128, 8
        $region64: #{tpu_custom_call.1} parent=35 // pred_fallthru
          _
        // Predicated region
        $region65: #{tpu_custom_call.1} parent=35 // pred_check
          %p1149 = pneg %p185
        $region66: #{tpu_custom_call.1} parent=35 // pred_check_branch
          %1151 = sbr.rel (%p1149) target = $region68
        $region67: #{tpu_custom_call.1} parent=35 // pred_region
          %s1153 = ssub.s32 512, 512
          %1154 = vsyncadd %s1129, %s1153
          %s1155 = smul.addr %s32, 4
          %s1156 = smul.addr %s1155, 128
          %s1157 = scalar_lea.hbm %s5, %s1156
          %s1158 = sshll.u32 %s1132, 4
          %s1159 = int_to_ptr.vmem [resolvable:$true] %s1158
          %1164 = dma.vmem_to_hbm [thread:$0]  %s1159, 512, %s1157, %s1129, 128, 128, 8
        $region68: #{tpu_custom_call.1} parent=35 // pred_fallthru
          _
      $region36: #{tpu_custom_call.1} parent=5 // pred_fallthru
        _
      %p1165 = scmp.le.s32.totalorder 2, %s23
      // Predicated region
      $region69: #{tpu_custom_call.1} parent=5 // pred_check
        %p1166 = pneg %p1165
      $region70: #{tpu_custom_call.1} parent=5 // pred_check_branch
        %1168 = sbr.rel (%p1166) target = $region72
      $region71: #{tpu_custom_call.1} parent=5 // pred_region
        %s1169 = ssub.s32 %s23, 2
        // Predicated region
        $region73: #{tpu_custom_call.1} parent=71 // pred_check
          %p1170 = pneg %p165
        $region74: #{tpu_custom_call.1} parent=71 // pred_check_branch
          %1172 = sbr.rel (%p1170) target = $region76
        $region75: #{tpu_custom_call.1} parent=71 // pred_region
          %s1173 = sand.u32 %s150, 1
          %s1174 = scalar_lea.sflag [#allocation6], %s1173
          %s1175 = sand.u32 %s150, 1
          %s1176 = smul.addr %s1175, 32
          %s1177 = scalar_lea.vmem [#allocation12], %s1176
          %1178 = dma.done %s1174, 512
        $region76: #{tpu_custom_call.1} parent=71 // pred_fallthru
          _
        // Predicated region
        $region77: #{tpu_custom_call.1} parent=71 // pred_check
          %p1179 = pneg %p191
        $region78: #{tpu_custom_call.1} parent=71 // pred_check_branch
          %1181 = sbr.rel (%p1179) target = $region80
        $region79: #{tpu_custom_call.1} parent=71 // pred_region
          %s1182 = sand.u32 %s176, 1
          %s1183 = scalar_lea.sflag [#allocation14], %s1182
          %s1184 = sand.u32 %s176, 1
          %s1185 = smul.addr %s1184, 32
          %s1186 = scalar_lea.vmem [#allocation13], %s1185
          %1187 = dma.done %s1183, 512
        $region80: #{tpu_custom_call.1} parent=71 // pred_fallthru
          _
      $region72: #{tpu_custom_call.1} parent=5 // pred_fallthru
        _
    $region6: #{tpu_custom_call.1} parent=1 // loop_footer
      %s27 = sadd.s32 1, %s23
    $region7: #{tpu_custom_call.1} parent=1 // loop_footer_branch
      %22 = sbr.rel target = $region3
    $region8: #{tpu_custom_call.1} parent=1 // loop_exit
      _
    %1188 = vsyncpa [#allocation5], 1
    %s1189 = scalar_lea.sflag [#allocation5], 1
    %1190 = vsyncpa %s1189, 1
    %1191 = vsyncpa [#allocation8], 1
    %1192 = vsyncpa [#allocation11], 1
    %1193 = vsyncpa [#allocation6], 1
    %s1194 = scalar_lea.sflag [#allocation6], 1
    %1195 = vsyncpa %s1194, 1
    %1196 = vsyncpa [#allocation14], 1
    %s1197 = scalar_lea.sflag [#allocation14], 1
    %1198 = vsyncpa %s1197, 1

// kernel: tpu_custom_call.1
$region0: #{tpu_custom_call.1}
  #allocation0 [shape = 'u32[]', space=smem, size = 0x4, offset = 0x4, fixed_abs, tag = 'smem constant byte address 0x4 - core index']
  #allocation1 [shape = 'u32[144,128]{1,0:T(1,128)}', space=vmem, size = 0x12000, scoped, tag = 'internal scratch']
  #allocation2 [shape = 'f32[4,8,8]{2,1,0:T(8,128)}', space=vmem, size = 0x4000, scoped, tag = 'scratch operand']
  #allocation3 [shape = 'f32[4,8,8]{2,1,0:T(8,128)}', space=vmem, size = 0x4000, scoped, tag = 'scratch operand']
  %s0 = inlined_call_operand.hbm [shape: f32[2,16,32], index: 0, kind: input, shape index: {}]
  %s1 = inlined_call_operand.hbm [shape: f32[32,64], index: 1, kind: input, shape index: {}]
  %s2 = inlined_call_operand.hbm [shape: f32[4,8,16], index: 2, kind: input, shape index: {}]
  %s3 = inlined_call_operand.hbm [shape: f32[4,8,16], index: 3, kind: input, shape index: {}]
  %s4 = inlined_call_operand.hbm [shape: f32[2,4,8,8], index: 4, kind: output, shape index: {0}]
  %s5 = inlined_call_operand.hbm [shape: f32[2,4,8,8], index: 5, kind: output, shape index: {1}]
  %6 = xla_tuple %s4, %s5
  %s7 = sld [smem:[#allocation0]]
  $region81: #{tpu_custom_call.1} parent=0
    _
  %s9 = ssub.s32 1, %s7
  %s10 = scalar_select 0, %s9, %s7
  $region1: #{tpu_custom_call.1} parent=0
    #allocation4 [shape = 'u8[16384]{0}', space=vmem, size = 0x4000, scoped, tag = 'input window, operand 0']
    #allocation5 [shape = 's32[2]{0}', space=sflag, size = 0x8, scoped, tag = 'scoped memory for tpu_custom_call.1']
    #allocation6 [shape = 's32[2]{0}', space=sflag, size = 0x8, scoped, tag = 'scoped memory for tpu_custom_call.1']
    #allocation7 [shape = 'u8[16384]{0}', space=vmem, size = 0x4000, scoped, tag = 'input window, operand 1, single buffered']
    #allocation8 [shape = 's32[1]{0}', space=sflag, size = 0x4, scoped, tag = 'scoped memory for tpu_custom_call.1']
    #allocation9 [shape = 'u8[16384]{0}', space=vmem, size = 0x4000, scoped, tag = 'input window, operand 2, single buffered']
    #allocation10 [shape = 'u8[16384]{0}', space=vmem, size = 0x4000, scoped, tag = 'input window, operand 3, single buffered']
    #allocation11 [shape = 's32[1]{0}', space=sflag, size = 0x4, scoped, tag = 'scoped memory for tpu_custom_call.1']
    #allocation12 [shape = 'u8[32768]{0}', space=vmem, size = 0x8000, scoped, tag = 'output window, operand 0']
    #allocation13 [shape = 'u8[32768]{0}', space=vmem, size = 0x8000, scoped, tag = 'output window, operand 1']
    #allocation14 [shape = 's32[2]{0}', space=sflag, size = 0x8, scoped, tag = 'scoped memory for tpu_custom_call.1']
    %11 = vsyncpa [#allocation5], 0
    %s12 = scalar_lea.sflag [#allocation5], 1
    %13 = vsyncpa %s12, 0
    %14 = vsyncpa [#allocation8], 0
    %15 = vsyncpa [#allocation11], 0
    %16 = vsyncpa [#allocation6], 0
    %s17 = scalar_lea.sflag [#allocation6], 1
    %18 = vsyncpa %s17, 0
    %19 = vsyncpa [#allocation14], 0
    %s20 = scalar_lea.sflag [#allocation14], 1
    %21 = vsyncpa %s20, 0
    loop: start=0, step=1, limit=4
    $region2: #{tpu_custom_call.1} parent=1 // loop_pre_header
      _
    $region3: #{tpu_custom_call.1} parent=1 // loop_header
      %s23 = sphi 0, %s27
      %p24 = scmp.ge.s32.totalorder %s23, 4
      %s30 = sphi 0, %s42
      %s31 = sphi 0, %s38
      %s32 = sphi 0, %s30
      %s33 = sphi 0, %s31
      %s34 = sphi 0, %s32
      %s35 = sphi 0, %s33
      %s47 = sphi 0, %s49
      %s50 = sphi 0, %s47
      %s51 = sphi 0, %s50
      %s67 = sphi 0, %s51
      %s71 = sphi 0, %s71
      %s73 = sphi 0, %s71
      %s74 = sphi 0, %s73
      %s88 = sphi 0, %s74
      %s94 = sphi 0, %s96
      %s97 = sphi 0, %s94
      %s98 = sphi 0, %s97
      %s114 = sphi 0, %s98
      %s120 = sphi 0, %s122
      %s123 = sphi 0, %s120
      %s124 = sphi 0, %s123
      %s140 = sphi 0, %s124
      %s146 = sphi 0, %s148
      %s149 = sphi 0, %s146
      %s150 = sphi 0, %s149
      %s166 = sphi 0, %s150
      %s172 = sphi 0, %s174
      %s175 = sphi 0, %s172
      %s176 = sphi 0, %s175
      %s192 = sphi 0, %s176
    $region4: #{tpu_custom_call.1} parent=1 // loop_header_branch
      %26 = sbr.rel (%p24) target = $region8
    $region5: #{tpu_custom_call.1} parent=1 // loop_body
      %s28 = ssub.s32 %s23, 1
      %s29 = ssub.s32 %s23, 2
      %s36 = sadd.s32 1, %s31
      %p37 = scmp.ge.s32.totalorder %s36, 1
      %s38 = scalar_select %p37, 0, %s36
      %s39 = sadd.s32 1, %s30
      %s40 = scalar_select %p37, %s39, %s30
      %p41 = scmp.ge.s32.totalorder %s40, 2
      %s42 = scalar_select %p41, 0, %s40
      %s43 = ssub.s32 %s30, %s42
      %s44 = ssub.s32 %s31, %s38
      %s45 = sor.u32 %s43, %s44
      %p46 = scmp.eq.s32.totalorder %s45, 0
      %s48 = sadd.s32 %s47, 1
      %s49 = scalar_select %p46, %s47, %s48
      %p52 = pneg %p46
      %p53 = scmp.eq.s32.totalorder %s23, 1
      %p54 = por %p52, %p53
      %p55 = scmp.ne.s32.totalorder %s47, %s50
      %p56 = scmp.eq.s32.totalorder %s23, 0
      %p57 = por %p55, %p56
      %p58 = scmp.ne.s32.totalorder %s47, %s50
      %p59 = scmp.eq.s32.totalorder %s28, 1
      %p60 = por %p58, %p59
      %p61 = scmp.ne.s32.totalorder %s50, %s51
      %p62 = scmp.eq.s32.totalorder %s28, 0
      %p63 = por %p61, %p62
      %p64 = scmp.ne.s32.totalorder %s50, %s51
      %p65 = scmp.eq.s32.totalorder %s29, 1
      %p66 = por %p64, %p65
      %p68 = scmp.ne.s32.totalorder %s51, %s67
      %p69 = scmp.eq.s32.totalorder %s29, 0
      %p70 = por %p68, %p69
      %s72 = sadd.s32 %s71, 1
      %p75 = scmp.eq.s32.totalorder %s23, 1
      %p76 = scmp.ne.s32.totalorder %s71, %s73
      %p77 = scmp.eq.s32.totalorder %s23, 0
      %p78 = por %p76, %p77
      %p79 = scmp.ne.s32.totalorder %s71, %s73
      %p80 = scmp.eq.s32.totalorder %s28, 1
      %p81 = por %p79, %p80
      %p82 = scmp.ne.s32.totalorder %s73, %s74
      %p83 = scmp.eq.s32.totalorder %s28, 0
      %p84 = por %p82, %p83
      %p85 = scmp.ne.s32.totalorder %s73, %s74
      %p86 = scmp.eq.s32.totalorder %s29, 1
      %p87 = por %p85, %p86
      %p89 = scmp.ne.s32.totalorder %s74, %s88
      %p90 = scmp.eq.s32.totalorder %s29, 0
      %p91 = por %p89, %p90
      %s92 = ssub.s32 %s31, %s38
      %p93 = scmp.eq.s32.totalorder %s92, 0
      %s95 = sadd.s32 %s94, 1
      %s96 = scalar_select %p93, %s94, %s95
      %p99 = pneg %p93
      %p100 = scmp.eq.s32.totalorder %s23, 1
      %p101 = por %p99, %p100
      %p102 = scmp.ne.s32.totalorder %s94, %s97
      %p103 = scmp.eq.s32.totalorder %s23, 0
      %p104 = por %p102, %p103
      %p105 = scmp.ne.s32.totalorder %s94, %s97
      %p106 = scmp.eq.s32.totalorder %s28, 1
      %p107 = por %p105, %p106
      %p108 = scmp.ne.s32.totalorder %s97, %s98
      %p109 = scmp.eq.s32.totalorder %s28, 0
      %p110 = por %p108, %p109
      %p111 = scmp.ne.s32.totalorder %s97, %s98
      %p112 = scmp.eq.s32.totalorder %s29, 1
      %p113 = por %p111, %p112
      %p115 = scmp.ne.s32.totalorder %s98, %s114
      %p116 = scmp.eq.s32.totalorder %s29, 0
      %p117 = por %p115, %p116
      %s118 = ssub.s32 %s31, %s38
      %p119 = scmp.eq.s32.totalorder %s118, 0
      %s121 = sadd.s32 %s120, 1
      %s122 = scalar_select %p119, %s120, %s121
      %p125 = pneg %p119
      %p126 = scmp.eq.s32.totalorder %s23, 1
      %p127 = por %p125, %p126
      %p128 = scmp.ne.s32.totalorder %s120, %s123
      %p129 = scmp.eq.s32.totalorder %s23, 0
      %p130 = por %p128, %p129
      %p131 = scmp.ne.s32.totalorder %s120, %s123
      %p132 = scmp.eq.s32.totalorder %s28, 1
      %p133 = por %p131, %p132
      %p134 = scmp.ne.s32.totalorder %s123, %s124
      %p135 = scmp.eq.s32.totalorder %s28, 0
      %p136 = por %p134, %p135
      %p137 = scmp.ne.s32.totalorder %s123, %s124
      %p138 = scmp.eq.s32.totalorder %s29, 1
      %p139 = por %p137, %p138
      %p141 = scmp.ne.s32.totalorder %s124, %s140
      %p142 = scmp.eq.s32.totalorder %s29, 0
      %p143 = por %p141, %p142
      %s144 = ssub.s32 %s30, %s42
      %p145 = scmp.eq.s32.totalorder %s144, 0
      %s147 = sadd.s32 %s146, 1
      %s148 = scalar_select %p145, %s146, %s147
      %p151 = pneg %p145
      %p152 = scmp.eq.s32.totalorder %s23, 1
      %p153 = por %p151, %p152
      %p154 = scmp.ne.s32.totalorder %s146, %s149
      %p155 = scmp.eq.s32.totalorder %s23, 0
      %p156 = por %p154, %p155
      %p157 = scmp.ne.s32.totalorder %s146, %s149
      %p158 = scmp.eq.s32.totalorder %s28, 1
      %p159 = por %p157, %p158
      %p160 = scmp.ne.s32.totalorder %s149, %s150
      %p161 = scmp.eq.s32.totalorder %s28, 0
      %p162 = por %p160, %p161
      %p163 = scmp.ne.s32.totalorder %s149, %s150
      %p164 = scmp.eq.s32.totalorder %s29, 1
      %p165 = por %p163, %p164
      %p167 = scmp.ne.s32.totalorder %s150, %s166
      %p168 = scmp.eq.s32.totalorder %s29, 0
      %p169 = por %p167, %p168
      %s170 = ssub.s32 %s30, %s42
      %p171 = scmp.eq.s32.totalorder %s170, 0
      %s173 = sadd.s32 %s172, 1
      %s174 = scalar_select %p171, %s172, %s173
      %p177 = pneg %p171
      %p178 = scmp.eq.s32.totalorder %s23, 1
      %p179 = por %p177, %p178
      %p180 = scmp.ne.s32.totalorder %s172, %s175
      %p181 = scmp.eq.s32.totalorder %s23, 0
      %p182 = por %p180, %p181
      %p183 = scmp.ne.s32.totalorder %s172, %s175
      %p184 = scmp.eq.s32.totalorder %s28, 1
      %p185 = por %p183, %p184
      %p186 = scmp.ne.s32.totalorder %s175, %s176
      %p187 = scmp.eq.s32.totalorder %s28, 0
      %p188 = por %p186, %p187
      %p189 = scmp.ne.s32.totalorder %s175, %s176
      %p190 = scmp.eq.s32.totalorder %s29, 1
      %p191 = por %p189, %p190
      %p193 = scmp.ne.s32.totalorder %s176, %s192
      %p194 = scmp.eq.s32.totalorder %s29, 0
      %p195 = por %p193, %p194
      %p196 = scmp.le.s32.totalorder 1, %s23
      %p197 = scmp.lt.s32.totalorder %s23, 3
      %p198 = pnand %p196, %p197
      %p199 = pneg %p198
      // Predicated region
      $region9: #{tpu_custom_call.1} parent=5 // pred_check
        _
      $region10: #{tpu_custom_call.1} parent=5 // pred_check_branch
        %201 = sbr.rel (%p198) target = $region12
      $region11: #{tpu_custom_call.1} parent=5 // pred_region
        %s202 = ssub.s32 %s23, 1
        // Predicated region
        $region13: #{tpu_custom_call.1} parent=11 // pred_check
          %p203 = pneg %p84
        $region14: #{tpu_custom_call.1} parent=11 // pred_check_branch
          %205 = sbr.rel (%p203) target = $region16
        $region15: #{tpu_custom_call.1} parent=11 // pred_region
          %s207 = ssub.s32 512, 512
          %208 = vsyncadd [#allocation8], %s207
          %s209 = sshll.u32 [#allocation7], 4
          %s210 = int_to_ptr.vmem [resolvable:$true] %s209
          %215 = dma.hbm_to_vmem [thread:$0]  %s1, 512, %s210, [#allocation8], 128, 128, 8
        $region16: #{tpu_custom_call.1} parent=11 // pred_fallthru
          _
        // Predicated region
        $region17: #{tpu_custom_call.1} parent=11 // pred_check
          %p216 = pneg %p110
        $region18: #{tpu_custom_call.1} parent=11 // pred_check_branch
          %218 = sbr.rel (%p216) target = $region20
        $region19: #{tpu_custom_call.1} parent=11 // pred_region
          %s220 = ssub.s32 512, 512
          %221 = vsyncadd [#allocation8], %s220
          %s222 = smul.addr %s33, 128
          %s223 = scalar_lea.hbm %s2, %s222
          %s224 = sshll.u32 [#allocation9], 4
          %s225 = int_to_ptr.vmem [resolvable:$true] %s224
          %230 = dma.hbm_to_vmem [thread:$0]  %s223, 512, %s225, [#allocation8], 128, 128, 8
        $region20: #{tpu_custom_call.1} parent=11 // pred_fallthru
          _
        // Predicated region
        $region21: #{tpu_custom_call.1} parent=11 // pred_check
          %p231 = pneg %p136
        $region22: #{tpu_custom_call.1} parent=11 // pred_check_branch
          %233 = sbr.rel (%p231) target = $region24
        $region23: #{tpu_custom_call.1} parent=11 // pred_region
          %s235 = ssub.s32 512, 512
          %236 = vsyncadd [#allocation11], %s235
          %s237 = smul.addr %s33, 128
          %s238 = scalar_lea.hbm %s3, %s237
          %s239 = sshll.u32 [#allocation10], 4
          %s240 = int_to_ptr.vmem [resolvable:$true] %s239
          %245 = dma.hbm_to_vmem [thread:$0]  %s238, 512, %s240, [#allocation11], 128, 128, 8
        $region24: #{tpu_custom_call.1} parent=11 // pred_fallthru
          _
      $region12: #{tpu_custom_call.1} parent=5 // pred_fallthru
        _
      %p246 = scmp.lt.s32.totalorder %s23, 2
      // Predicated region
      $region25: #{tpu_custom_call.1} parent=5 // pred_check
        %p247 = pneg %p246
      $region26: #{tpu_custom_call.1} parent=5 // pred_check_branch
        %249 = sbr.rel (%p247) target = $region28
      $region27: #{tpu_custom_call.1} parent=5 // pred_region
        // Predicated region
        $region29: #{tpu_custom_call.1} parent=27 // pred_check
          %p250 = pneg %p57
        $region30: #{tpu_custom_call.1} parent=27 // pred_check_branch
          %252 = sbr.rel (%p250) target = $region32
        $region31: #{tpu_custom_call.1} parent=27 // pred_region
          %s253 = sand.u32 %s47, 1
          %s254 = scalar_lea.sflag [#allocation5], %s253
          %s255 = sand.u32 %s47, 1
          %s256 = smul.addr %s255, 16
          %s257 = scalar_lea.vmem [#allocation4], %s256
          %s258 = smul.u32 2, %s31
          %s260 = ssub.s32 256, 256
          %261 = vsyncadd %s254, %s260
          %s262 = smul.addr %s30, 2
          %s263 = sadd.s32 %s258, %s262
          %s264 = smul.addr %s263, 128
          %s265 = scalar_lea.hbm %s0, %s264
          %s266 = sshll.u32 %s257, 4
          %s267 = int_to_ptr.vmem [resolvable:$true] %s266
          %272 = dma.hbm_to_vmem [thread:$0]  %s265, 256, %s267, %s254, 128, 128, 8
        $region32: #{tpu_custom_call.1} parent=27 // pred_fallthru
          _
      $region28: #{tpu_custom_call.1} parent=5 // pred_fallthru
        _
      %p273 = scmp.le.s32.totalorder 1, %s23
      %p274 = scmp.lt.s32.totalorder %s23, 3
      %p275 = pnand %p273, %p274
      %p276 = pneg %p275
      // Predicated region
      $region33: #{tpu_custom_call.1} parent=5 // pred_check
        _
      $region34: #{tpu_custom_call.1} parent=5 // pred_check_branch
        %278 = sbr.rel (%p275) target = $region36
      $region35: #{tpu_custom_call.1} parent=5 // pred_region
        %s279 = ssub.s32 %s23, 1
        %s280 = sand.u32 %s50, 1
        %s281 = scalar_lea.sflag [#allocation5], %s280
        %s282 = sand.u32 %s50, 1
        %s283 = smul.addr %s282, 16
        %s284 = scalar_lea.vmem [#allocation4], %s283
        // Predicated region
        $region37: #{tpu_custom_call.1} parent=35 // pred_check
          %p285 = pneg %p63
        $region38: #{tpu_custom_call.1} parent=35 // pred_check_branch
          %287 = sbr.rel (%p285) target = $region40
        $region39: #{tpu_custom_call.1} parent=35 // pred_region
          %288 = dma.done %s281, 256
        $region40: #{tpu_custom_call.1} parent=35 // pred_fallthru
          _
        // Predicated region
        $region41: #{tpu_custom_call.1} parent=35 // pred_check
          %p289 = pneg %p84
        $region42: #{tpu_custom_call.1} parent=35 // pred_check_branch
          %291 = sbr.rel (%p289) target = $region44
        $region43: #{tpu_custom_call.1} parent=35 // pred_region
          %292 = dma.done [#allocation8], 512
        $region44: #{tpu_custom_call.1} parent=35 // pred_fallthru
          _
        // Predicated region
        $region45: #{tpu_custom_call.1} parent=35 // pred_check
          %p293 = pneg %p110
        $region46: #{tpu_custom_call.1} parent=35 // pred_check_branch
          %295 = sbr.rel (%p293) target = $region48
        $region47: #{tpu_custom_call.1} parent=35 // pred_region
          %296 = dma.done [#allocation8], 512
        $region48: #{tpu_custom_call.1} parent=35 // pred_fallthru
          _
        // Predicated region
        $region49: #{tpu_custom_call.1} parent=35 // pred_check
          %p297 = pneg %p136
        $region50: #{tpu_custom_call.1} parent=35 // pred_check_branch
          %299 = sbr.rel (%p297) target = $region52
        $region51: #{tpu_custom_call.1} parent=35 // pred_region
          %300 = dma.done [#allocation11], 512
        $region52: #{tpu_custom_call.1} parent=35 // pred_fallthru
          _
        %s301 = sand.u32 %s50, 1
        %s302 = scalar_lea.sflag [#allocation5], %s301
        %s303 = sand.u32 %s50, 1
        %s304 = smul.addr %s303, 16
        %s305 = scalar_lea.vmem [#allocation4], %s304
        %p306 = pneg %p63
        %p307 = pneg %p60
        %p308 = pneg %p84
        %p309 = pneg %p81
        %p310 = pneg %p110
        %p311 = pneg %p107
        %p312 = pneg %p136
        %p313 = pneg %p133
        %p314 = pneg %p162
        %p315 = pneg %p159
        %s316 = sand.u32 %s149, 1
        %s317 = scalar_lea.sflag [#allocation6], %s316
        %s318 = sand.u32 %s149, 1
        %s319 = smul.addr %s318, 32
        %s320 = scalar_lea.vmem [#allocation12], %s319
        %p321 = pneg %p188
        %p322 = pneg %p185
        %s323 = sand.u32 %s175, 1
        %s324 = scalar_lea.sflag [#allocation14], %s323
        %s325 = sand.u32 %s175, 1
        %s326 = smul.addr %s325, 32
        %s327 = scalar_lea.vmem [#allocation13], %s326
        %s328 = smul.u32 2, %s33
        %p329 = scmp.eq.s32.totalorder %s33, 0
        // Predicated region
        $region53: #{tpu_custom_call.1} parent=35 // pred_check
          %p330 = pneg %p329
        $region54: #{tpu_custom_call.1} parent=35 // pred_check_branch
          %332 = sbr.rel (%p330) target = $region56
        $region55: #{tpu_custom_call.1} parent=35 // pred_region
          %vm333 = vcmask 64512
          %334 = vst.msk [vmem:[#allocation2] sm:$0xff] %vm333, 0.0
          %335 = vst.msk [vmem:[#allocation2 + $0x8] sm:$0xff] %vm333, 0.0
          %336 = vst.msk [vmem:[#allocation2 + $0x10] sm:$0xff] %vm333, 0.0
          %337 = vst.msk [vmem:[#allocation2 + $0x18] sm:$0xff] %vm333, 0.0
          %338 = vst.msk [vmem:[#allocation3] sm:$0xff] %vm333, 0.0
          %339 = vst.msk [vmem:[#allocation3 + $0x8] sm:$0xff] %vm333, 0.0
          %340 = vst.msk [vmem:[#allocation3 + $0x10] sm:$0xff] %vm333, 0.0
          %341 = vst.msk [vmem:[#allocation3 + $0x18] sm:$0xff] %vm333, 0.0
        $region56: #{tpu_custom_call.1} parent=35 // pred_fallthru
          _
        %v342 = vld [vmem:[%s284] sm:$0xff]
        %v343 = vld [vmem:[%s284 + $0x8] sm:$0xff]
        %v344 = vld [vmem:[#allocation7] sm:$0xff]
        %v345 = vld [vmem:[#allocation7 + $0x8] sm:$0xff]
        %v346 = vld [vmem:[#allocation7 + $0x10] sm:$0xff]
        %v347 = vld [vmem:[#allocation7 + $0x18] sm:$0xff]
        %vm348 = vcmask 261120
        %v350 = vsel %vm348, %v342, 0
        %v353 = vsel %vm348, %v343, 0
        %355 = vmatprep.subr.mxu0 0.0
        %356 = vmatpush1.msra.mxu0 %v344
        %357 = vmatprep.subr.mxu0 0.0
        %358 = vmatpush1.msra.mxu0 %v345
        %359 = vmatprep.subr.mxu0 0.0
        %360 = vmatpush1.msra.mxu0 %v346
        %361 = vmatprep.subr.mxu0 0.0
        %362 = vmatpush1.msra.mxu0 %v347
        %363 = vmatprep.subr.mxu0 0.0
        %364 = vmatpush1.msra.mxu0 0.0
        %365 = vmatprep.subr.mxu0 0.0
        %366 = vmatpush1.msra.mxu0 0.0
        %367 = vmatprep.subr.mxu0 0.0
        %368 = vmatpush1.msra.mxu0 0.0
        %369 = vmatprep.subr.mxu0 0.0
        %370 = vmatpush1.msra.mxu0 0.0
        %371 = vmatprep.subr.mxu0 0.0
        %372 = vmatpush1.msra.mxu0 0.0
        %373 = vmatprep.subr.mxu0 0.0
        %374 = vmatpush1.msra.mxu0 0.0
        %375 = vmatprep.subr.mxu0 0.0
        %376 = vmatpush1.msra.mxu0 0.0
        %377 = vmatprep.subr.mxu0 0.0
        %378 = vmatpush1.msra.mxu0 0.0
        %379 = vmatprep.subr.mxu0 0.0
        %380 = vmatpush1.msra.mxu0 0.0
        %381 = vmatprep.subr.mxu0 0.0
        %382 = vmatpush1.msra.mxu0 0.0
        %383 = vmatprep.subr.mxu0 0.0
        %384 = vmatpush1.msra.mxu0 0.0
        %385 = vmatprep.subr.mxu0 0.0
        %386 = vmatpush1.msra.mxu0 0.0
        %387 = vmatprep.subr.mxu0 0.0
        %388 = vmatpush1.msra.mxu0 0.0
        %389 = vmatprep.subr.mxu0 0.0
        %390 = vmatpush1.msra.mxu0 0.0
        %391 = vmatprep.subr.mxu0 0.0
        %392 = vmatpush1.msra.mxu0 0.0
        %393 = vmatprep.subr.mxu0 0.0
        %394 = vmatpush1.msra.mxu0 0.0
        %395 = vmatprep.subr.mxu0 0.0
        %396 = vmatpush1.msra.mxu0 0.0
        %397 = vmatprep.subr.mxu0 0.0
        %398 = vmatpush1.msra.mxu0 0.0
        %399 = vmatprep.subr.mxu0 0.0
        %400 = vmatpush1.msra.mxu0 0.0
        %401 = vmatprep.subr.mxu0 0.0
        %402 = vmatpush1.msra.mxu0 0.0
        %403 = vmatprep.subr.mxu0 0.0
        %404 = vmatpush1.msra.mxu0 0.0
        %405 = vmatprep.subr.mxu0 0.0
        %406 = vmatpush1.msra.mxu0 0.0
        %407 = vmatprep.subr.mxu0 0.0
        %408 = vmatpush1.msra.mxu0 0.0
        %409 = vmatprep.subr.mxu0 0.0
        %410 = vmatpush1.msra.mxu0 0.0
        %411 = vmatprep.subr.mxu0 0.0
        %412 = vmatpush1.msra.mxu0 0.0
        %413 = vmatprep.subr.mxu0 0.0
        %414 = vmatpush1.msra.mxu0 0.0
        %415 = vmatprep.subr.mxu0 0.0
        %416 = vmatpush1.msra.mxu0 0.0
        %417 = vmatprep.subr.mxu0 0.0
        %418 = vmatpush1.msra.mxu0 0.0
        %419 = vmatprep.mubr.f32.mxu0 0.0
        %420 = vmatmul.mubr.f32.gmra.mrb[0].mxu0 %v350
        %v421 = vpop.f32.mrb[0].mxu0
        %v422 = vadd.f32 0.0, %v421
        %v423 = vpop.f32.mrb[0].mxu0
        %424 = vmatprep.mubr.f32.mxu0 0.0
        %425 = vmatmul.mubr.f32.gmra.mrb[0].mxu0 %v353
        %v426 = vpop.f32.mrb[0].mxu0
        %v427 = vadd.f32 0.0, %v426
        %v428 = vpop.f32.mrb[0].mxu0
        %429 = vdwg.mxu0
        %v430 = vld [vmem:[#allocation2] sm:$0xff]
        %v431 = vld [vmem:[#allocation9] sm:$0xff]
        %vm432 = vcmask 130048
        %v434 = vsel %vm432, %v431, 0
        %436 = vmatprep.subr.mxu0 0.0
        %437 = vmatpush1.msra.mxu0 %v422
        %438 = vmatprep.subr.mxu0 0.0
        %439 = vmatpush1.msra.mxu0 %v427
        %440 = vmatprep.subr.mxu0 0.0
        %441 = vmatpush1.msra.mxu0 0.0
        %442 = vmatprep.subr.mxu0 0.0
        %443 = vmatpush1.msra.mxu0 0.0
        %444 = vmatprep.subr.mxu0 0.0
        %445 = vmatpush1.msra.mxu0 0.0
        %446 = vmatprep.subr.mxu0 0.0
        %447 = vmatpush1.msra.mxu0 0.0
        %448 = vmatprep.subr.mxu0 0.0
        %449 = vmatpush1.msra.mxu0 0.0
        %450 = vmatprep.subr.mxu0 0.0
        %451 = vmatpush1.msra.mxu0 0.0
        %452 = vmatprep.subr.mxu0 0.0
        %453 = vmatpush1.msra.mxu0 0.0
        %454 = vmatprep.subr.mxu0 0.0
        %455 = vmatpush1.msra.mxu0 0.0
        %456 = vmatprep.subr.mxu0 0.0
        %457 = vmatpush1.msra.mxu0 0.0
        %458 = vmatprep.subr.mxu0 0.0
        %459 = vmatpush1.msra.mxu0 0.0
        %460 = vmatprep.subr.mxu0 0.0
        %461 = vmatpush1.msra.mxu0 0.0
        %462 = vmatprep.subr.mxu0 0.0
        %463 = vmatpush1.msra.mxu0 0.0
        %464 = vmatprep.subr.mxu0 0.0
        %465 = vmatpush1.msra.mxu0 0.0
        %466 = vmatprep.subr.mxu0 0.0
        %467 = vmatpush1.msra.mxu0 0.0
        %468 = vmatprep.subr.mxu0 0.0
        %469 = vmatpush1.msra.mxu0 0.0
        %470 = vmatprep.subr.mxu0 0.0
        %471 = vmatpush1.msra.mxu0 0.0
        %472 = vmatprep.subr.mxu0 0.0
        %473 = vmatpush1.msra.mxu0 0.0
        %474 = vmatprep.subr.mxu0 0.0
        %475 = vmatpush1.msra.mxu0 0.0
        %476 = vmatprep.subr.mxu0 0.0
        %477 = vmatpush1.msra.mxu0 0.0
        %478 = vmatprep.subr.mxu0 0.0
        %479 = vmatpush1.msra.mxu0 0.0
        %480 = vmatprep.subr.mxu0 0.0
        %481 = vmatpush1.msra.mxu0 0.0
        %482 = vmatprep.subr.mxu0 0.0
        %483 = vmatpush1.msra.mxu0 0.0
        %484 = vmatprep.subr.mxu0 0.0
        %485 = vmatpush1.msra.mxu0 0.0
        %486 = vmatprep.subr.mxu0 0.0
        %487 = vmatpush1.msra.mxu0 0.0
        %488 = vmatprep.subr.mxu0 0.0
        %489 = vmatpush1.msra.mxu0 0.0
        %490 = vmatprep.subr.mxu0 0.0
        %491 = vmatpush1.msra.mxu0 0.0
        %492 = vmatprep.subr.mxu0 0.0
        %493 = vmatpush1.msra.mxu0 0.0
        %494 = vmatprep.subr.mxu0 0.0
        %495 = vmatpush1.msra.mxu0 0.0
        %496 = vmatprep.subr.mxu0 0.0
        %497 = vmatpush1.msra.mxu0 0.0
        %498 = vmatprep.subr.mxu0 0.0
        %499 = vmatpush1.msra.mxu0 0.0
        %500 = vmatprep.mubr.f32.mxu0 0.0
        %501 = vmatmul.mubr.f32.gmra.mrb[0].mxu0 %v434
        %v502 = vpop.f32.mrb[0].mxu0
        %v503 = vadd.f32 0.0, %v502
        %v504 = vpop.f32.mrb[0].mxu0
        %505 = vdwg.mxu0
        %v506 = vadd.f32 %v430, %v503
        %vm507 = vcmask 64512
        %508 = vst.msk [vmem:[#allocation2] sm:$0xff] %vm507, %v506
        %v509 = vld [vmem:[#allocation3] sm:$0xff]
        %v510 = vld [vmem:[#allocation10] sm:$0xff]
        %513 = vrot.lane.b32.xlu0 %v422, 96
        %v514 = vpop.permute.xlu0 %513
        %515 = vrot.lane.b32.xlu0 %v427, 96
        %v516 = vpop.permute.xlu0 %515
        %v520 = vsel %vm432, %v510, 0
        %522 = vmatprep.subr.mxu0 0.0
        %523 = vmatpush1.msra.mxu0 %v514
        %524 = vmatprep.subr.mxu0 0.0
        %525 = vmatpush1.msra.mxu0 %v516
        %526 = vmatprep.subr.mxu0 0.0
        %527 = vmatpush1.msra.mxu0 0.0
        %528 = vmatprep.subr.mxu0 0.0
        %529 = vmatpush1.msra.mxu0 0.0
        %530 = vmatprep.subr.mxu0 0.0
        %531 = vmatpush1.msra.mxu0 0.0
        %532 = vmatprep.subr.mxu0 0.0
        %533 = vmatpush1.msra.mxu0 0.0
        %534 = vmatprep.subr.mxu0 0.0
        %535 = vmatpush1.msra.mxu0 0.0
        %536 = vmatprep.subr.mxu0 0.0
        %537 = vmatpush1.msra.mxu0 0.0
        %538 = vmatprep.subr.mxu0 0.0
        %539 = vmatpush1.msra.mxu0 0.0
        %540 = vmatprep.subr.mxu0 0.0
        %541 = vmatpush1.msra.mxu0 0.0
        %542 = vmatprep.subr.mxu0 0.0
        %543 = vmatpush1.msra.mxu0 0.0
        %544 = vmatprep.subr.mxu0 0.0
        %545 = vmatpush1.msra.mxu0 0.0
        %546 = vmatprep.subr.mxu0 0.0
        %547 = vmatpush1.msra.mxu0 0.0
        %548 = vmatprep.subr.mxu0 0.0
        %549 = vmatpush1.msra.mxu0 0.0
        %550 = vmatprep.subr.mxu0 0.0
        %551 = vmatpush1.msra.mxu0 0.0
        %552 = vmatprep.subr.mxu0 0.0
        %553 = vmatpush1.msra.mxu0 0.0
        %554 = vmatprep.subr.mxu0 0.0
        %555 = vmatpush1.msra.mxu0 0.0
        %556 = vmatprep.subr.mxu0 0.0
        %557 = vmatpush1.msra.mxu0 0.0
        %558 = vmatprep.subr.mxu0 0.0
        %559 = vmatpush1.msra.mxu0 0.0
        %560 = vmatprep.subr.mxu0 0.0
        %561 = vmatpush1.msra.mxu0 0.0
        %562 = vmatprep.subr.mxu0 0.0
        %563 = vmatpush1.msra.mxu0 0.0
        %564 = vmatprep.subr.mxu0 0.0
        %565 = vmatpush1.msra.mxu0 0.0
        %566 = vmatprep.subr.mxu0 0.0
        %567 = vmatpush1.msra.mxu0 0.0
        %568 = vmatprep.subr.mxu0 0.0
        %569 = vmatpush1.msra.mxu0 0.0
        %570 = vmatprep.subr.mxu0 0.0
        %571 = vmatpush1.msra.mxu0 0.0
        %572 = vmatprep.subr.mxu0 0.0
        %573 = vmatpush1.msra.mxu0 0.0
        %574 = vmatprep.subr.mxu0 0.0
        %575 = vmatpush1.msra.mxu0 0.0
        %576 = vmatprep.subr.mxu0 0.0
        %577 = vmatpush1.msra.mxu0 0.0
        %578 = vmatprep.subr.mxu0 0.0
        %579 = vmatpush1.msra.mxu0 0.0
        %580 = vmatprep.subr.mxu0 0.0
        %581 = vmatpush1.msra.mxu0 0.0
        %582 = vmatprep.subr.mxu0 0.0
        %583 = vmatpush1.msra.mxu0 0.0
        %584 = vmatprep.subr.mxu0 0.0
        %585 = vmatpush1.msra.mxu0 0.0
        %586 = vmatprep.mubr.f32.mxu0 0.0
        %587 = vmatmul.mubr.f32.gmra.mrb[0].mxu0 %v520
        %v588 = vpop.f32.mrb[0].mxu0
        %v589 = vadd.f32 0.0, %v588
        %v590 = vpop.f32.mrb[0].mxu0
        %591 = vdwg.mxu0
        %v592 = vadd.f32 %v509, %v589
        %593 = vst.msk [vmem:[#allocation3] sm:$0xff] %vm507, %v592
        %s594 = scalar_lea.vmem [#allocation2], 8
        %v595 = vld [vmem:[%s594] sm:$0xff]
        %s596 = scalar_lea.vmem [#allocation9], 8
        %v597 = vld [vmem:[%s596] sm:$0xff]
        %598 = vrot.lane.b32.xlu0 %v422, 120
        %v599 = vpop.permute.xlu0 %598
        %600 = vrot.lane.b32.xlu0 %v427, 120
        %v601 = vpop.permute.xlu0 %600
        %v605 = vsel %vm432, %v597, 0
        %607 = vmatprep.subr.mxu0 0.0
        %608 = vmatpush1.msra.mxu0 %v599
        %609 = vmatprep.subr.mxu0 0.0
        %610 = vmatpush1.msra.mxu0 %v601
        %611 = vmatprep.subr.mxu0 0.0
        %612 = vmatpush1.msra.mxu0 0.0
        %613 = vmatprep.subr.mxu0 0.0
        %614 = vmatpush1.msra.mxu0 0.0
        %615 = vmatprep.subr.mxu0 0.0
        %616 = vmatpush1.msra.mxu0 0.0
        %617 = vmatprep.subr.mxu0 0.0
        %618 = vmatpush1.msra.mxu0 0.0
        %619 = vmatprep.subr.mxu0 0.0
        %620 = vmatpush1.msra.mxu0 0.0
        %621 = vmatprep.subr.mxu0 0.0
        %622 = vmatpush1.msra.mxu0 0.0
        %623 = vmatprep.subr.mxu0 0.0
        %624 = vmatpush1.msra.mxu0 0.0
        %625 = vmatprep.subr.mxu0 0.0
        %626 = vmatpush1.msra.mxu0 0.0
        %627 = vmatprep.subr.mxu0 0.0
        %628 = vmatpush1.msra.mxu0 0.0
        %629 = vmatprep.subr.mxu0 0.0
        %630 = vmatpush1.msra.mxu0 0.0
        %631 = vmatprep.subr.mxu0 0.0
        %632 = vmatpush1.msra.mxu0 0.0
        %633 = vmatprep.subr.mxu0 0.0
        %634 = vmatpush1.msra.mxu0 0.0
        %635 = vmatprep.subr.mxu0 0.0
        %636 = vmatpush1.msra.mxu0 0.0
        %637 = vmatprep.subr.mxu0 0.0
        %638 = vmatpush1.msra.mxu0 0.0
        %639 = vmatprep.subr.mxu0 0.0
        %640 = vmatpush1.msra.mxu0 0.0
        %641 = vmatprep.subr.mxu0 0.0
        %642 = vmatpush1.msra.mxu0 0.0
        %643 = vmatprep.subr.mxu0 0.0
        %644 = vmatpush1.msra.mxu0 0.0
        %645 = vmatprep.subr.mxu0 0.0
        %646 = vmatpush1.msra.mxu0 0.0
        %647 = vmatprep.subr.mxu0 0.0
        %648 = vmatpush1.msra.mxu0 0.0
        %649 = vmatprep.subr.mxu0 0.0
        %650 = vmatpush1.msra.mxu0 0.0
        %651 = vmatprep.subr.mxu0 0.0
        %652 = vmatpush1.msra.mxu0 0.0
        %653 = vmatprep.subr.mxu0 0.0
        %654 = vmatpush1.msra.mxu0 0.0
        %655 = vmatprep.subr.mxu0 0.0
        %656 = vmatpush1.msra.mxu0 0.0
        %657 = vmatprep.subr.mxu0 0.0
        %658 = vmatpush1.msra.mxu0 0.0
        %659 = vmatprep.subr.mxu0 0.0
        %660 = vmatpush1.msra.mxu0 0.0
        %661 = vmatprep.subr.mxu0 0.0
        %662 = vmatpush1.msra.mxu0 0.0
        %663 = vmatprep.subr.mxu0 0.0
        %664 = vmatpush1.msra.mxu0 0.0
        %665 = vmatprep.subr.mxu0 0.0
        %666 = vmatpush1.msra.mxu0 0.0
        %667 = vmatprep.subr.mxu0 0.0
        %668 = vmatpush1.msra.mxu0 0.0
        %669 = vmatprep.subr.mxu0 0.0
        %670 = vmatpush1.msra.mxu0 0.0
        %671 = vmatprep.mubr.f32.mxu0 0.0
        %672 = vmatmul.mubr.f32.gmra.mrb[0].mxu0 %v605
        %v673 = vpop.f32.mrb[0].mxu0
        %v674 = vadd.f32 0.0, %v673
        %v675 = vpop.f32.mrb[0].mxu0
        %676 = vdwg.mxu0
        %v677 = vadd.f32 %v595, %v674
        %678 = vst.msk [vmem:[%s594] sm:$0xff] %vm507, %v677
        %s679 = scalar_lea.vmem [#allocation3], 8
        %v680 = vld [vmem:[%s679] sm:$0xff]
        %s681 = scalar_lea.vmem [#allocation10], 8
        %v682 = vld [vmem:[%s681] sm:$0xff]
        %683 = vrot.lane.b32.xlu0 %v422, 88
        %v684 = vpop.permute.xlu0 %683
        %685 = vrot.lane.b32.xlu0 %v427, 88
        %v686 = vpop.permute.xlu0 %685
        %v690 = vsel %vm432, %v682, 0
        %692 = vmatprep.subr.mxu0 0.0
        %693 = vmatpush1.msra.mxu0 %v684
        %694 = vmatprep.subr.mxu0 0.0
        %695 = vmatpush1.msra.mxu0 %v686
        %696 = vmatprep.subr.mxu0 0.0
        %697 = vmatpush1.msra.mxu0 0.0
        %698 = vmatprep.subr.mxu0 0.0
        %699 = vmatpush1.msra.mxu0 0.0
        %700 = vmatprep.subr.mxu0 0.0
        %701 = vmatpush1.msra.mxu0 0.0
        %702 = vmatprep.subr.mxu0 0.0
        %703 = vmatpush1.msra.mxu0 0.0
        %704 = vmatprep.subr.mxu0 0.0
        %705 = vmatpush1.msra.mxu0 0.0
        %706 = vmatprep.subr.mxu0 0.0
        %707 = vmatpush1.msra.mxu0 0.0
        %708 = vmatprep.subr.mxu0 0.0
        %709 = vmatpush1.msra.mxu0 0.0
        %710 = vmatprep.subr.mxu0 0.0
        %711 = vmatpush1.msra.mxu0 0.0
        %712 = vmatprep.subr.mxu0 0.0
        %713 = vmatpush1.msra.mxu0 0.0
        %714 = vmatprep.subr.mxu0 0.0
        %715 = vmatpush1.msra.mxu0 0.0
        %716 = vmatprep.subr.mxu0 0.0
        %717 = vmatpush1.msra.mxu0 0.0
        %718 = vmatprep.subr.mxu0 0.0
        %719 = vmatpush1.msra.mxu0 0.0
        %720 = vmatprep.subr.mxu0 0.0
        %721 = vmatpush1.msra.mxu0 0.0
        %722 = vmatprep.subr.mxu0 0.0
        %723 = vmatpush1.msra.mxu0 0.0
        %724 = vmatprep.subr.mxu0 0.0
        %725 = vmatpush1.msra.mxu0 0.0
        %726 = vmatprep.subr.mxu0 0.0
        %727 = vmatpush1.msra.mxu0 0.0
        %728 = vmatprep.subr.mxu0 0.0
        %729 = vmatpush1.msra.mxu0 0.0
        %730 = vmatprep.subr.mxu0 0.0
        %731 = vmatpush1.msra.mxu0 0.0
        %732 = vmatprep.subr.mxu0 0.0
        %733 = vmatpush1.msra.mxu0 0.0
        %734 = vmatprep.subr.mxu0 0.0
        %735 = vmatpush1.msra.mxu0 0.0
        %736 = vmatprep.subr.mxu0 0.0
        %737 = vmatpush1.msra.mxu0 0.0
        %738 = vmatprep.subr.mxu0 0.0
        %739 = vmatpush1.msra.mxu0 0.0
        %740 = vmatprep.subr.mxu0 0.0
        %741 = vmatpush1.msra.mxu0 0.0
        %742 = vmatprep.subr.mxu0 0.0
        %743 = vmatpush1.msra.mxu0 0.0
        %744 = vmatprep.subr.mxu0 0.0
        %745 = vmatpush1.msra.mxu0 0.0
        %746 = vmatprep.subr.mxu0 0.0
        %747 = vmatpush1.msra.mxu0 0.0
        %748 = vmatprep.subr.mxu0 0.0
        %749 = vmatpush1.msra.mxu0 0.0
        %750 = vmatprep.subr.mxu0 0.0
        %751 = vmatpush1.msra.mxu0 0.0
        %752 = vmatprep.subr.mxu0 0.0
        %753 = vmatpush1.msra.mxu0 0.0
        %754 = vmatprep.subr.mxu0 0.0
        %755 = vmatpush1.msra.mxu0 0.0
        %756 = vmatprep.mubr.f32.mxu0 0.0
        %757 = vmatmul.mubr.f32.gmra.mrb[0].mxu0 %v690
        %v758 = vpop.f32.mrb[0].mxu0
        %v759 = vadd.f32 0.0, %v758
        %v760 = vpop.f32.mrb[0].mxu0
        %761 = vdwg.mxu0
        %v762 = vadd.f32 %v680, %v759
        %763 = vst.msk [vmem:[%s679] sm:$0xff] %vm507, %v762
        %s764 = scalar_lea.vmem [#allocation2], 16
        %v765 = vld [vmem:[%s764] sm:$0xff]
        %s766 = scalar_lea.vmem [#allocation9], 16
        %v767 = vld [vmem:[%s766] sm:$0xff]
        %768 = vrot.lane.b32.xlu0 %v422, 112
        %v769 = vpop.permute.xlu0 %768
        %770 = vrot.lane.b32.xlu0 %v427, 112
        %v771 = vpop.permute.xlu0 %770
        %v775 = vsel %vm432, %v767, 0
        %777 = vmatprep.subr.mxu0 0.0
        %778 = vmatpush1.msra.mxu0 %v769
        %779 = vmatprep.subr.mxu0 0.0
        %780 = vmatpush1.msra.mxu0 %v771
        %781 = vmatprep.subr.mxu0 0.0
        %782 = vmatpush1.msra.mxu0 0.0
        %783 = vmatprep.subr.mxu0 0.0
        %784 = vmatpush1.msra.mxu0 0.0
        %785 = vmatprep.subr.mxu0 0.0
        %786 = vmatpush1.msra.mxu0 0.0
        %787 = vmatprep.subr.mxu0 0.0
        %788 = vmatpush1.msra.mxu0 0.0
        %789 = vmatprep.subr.mxu0 0.0
        %790 = vmatpush1.msra.mxu0 0.0
        %791 = vmatprep.subr.mxu0 0.0
        %792 = vmatpush1.msra.mxu0 0.0
        %793 = vmatprep.subr.mxu0 0.0
        %794 = vmatpush1.msra.mxu0 0.0
        %795 = vmatprep.subr.mxu0 0.0
        %796 = vmatpush1.msra.mxu0 0.0
        %797 = vmatprep.subr.mxu0 0.0
        %798 = vmatpush1.msra.mxu0 0.0
        %799 = vmatprep.subr.mxu0 0.0
        %800 = vmatpush1.msra.mxu0 0.0
        %801 = vmatprep.subr.mxu0 0.0
        %802 = vmatpush1.msra.mxu0 0.0
        %803 = vmatprep.subr.mxu0 0.0
        %804 = vmatpush1.msra.mxu0 0.0
        %805 = vmatprep.subr.mxu0 0.0
        %806 = vmatpush1.msra.mxu0 0.0
        %807 = vmatprep.subr.mxu0 0.0
        %808 = vmatpush1.msra.mxu0 0.0
        %809 = vmatprep.subr.mxu0 0.0
        %810 = vmatpush1.msra.mxu0 0.0
        %811 = vmatprep.subr.mxu0 0.0
        %812 = vmatpush1.msra.mxu0 0.0
        %813 = vmatprep.subr.mxu0 0.0
        %814 = vmatpush1.msra.mxu0 0.0
        %815 = vmatprep.subr.mxu0 0.0
        %816 = vmatpush1.msra.mxu0 0.0
        %817 = vmatprep.subr.mxu0 0.0
        %818 = vmatpush1.msra.mxu0 0.0
        %819 = vmatprep.subr.mxu0 0.0
        %820 = vmatpush1.msra.mxu0 0.0
        %821 = vmatprep.subr.mxu0 0.0
        %822 = vmatpush1.msra.mxu0 0.0
        %823 = vmatprep.subr.mxu0 0.0
        %824 = vmatpush1.msra.mxu0 0.0
        %825 = vmatprep.subr.mxu0 0.0
        %826 = vmatpush1.msra.mxu0 0.0
        %827 = vmatprep.subr.mxu0 0.0
        %828 = vmatpush1.msra.mxu0 0.0
        %829 = vmatprep.subr.mxu0 0.0
        %830 = vmatpush1.msra.mxu0 0.0
        %831 = vmatprep.subr.mxu0 0.0
        %832 = vmatpush1.msra.mxu0 0.0
        %833 = vmatprep.subr.mxu0 0.0
        %834 = vmatpush1.msra.mxu0 0.0
        %835 = vmatprep.subr.mxu0 0.0
        %836 = vmatpush1.msra.mxu0 0.0
        %837 = vmatprep.subr.mxu0 0.0
        %838 = vmatpush1.msra.mxu0 0.0
        %839 = vmatprep.subr.mxu0 0.0
        %840 = vmatpush1.msra.mxu0 0.0
        %841 = vmatprep.mubr.f32.mxu0 0.0
        %842 = vmatmul.mubr.f32.gmra.mrb[0].mxu0 %v775
        %v843 = vpop.f32.mrb[0].mxu0
        %v844 = vadd.f32 0.0, %v843
        %v845 = vpop.f32.mrb[0].mxu0
        %846 = vdwg.mxu0
        %v847 = vadd.f32 %v765, %v844
        %848 = vst.msk [vmem:[%s764] sm:$0xff] %vm507, %v847
        %s849 = scalar_lea.vmem [#allocation3], 16
        %v850 = vld [vmem:[%s849] sm:$0xff]
        %s851 = scalar_lea.vmem [#allocation10], 16
        %v852 = vld [vmem:[%s851] sm:$0xff]
        %853 = vrot.lane.b32.xlu0 %v422, 80
        %v854 = vpop.permute.xlu0 %853
        %855 = vrot.lane.b32.xlu0 %v427, 80
        %v856 = vpop.permute.xlu0 %855
        %v860 = vsel %vm432, %v852, 0
        %862 = vmatprep.subr.mxu0 0.0
        %863 = vmatpush1.msra.mxu0 %v854
        %864 = vmatprep.subr.mxu0 0.0
        %865 = vmatpush1.msra.mxu0 %v856
        %866 = vmatprep.subr.mxu0 0.0
        %867 = vmatpush1.msra.mxu0 0.0
        %868 = vmatprep.subr.mxu0 0.0
        %869 = vmatpush1.msra.mxu0 0.0
        %870 = vmatprep.subr.mxu0 0.0
        %871 = vmatpush1.msra.mxu0 0.0
        %872 = vmatprep.subr.mxu0 0.0
        %873 = vmatpush1.msra.mxu0 0.0
        %874 = vmatprep.subr.mxu0 0.0
        %875 = vmatpush1.msra.mxu0 0.0
        %876 = vmatprep.subr.mxu0 0.0
        %877 = vmatpush1.msra.mxu0 0.0
        %878 = vmatprep.subr.mxu0 0.0
        %879 = vmatpush1.msra.mxu0 0.0
        %880 = vmatprep.subr.mxu0 0.0
        %881 = vmatpush1.msra.mxu0 0.0
        %882 = vmatprep.subr.mxu0 0.0
        %883 = vmatpush1.msra.mxu0 0.0
        %884 = vmatprep.subr.mxu0 0.0
        %885 = vmatpush1.msra.mxu0 0.0
        %886 = vmatprep.subr.mxu0 0.0
        %887 = vmatpush1.msra.mxu0 0.0
        %888 = vmatprep.subr.mxu0 0.0
        %889 = vmatpush1.msra.mxu0 0.0
        %890 = vmatprep.subr.mxu0 0.0
        %891 = vmatpush1.msra.mxu0 0.0
        %892 = vmatprep.subr.mxu0 0.0
        %893 = vmatpush1.msra.mxu0 0.0
        %894 = vmatprep.subr.mxu0 0.0
        %895 = vmatpush1.msra.mxu0 0.0
        %896 = vmatprep.subr.mxu0 0.0
        %897 = vmatpush1.msra.mxu0 0.0
        %898 = vmatprep.subr.mxu0 0.0
        %899 = vmatpush1.msra.mxu0 0.0
        %900 = vmatprep.subr.mxu0 0.0
        %901 = vmatpush1.msra.mxu0 0.0
        %902 = vmatprep.subr.mxu0 0.0
        %903 = vmatpush1.msra.mxu0 0.0
        %904 = vmatprep.subr.mxu0 0.0
        %905 = vmatpush1.msra.mxu0 0.0
        %906 = vmatprep.subr.mxu0 0.0
        %907 = vmatpush1.msra.mxu0 0.0
        %908 = vmatprep.subr.mxu0 0.0
        %909 = vmatpush1.msra.mxu0 0.0
        %910 = vmatprep.subr.mxu0 0.0
        %911 = vmatpush1.msra.mxu0 0.0
        %912 = vmatprep.subr.mxu0 0.0
        %913 = vmatpush1.msra.mxu0 0.0
        %914 = vmatprep.subr.mxu0 0.0
        %915 = vmatpush1.msra.mxu0 0.0
        %916 = vmatprep.subr.mxu0 0.0
        %917 = vmatpush1.msra.mxu0 0.0
        %918 = vmatprep.subr.mxu0 0.0
        %919 = vmatpush1.msra.mxu0 0.0
        %920 = vmatprep.subr.mxu0 0.0
        %921 = vmatpush1.msra.mxu0 0.0
        %922 = vmatprep.subr.mxu0 0.0
        %923 = vmatpush1.msra.mxu0 0.0
        %924 = vmatprep.subr.mxu0 0.0
        %925 = vmatpush1.msra.mxu0 0.0
        %926 = vmatprep.mubr.f32.mxu0 0.0
        %927 = vmatmul.mubr.f32.gmra.mrb[0].mxu0 %v860
        %v928 = vpop.f32.mrb[0].mxu0
        %v929 = vadd.f32 0.0, %v928
        %v930 = vpop.f32.mrb[0].mxu0
        %931 = vdwg.mxu0
        %v932 = vadd.f32 %v850, %v929
        %933 = vst.msk [vmem:[%s849] sm:$0xff] %vm507, %v932
        %s934 = scalar_lea.vmem [#allocation2], 24
        %v935 = vld [vmem:[%s934] sm:$0xff]
        %s936 = scalar_lea.vmem [#allocation9], 24
        %v937 = vld [vmem:[%s936] sm:$0xff]
        %938 = vrot.lane.b32.xlu0 %v422, 104
        %v939 = vpop.permute.xlu0 %938
        %940 = vrot.lane.b32.xlu0 %v427, 104
        %v941 = vpop.permute.xlu0 %940
        %v945 = vsel %vm432, %v937, 0
        %947 = vmatprep.subr.mxu0 0.0
        %948 = vmatpush1.msra.mxu0 %v939
        %949 = vmatprep.subr.mxu0 0.0
        %950 = vmatpush1.msra.mxu0 %v941
        %951 = vmatprep.subr.mxu0 0.0
        %952 = vmatpush1.msra.mxu0 0.0
        %953 = vmatprep.subr.mxu0 0.0
        %954 = vmatpush1.msra.mxu0 0.0
        %955 = vmatprep.subr.mxu0 0.0
        %956 = vmatpush1.msra.mxu0 0.0
        %957 = vmatprep.subr.mxu0 0.0
        %958 = vmatpush1.msra.mxu0 0.0
        %959 = vmatprep.subr.mxu0 0.0
        %960 = vmatpush1.msra.mxu0 0.0
        %961 = vmatprep.subr.mxu0 0.0
        %962 = vmatpush1.msra.mxu0 0.0
        %963 = vmatprep.subr.mxu0 0.0
        %964 = vmatpush1.msra.mxu0 0.0
        %965 = vmatprep.subr.mxu0 0.0
        %966 = vmatpush1.msra.mxu0 0.0
        %967 = vmatprep.subr.mxu0 0.0
        %968 = vmatpush1.msra.mxu0 0.0
        %969 = vmatprep.subr.mxu0 0.0
        %970 = vmatpush1.msra.mxu0 0.0
        %971 = vmatprep.subr.mxu0 0.0
        %972 = vmatpush1.msra.mxu0 0.0
        %973 = vmatprep.subr.mxu0 0.0
        %974 = vmatpush1.msra.mxu0 0.0
        %975 = vmatprep.subr.mxu0 0.0
        %976 = vmatpush1.msra.mxu0 0.0
        %977 = vmatprep.subr.mxu0 0.0
        %978 = vmatpush1.msra.mxu0 0.0
        %979 = vmatprep.subr.mxu0 0.0
        %980 = vmatpush1.msra.mxu0 0.0
        %981 = vmatprep.subr.mxu0 0.0
        %982 = vmatpush1.msra.mxu0 0.0
        %983 = vmatprep.subr.mxu0 0.0
        %984 = vmatpush1.msra.mxu0 0.0
        %985 = vmatprep.subr.mxu0 0.0
        %986 = vmatpush1.msra.mxu0 0.0
        %987 = vmatprep.subr.mxu0 0.0
        %988 = vmatpush1.msra.mxu0 0.0
        %989 = vmatprep.subr.mxu0 0.0
        %990 = vmatpush1.msra.mxu0 0.0
        %991 = vmatprep.subr.mxu0 0.0
        %992 = vmatpush1.msra.mxu0 0.0
        %993 = vmatprep.subr.mxu0 0.0
        %994 = vmatpush1.msra.mxu0 0.0
        %995 = vmatprep.subr.mxu0 0.0
        %996 = vmatpush1.msra.mxu0 0.0
        %997 = vmatprep.subr.mxu0 0.0
        %998 = vmatpush1.msra.mxu0 0.0
        %999 = vmatprep.subr.mxu0 0.0
        %1000 = vmatpush1.msra.mxu0 0.0
        %1001 = vmatprep.subr.mxu0 0.0
        %1002 = vmatpush1.msra.mxu0 0.0
        %1003 = vmatprep.subr.mxu0 0.0
        %1004 = vmatpush1.msra.mxu0 0.0
        %1005 = vmatprep.subr.mxu0 0.0
        %1006 = vmatpush1.msra.mxu0 0.0
        %1007 = vmatprep.subr.mxu0 0.0
        %1008 = vmatpush1.msra.mxu0 0.0
        %1009 = vmatprep.subr.mxu0 0.0
        %1010 = vmatpush1.msra.mxu0 0.0
        %1011 = vmatprep.mubr.f32.mxu0 0.0
        %1012 = vmatmul.mubr.f32.gmra.mrb[0].mxu0 %v945
        %v1013 = vpop.f32.mrb[0].mxu0
        %v1014 = vadd.f32 0.0, %v1013
        %v1015 = vpop.f32.mrb[0].mxu0
        %1016 = vdwg.mxu0
        %v1017 = vadd.f32 %v935, %v1014
        %1018 = vst.msk [vmem:[%s934] sm:$0xff] %vm507, %v1017
        %s1019 = scalar_lea.vmem [#allocation3], 24
        %v1020 = vld [vmem:[%s1019] sm:$0xff]
        %s1021 = scalar_lea.vmem [#allocation10], 24
        %v1022 = vld [vmem:[%s1021] sm:$0xff]
        %1023 = vrot.lane.b32.xlu0 %v422, 72
        %v1024 = vpop.permute.xlu0 %1023
        %1025 = vrot.lane.b32.xlu0 %v427, 72
        %v1026 = vpop.permute.xlu0 %1025
        %v1030 = vsel %vm432, %v1022, 0
        %1032 = vmatprep.subr.mxu0 0.0
        %1033 = vmatpush1.msra.mxu0 %v1024
        %1034 = vmatprep.subr.mxu0 0.0
        %1035 = vmatpush1.msra.mxu0 %v1026
        %1036 = vmatprep.subr.mxu0 0.0
        %1037 = vmatpush1.msra.mxu0 0.0
        %1038 = vmatprep.subr.mxu0 0.0
        %1039 = vmatpush1.msra.mxu0 0.0
        %1040 = vmatprep.subr.mxu0 0.0
        %1041 = vmatpush1.msra.mxu0 0.0
        %1042 = vmatprep.subr.mxu0 0.0
        %1043 = vmatpush1.msra.mxu0 0.0
        %1044 = vmatprep.subr.mxu0 0.0
        %1045 = vmatpush1.msra.mxu0 0.0
        %1046 = vmatprep.subr.mxu0 0.0
        %1047 = vmatpush1.msra.mxu0 0.0
        %1048 = vmatprep.subr.mxu0 0.0
        %1049 = vmatpush1.msra.mxu0 0.0
        %1050 = vmatprep.subr.mxu0 0.0
        %1051 = vmatpush1.msra.mxu0 0.0
        %1052 = vmatprep.subr.mxu0 0.0
        %1053 = vmatpush1.msra.mxu0 0.0
        %1054 = vmatprep.subr.mxu0 0.0
        %1055 = vmatpush1.msra.mxu0 0.0
        %1056 = vmatprep.subr.mxu0 0.0
        %1057 = vmatpush1.msra.mxu0 0.0
        %1058 = vmatprep.subr.mxu0 0.0
        %1059 = vmatpush1.msra.mxu0 0.0
        %1060 = vmatprep.subr.mxu0 0.0
        %1061 = vmatpush1.msra.mxu0 0.0
        %1062 = vmatprep.subr.mxu0 0.0
        %1063 = vmatpush1.msra.mxu0 0.0
        %1064 = vmatprep.subr.mxu0 0.0
        %1065 = vmatpush1.msra.mxu0 0.0
        %1066 = vmatprep.subr.mxu0 0.0
        %1067 = vmatpush1.msra.mxu0 0.0
        %1068 = vmatprep.subr.mxu0 0.0
        %1069 = vmatpush1.msra.mxu0 0.0
        %1070 = vmatprep.subr.mxu0 0.0
        %1071 = vmatpush1.msra.mxu0 0.0
        %1072 = vmatprep.subr.mxu0 0.0
        %1073 = vmatpush1.msra.mxu0 0.0
        %1074 = vmatprep.subr.mxu0 0.0
        %1075 = vmatpush1.msra.mxu0 0.0
        %1076 = vmatprep.subr.mxu0 0.0
        %1077 = vmatpush1.msra.mxu0 0.0
        %1078 = vmatprep.subr.mxu0 0.0
        %1079 = vmatpush1.msra.mxu0 0.0
        %1080 = vmatprep.subr.mxu0 0.0
        %1081 = vmatpush1.msra.mxu0 0.0
        %1082 = vmatprep.subr.mxu0 0.0
        %1083 = vmatpush1.msra.mxu0 0.0
        %1084 = vmatprep.subr.mxu0 0.0
        %1085 = vmatpush1.msra.mxu0 0.0
        %1086 = vmatprep.subr.mxu0 0.0
        %1087 = vmatpush1.msra.mxu0 0.0
        %1088 = vmatprep.subr.mxu0 0.0
        %1089 = vmatpush1.msra.mxu0 0.0
        %1090 = vmatprep.subr.mxu0 0.0
        %1091 = vmatpush1.msra.mxu0 0.0
        %1092 = vmatprep.subr.mxu0 0.0
        %1093 = vmatpush1.msra.mxu0 0.0
        %1094 = vmatprep.subr.mxu0 0.0
        %1095 = vmatpush1.msra.mxu0 0.0
        %1096 = vmatprep.mubr.f32.mxu0 0.0
        %1097 = vmatmul.mubr.f32.gmra.mrb[0].mxu0 %v1030
        %v1098 = vpop.f32.mrb[0].mxu0
        %v1099 = vadd.f32 0.0, %v1098
        %v1100 = vpop.f32.mrb[0].mxu0
        %1101 = vdwg.mxu0
        %v1102 = vadd.f32 %v1020, %v1099
        %1103 = vst.msk [vmem:[%s1019] sm:$0xff] %vm507, %v1102
        // Predicated region
        $region57: #{tpu_custom_call.1} parent=35 // pred_check
          %p1104 = pneg %p329
        $region58: #{tpu_custom_call.1} parent=35 // pred_check_branch
          %1106 = sbr.rel (%p1104) target = $region60
        $region59: #{tpu_custom_call.1} parent=35 // pred_region
          %v1107 = vld [vmem:[#allocation2] sm:$0xff]
          %v1108 = vld [vmem:[#allocation2 + $0x8] sm:$0xff]
          %v1109 = vld [vmem:[#allocation2 + $0x10] sm:$0xff]
          %v1110 = vld [vmem:[#allocation2 + $0x18] sm:$0xff]
          %1111 = vst.msk [vmem:[%s320] sm:$0xff] %vm507, %v1107
          %1112 = vst.msk [vmem:[%s320 + $0x8] sm:$0xff] %vm507, %v1108
          %1113 = vst.msk [vmem:[%s320 + $0x10] sm:$0xff] %vm507, %v1109
          %1114 = vst.msk [vmem:[%s320 + $0x18] sm:$0xff] %vm507, %v1110
          %v1115 = vld [vmem:[#allocation3] sm:$0xff]
          %v1116 = vld [vmem:[#allocation3 + $0x8] sm:$0xff]
          %v1117 = vld [vmem:[#allocation3 + $0x10] sm:$0xff]
          %v1118 = vld [vmem:[#allocation3 + $0x18] sm:$0xff]
          %1119 = vst.msk [vmem:[%s327] sm:$0xff] %vm507, %v1115
          %1120 = vst.msk [vmem:[%s327 + $0x8] sm:$0xff] %vm507, %v1116
          %1121 = vst.msk [vmem:[%s327 + $0x10] sm:$0xff] %vm507, %v1117
          %1122 = vst.msk [vmem:[%s327 + $0x18] sm:$0xff] %vm507, %v1118
        $region60: #{tpu_custom_call.1} parent=35 // pred_fallthru
          _
        %s1123 = sand.u32 %s149, 1
        %s1124 = scalar_lea.sflag [#allocation6], %s1123
        %s1125 = sand.u32 %s149, 1
        %s1126 = smul.addr %s1125, 32
        %s1127 = scalar_lea.vmem [#allocation12], %s1126
        %s1128 = sand.u32 %s175, 1
        %s1129 = scalar_lea.sflag [#allocation14], %s1128
        %s1130 = sand.u32 %s175, 1
        %s1131 = smul.addr %s1130, 32
        %s1132 = scalar_lea.vmem [#allocation13], %s1131
        // Predicated region
        $region61: #{tpu_custom_call.1} parent=35 // pred_check
          %p1133 = pneg %p159
        $region62: #{tpu_custom_call.1} parent=35 // pred_check_branch
          %1135 = sbr.rel (%p1133) target = $region64
        $region63: #{tpu_custom_call.1} parent=35 // pred_region
          %s1137 = ssub.s32 512, 512
          %1138 = vsyncadd %s1124, %s1137
          %s1139 = smul.addr %s32, 4
          %s1140 = smul.addr %s1139, 128
          %s1141 = scalar_lea.hbm %s4, %s1140
          %s1142 = sshll.u32 %s1127, 4
          %s1143 = int_to_ptr.vmem [resolvable:$true] %s1142
          %1148 = dma.vmem_to_hbm [thread:$0]  %s1143, 512, %s1141, %s1124, 128, 128, 8
        $region64: #{tpu_custom_call.1} parent=35 // pred_fallthru
          _
        // Predicated region
        $region65: #{tpu_custom_call.1} parent=35 // pred_check
          %p1149 = pneg %p185
        $region66: #{tpu_custom_call.1} parent=35 // pred_check_branch
          %1151 = sbr.rel (%p1149) target = $region68
        $region67: #{tpu_custom_call.1} parent=35 // pred_region
          %s1153 = ssub.s32 512, 512
          %1154 = vsyncadd %s1129, %s1153
          %s1155 = smul.addr %s32, 4
          %s1156 = smul.addr %s1155, 128
          %s1157 = scalar_lea.hbm %s5, %s1156
          %s1158 = sshll.u32 %s1132, 4
          %s1159 = int_to_ptr.vmem [resolvable:$true] %s1158
          %1164 = dma.vmem_to_hbm [thread:$0]  %s1159, 512, %s1157, %s1129, 128, 128, 8
        $region68: #{tpu_custom_call.1} parent=35 // pred_fallthru
          _
      $region36: #{tpu_custom_call.1} parent=5 // pred_fallthru
        _
      %p1165 = scmp.le.s32.totalorder 2, %s23
      // Predicated region
      $region69: #{tpu_custom_call.1} parent=5 // pred_check
        %p1166 = pneg %p1165
      $region70: #{tpu_custom_call.1} parent=5 // pred_check_branch
        %1168 = sbr.rel (%p1166) target = $region72
      $region71: #{tpu_custom_call.1} parent=5 // pred_region
        %s1169 = ssub.s32 %s23, 2
        // Predicated region
        $region73: #{tpu_custom_call.1} parent=71 // pred_check
          %p1170 = pneg %p165
        $region74: #{tpu_custom_call.1} parent=71 // pred_check_branch
          %1172 = sbr.rel (%p1170) target = $region76
        $region75: #{tpu_custom_call.1} parent=71 // pred_region
          %s1173 = sand.u32 %s150, 1
          %s1174 = scalar_lea.sflag [#allocation6], %s1173
          %s1175 = sand.u32 %s150, 1
          %s1176 = smul.addr %s1175, 32
          %s1177 = scalar_lea.vmem [#allocation12], %s1176
          %1178 = dma.done %s1174, 512
        $region76: #{tpu_custom_call.1} parent=71 // pred_fallthru
          _
        // Predicated region
        $region77: #{tpu_custom_call.1} parent=71 // pred_check
          %p1179 = pneg %p191
        $region78: #{tpu_custom_call.1} parent=71 // pred_check_branch
          %1181 = sbr.rel (%p1179) target = $region80
        $region79: #{tpu_custom_call.1} parent=71 // pred_region
          %s1182 = sand.u32 %s176, 1
          %s1183 = scalar_lea.sflag [#allocation14], %s1182
          %s1184 = sand.u32 %s176, 1
          %s1185 = smul.addr %s1184, 32
          %s1186 = scalar_lea.vmem [#allocation13], %s1185
          %1187 = dma.done %s1183, 512
        $region80: #{tpu_custom_call.1} parent=71 // pred_fallthru
          _
      $region72: #{tpu_custom_call.1} parent=5 // pred_fallthru
        _
    $region6: #{tpu_custom_call.1} parent=1 // loop_footer
      %s27 = sadd.s32 1, %s23
    $region7: #{tpu_custom_call.1} parent=1 // loop_footer_branch
      %22 = sbr.rel target = $region3
    $region8: #{tpu_custom_call.1} parent=1 // loop_exit
      _
    %1188 = vsyncpa [#allocation5], 1
    %s1189 = scalar_lea.sflag [#allocation5], 1
    %1190 = vsyncpa %s1189, 1
    %1191 = vsyncpa [#allocation8], 1
    %1192 = vsyncpa [#allocation11], 1
    %1193 = vsyncpa [#allocation6], 1
    %s1194 = scalar_lea.sflag [#allocation6], 1
    %1195 = vsyncpa %s1194, 1
    %1196 = vsyncpa [#allocation14], 1
    %s1197 = scalar_lea.sflag [#allocation14], 1
    %1198 = vsyncpa %s1197, 1

</llo_original>
